<compile_context>
chip_gen: v7x
topology: tpu7x:2x2x1
jax: 0.10.0
libtpu: 0.0.40
codegen_flags: <defaults>
</compile_context>

<pallas_src>
import functools

import jax
import jax.numpy as jnp
from jax import lax
from jax.experimental import pallas as pl
from jax.experimental.pallas import tpu as pltpu


def _round_up(x: int, m: int) -> int:
    return ((x + m - 1) // m) * m


def _cdiv(a: int, b: int) -> int:
    return (a + b - 1) // b


def _lookup_news_encoder_kernel(ids_ref, emb_hbm, w_ref, b_ref, o_ref,
                                xbuf, sem, *, tile_b, chunk_b):
    """One grid step == one tile of `tile_b` batch rows (2 chunks of chunk_b).

    ids_ref : SMEM (B_pad,) int32        scalar-prefetched, sanitized ids
    emb_hbm : ANY  (A, E_pad) f32        embedding table (row 0 == zeros), HBM
    w_ref   : VMEM (E_pad, N) f32        fcout weight (pre-transposed), resident
    b_ref   : VMEM (1, N) f32            fcout bias, resident
    o_ref   : VMEM (tile_b, N) f32       output tile
    xbuf    : VMEM (2, chunk_b, E_pad)   double-buffered row-gather scratch
    sem     : DMA semaphores (2,)        one per slot
    """
    o = pl.program_id(0)                 # parallel (megacore) axis
    i = pl.program_id(1)                 # sequential axis within a core slice
    n_inner = pl.num_programs(1)
    tile = o * n_inner + i               # global tile index

    def issue_rows(tile_idx, chunk, slot):
        base = tile_idx * tile_b + chunk * chunk_b

        def body(r, carry):
            aid = ids_ref[base + r]
            pltpu.make_async_copy(
                emb_hbm.at[pl.ds(aid, 1)],        # (1, E_pad) row in HBM
                xbuf.at[slot, pl.ds(r, 1)],       # (1, E_pad) row in slot buf
                sem.at[slot],
            ).start()
            return carry

        lax.fori_loop(0, chunk_b, body, 0, unroll=8)

    def wait_chunk(slot):
        # ONE aggregate wait per chunk: the descriptor's byte count (the full
        # (chunk_b, E_pad) slot buffer as dst) equals the sum of the chunk_b
        # per-row copies issued on this semaphore above.
        pltpu.make_async_copy(xbuf.at[slot], xbuf.at[slot], sem.at[slot]).wait()

    def compute(chunk, slot):
        y = jnp.dot(xbuf[slot], w_ref[...],
                    preferred_element_type=jnp.float32)       # (chunk_b, N)
        o_ref[pl.ds(chunk * chunk_b, chunk_b), :] = y + b_ref[...]

    # Prime: first chunk of this core slice (only on its first inner step).
    @pl.when(i == 0)
    def _():
        issue_rows(tile, 0, 0)

    # Chunk 0: its DMA flight time is hidden behind chunk 1's issue burst.
    issue_rows(tile, 1, 1)
    wait_chunk(0)
    compute(0, 0)

    # Chunk 1: prefetch the NEXT tile's chunk 0 across the grid-step boundary
    # before waiting, so its latency hides behind this matmul, the output
    # writeback and the next step's prologue.
    @pl.when(i + 1 < n_inner)
    def _():
        issue_rows(tile + 1, 0, 0)
    wait_chunk(1)
    compute(1, 1)


@functools.partial(jax.jit, static_argnames=("block_b",))
def lookup_news_encoder(article_ids, emb_table, w_t, bias, *, block_b=512):
    """
    article_ids : (B,)  int32
    emb_table   : (num_articles, E) float32  -- row k = embedding of article_id k
    w_t         : (E, N) float32             -- nn.Linear weight, transposed
    bias        : (N,) or (1, N) float32
    returns     : (B, N) float32
    """
    assert block_b % 16 == 0
    batch = article_ids.shape[0]
    num_articles, emb_size = emb_table.shape
    size_n = w_t.shape[1]

    # --- tile sizing: tile = 2 chunks; >= 2 tiles whenever possible so the
    #     outer grid axis can shard across both TensorCores on v7x. ---
    if batch >= 2 * block_b:
        tile_b = block_b
    elif batch >= 32:
        tile_b = _round_up(_cdiv(batch, 2), 16)
    else:
        tile_b = _round_up(max(batch, 1), 16)
    chunk_b = tile_b // 2
    n_tiles = _cdiv(batch, tile_b)
    n_outer = 2 if n_tiles >= 2 else 1
    n_inner = _cdiv(n_tiles, n_outer)
    b_pad = n_outer * n_inner * tile_b

    # --- sanitize ids: id==0 / unknown / out-of-range -> 0 (the zeros row). ---
    ids = article_ids.astype(jnp.int32)
    valid = (ids > 0) & (ids < num_articles)
    ids = jnp.where(valid, ids, 0)
    ids_padded = jnp.zeros((b_pad,), jnp.int32).at[:batch].set(ids)

    # --- table / weights: f32, row 0 forced to zeros, E padded to x128 so
    #     every row DMA is a clean multiple of 512 bytes. ---
    table = emb_table.astype(jnp.float32).at[0, :].set(0.0)
    w = w_t.astype(jnp.float32)
    e_pad = _round_up(emb_size, 128)
    if e_pad != emb_size:
        table = jnp.pad(table, ((0, 0), (0, e_pad - emb_size)))
        w = jnp.pad(w, ((0, e_pad - emb_size), (0, 0)))
    bias2d = jnp.reshape(bias, (1, size_n)).astype(jnp.float32)

    kernel = functools.partial(_lookup_news_encoder_kernel,
                               tile_b=tile_b, chunk_b=chunk_b)

    grid_spec = pltpu.PrefetchScalarGridSpec(
        num_scalar_prefetch=1,                  # article_ids -> SMEM
        grid=(n_outer, n_inner),
        in_specs=[
            pl.BlockSpec(memory_space=pl.ANY),                          # table (HBM)
            pl.BlockSpec((e_pad, size_n), lambda o, i, ids: (0, 0)),    # weight
            pl.BlockSpec((1, size_n), lambda o, i, ids: (0, 0)),        # bias
        ],
        out_specs=pl.BlockSpec((tile_b, size_n),
                               lambda o, i, ids: (o * n_inner + i, 0)),
        scratch_shapes=[
            pltpu.VMEM((2, chunk_b, e_pad), jnp.float32),   # gather double buffer
            pltpu.SemaphoreType.DMA((2,)),
        ],
    )

    out = pl.pallas_call(
        kernel,
        out_shape=jax.ShapeDtypeStruct((b_pad, size_n), jnp.float32),
        grid_spec=grid_spec,
        compiler_params=pltpu.CompilerParams(
            # Outer axis: each core slice is self-contained (own prefetch
            # chain) -> safe to shard across TensorCores.  Inner axis carries
            # the cross-step prefetch state -> arbitrary.
            dimension_semantics=("parallel", "arbitrary"),
        ),
        cost_estimate=pl.CostEstimate(
            flops=2 * b_pad * e_pad * size_n,
            transcendentals=0,
            bytes_accessed=(b_pad * e_pad * 4
                            + e_pad * size_n * 4
                            + b_pad * size_n * 4),
        ),
    )(ids_padded, table, w, bias2d)

    return out[:batch]


def _reference(article_ids, emb_table, w_t, bias):
    ids = article_ids.astype(jnp.int32)
    num_articles = emb_table.shape[0]
    valid = (ids > 0) & (ids < num_articles)
    ids_safe = jnp.where(valid, ids, 0)
    table = emb_table.astype(jnp.float32).at[0, :].set(0.0)
    emb = table[ids_safe]
    return emb @ w_t.astype(jnp.float32) + jnp.reshape(bias, (1, -1))


if __name__ == "__main__":
    # Module-consistent shapes: model='bert' -> E = 768; config.size_n = N = 128.
    NUM_ARTICLES = 32
    EMB_SIZE = 768     # _embedding_size_from_model('bert')
    SIZE_N = 128       # LNEConfig.size_n

    key = jax.random.PRNGKey(0)
    k_tab, k_w, k_b, k1, k2, k3 = jax.random.split(key, 6)

    # Synthetic "parquet" embedding table (row index == article_id).
    emb_table = jax.random.normal(k_tab, (NUM_ARTICLES, EMB_SIZE), jnp.float32)

    # Deterministic nn.Linear(E, N) init (PyTorch-style uniform(-1/sqrt(E), 1/sqrt(E))).
    bound = 1.0 / (EMB_SIZE ** 0.5)
    w_t = jax.random.uniform(k_w, (EMB_SIZE, SIZE_N), jnp.float32, -bound, bound)
    bias = jax.random.uniform(k_b, (SIZE_N,), jnp.float32, -bound, bound)

    def check(ids, **kw):
        out = jax.block_until_ready(
            lookup_news_encoder(ids, emb_table, w_t, bias, **kw))
        ref = _reference(ids, emb_table, w_t, bias)
        assert out.shape == (ids.shape[0], SIZE_N)
        err = float(jnp.max(jnp.abs(out - ref)))
        assert jnp.allclose(out, ref, atol=1e-3, rtol=1e-3), err

    # --- Small batch: single 16-row tile; includes id==0 ("not found" -> bias)
    #     and an out-of-range id (treated as not found). ---
    ids_small = jax.random.randint(k1, (8,), 0, NUM_ARTICLES, dtype=jnp.int32)
    ids_small = ids_small.at[0].set(0).at[1].set(NUM_ARTICLES + 7)
    check(ids_small)

    # --- Large batch: 512-row tiles (2 x 256-row chunks), (2, 1) grid. ---
    ids_big = jax.random.randint(k2, (1000,), 0, NUM_ARTICLES, dtype=jnp.int32)
    ids_big = ids_big.at[3].set(0)
    check(ids_big)

    # --- Multi-inner-step grid (smaller block) to exercise the cross-grid-step
    #     prefetch chain: 128-row tiles -> grid (2, 3). ---
    ids_mid = jax.random.randint(k3, (600,), 0, NUM_ARTICLES, dtype=jnp.int32)
    check(ids_mid, block_b=128)

    print("KERNEL_OK")
</pallas_src>

<mosaic_0001>
module attributes {stable_mosaic.version = 11 : i64} {
  func.func @_lookup_news_encoder_kernel(%arg0: i32, %arg1: i32, %arg2: memref<16xi32, #tpu.memory_space<smem>>, %arg3: memref<32x768xf32, #tpu.memory_space<any>>, %arg4: memref<768x128xf32, #tpu.memory_space<vmem>>, %arg5: memref<1x128xf32, #tpu.memory_space<vmem>>, %arg6: memref<16x128xf32, #tpu.memory_space<vmem>>, %arg7: memref<2x8x768xf32, #tpu.memory_space<vmem>>, %arg8: memref<2x!tpu.dma_semaphore, #tpu.memory_space<semaphore_mem>>) attributes {dimension_semantics = [#tpu.dimension_semantics<parallel>, #tpu.dimension_semantics<arbitrary>], iteration_bounds = array<i64: 1, 1>, scalar_prefetch = 1 : i64, scratch_operands = 2 : i64, tpu.core_type = #tpu.core_type<tc>, window_params = [{}, {pipeline_mode = #tpu.pipeline_mode<synchronous>, transform_indices = @transform_1, window_bounds = array<i64: 768, 128>}, {pipeline_mode = #tpu.pipeline_mode<synchronous>, transform_indices = @transform_2, window_bounds = array<i64: 1, 128>}, {transform_indices = @transform_3, window_bounds = array<i64: 16, 128>}]} {
    %c1_i32 = arith.constant 1 : i32
    %0 = arith.muli %arg0, %c1_i32 : i32
    %1 = arith.addi %0, %arg1 : i32
    %c0_i32 = arith.constant 0 : i32
    %2 = arith.cmpi eq, %arg1, %c0_i32 : i32
    %3 = arith.extui %2 : i1 to i32
    %c0_i32_0 = arith.constant 0 : i32
    %4 = arith.cmpi ne, %3, %c0_i32_0 : i32
    scf.if %4 {
      %c16_i32_69 = arith.constant 16 : i32
      %103 = arith.muli %1, %c16_i32_69 : i32
      %c0_i32_70 = arith.constant 0 : i32
      %104 = arith.addi %103, %c0_i32_70 : i32
      %c0_i32_71 = arith.constant 0 : i32
      %105 = arith.addi %104, %c0_i32_71 : i32
      %106 = arith.index_cast %105 : i32 to index
      %107 = memref.load %arg2[%106] : memref<16xi32, #tpu.memory_space<smem>>
      %c0_i32_72 = arith.constant 0 : i32
      %c0_i32_73 = arith.constant 0 : i32
      %c0_i32_74 = arith.constant 0 : i32
      %108 = tpu.memref_slice %arg3[%107, %c0_i32_74] : memref<32x768xf32, #tpu.memory_space<any>> -> memref<1x768xf32, #tpu.memory_space<any>>
      %c0_i32_75 = arith.constant 0 : i32
      %109 = tpu.memref_slice %arg7[%c0_i32_72, %c0_i32_71, %c0_i32_75] : memref<2x8x768xf32, #tpu.memory_space<vmem>> -> memref<1x1x768xf32, #tpu.memory_space<vmem>>
      %110 = tpu.memref_squeeze %109 : memref<1x1x768xf32, #tpu.memory_space<vmem>> -> memref<1x768xf32, #tpu.memory_space<vmem>>
      %111 = tpu.memref_slice %arg8[%c0_i32_73] : memref<2x!tpu.dma_semaphore, #tpu.memory_space<semaphore_mem>> -> memref<1x!tpu.dma_semaphore, #tpu.memory_space<semaphore_mem>>
      %112 = tpu.memref_squeeze %111 : memref<1x!tpu.dma_semaphore, #tpu.memory_space<semaphore_mem>> -> memref<!tpu.dma_semaphore, #tpu.memory_space<semaphore_mem>>
      tpu.enqueue_dma source(%108 : memref<1x768xf32, #tpu.memory_space<any>>) target(%110 : memref<1x768xf32, #tpu.memory_space<vmem>>) target_semaphore(%112 : memref<!tpu.dma_semaphore, #tpu.memory_space<semaphore_mem>>)
      %c1_i32_76 = arith.constant 1 : i32
      %113 = arith.addi %104, %c1_i32_76 : i32
      %114 = arith.index_cast %113 : i32 to index
      %115 = memref.load %arg2[%114] : memref<16xi32, #tpu.memory_space<smem>>
      %c0_i32_77 = arith.constant 0 : i32
      %c0_i32_78 = arith.constant 0 : i32
      %c0_i32_79 = arith.constant 0 : i32
      %116 = tpu.memref_slice %arg3[%115, %c0_i32_79] : memref<32x768xf32, #tpu.memory_space<any>> -> memref<1x768xf32, #tpu.memory_space<any>>
      %c0_i32_80 = arith.constant 0 : i32
      %117 = tpu.memref_slice %arg7[%c0_i32_77, %c1_i32_76, %c0_i32_80] : memref<2x8x768xf32, #tpu.memory_space<vmem>> -> memref<1x1x768xf32, #tpu.memory_space<vmem>>
      %118 = tpu.memref_squeeze %117 : memref<1x1x768xf32, #tpu.memory_space<vmem>> -> memref<1x768xf32, #tpu.memory_space<vmem>>
      %119 = tpu.memref_slice %arg8[%c0_i32_78] : memref<2x!tpu.dma_semaphore, #tpu.memory_space<semaphore_mem>> -> memref<1x!tpu.dma_semaphore, #tpu.memory_space<semaphore_mem>>
      %120 = tpu.memref_squeeze %119 : memref<1x!tpu.dma_semaphore, #tpu.memory_space<semaphore_mem>> -> memref<!tpu.dma_semaphore, #tpu.memory_space<semaphore_mem>>
      tpu.enqueue_dma source(%116 : memref<1x768xf32, #tpu.memory_space<any>>) target(%118 : memref<1x768xf32, #tpu.memory_space<vmem>>) target_semaphore(%120 : memref<!tpu.dma_semaphore, #tpu.memory_space<semaphore_mem>>)
      %c2_i32_81 = arith.constant 2 : i32
      %121 = arith.addi %104, %c2_i32_81 : i32
      %122 = arith.index_cast %121 : i32 to index
      %123 = memref.load %arg2[%122] : memref<16xi32, #tpu.memory_space<smem>>
      %c0_i32_82 = arith.constant 0 : i32
      %c0_i32_83 = arith.constant 0 : i32
      %c0_i32_84 = arith.constant 0 : i32
      %124 = tpu.memref_slice %arg3[%123, %c0_i32_84] : memref<32x768xf32, #tpu.memory_space<any>> -> memref<1x768xf32, #tpu.memory_space<any>>
      %c0_i32_85 = arith.constant 0 : i32
      %125 = tpu.memref_slice %arg7[%c0_i32_82, %c2_i32_81, %c0_i32_85] : memref<2x8x768xf32, #tpu.memory_space<vmem>> -> memref<1x1x768xf32, #tpu.memory_space<vmem>>
      %126 = tpu.memref_squeeze %125 : memref<1x1x768xf32, #tpu.memory_space<vmem>> -> memref<1x768xf32, #tpu.memory_space<vmem>>
      %127 = tpu.memref_slice %arg8[%c0_i32_83] : memref<2x!tpu.dma_semaphore, #tpu.memory_space<semaphore_mem>> -> memref<1x!tpu.dma_semaphore, #tpu.memory_space<semaphore_mem>>
      %128 = tpu.memref_squeeze %127 : memref<1x!tpu.dma_semaphore, #tpu.memory_space<semaphore_mem>> -> memref<!tpu.dma_semaphore, #tpu.memory_space<semaphore_mem>>
      tpu.enqueue_dma source(%124 : memref<1x768xf32, #tpu.memory_space<any>>) target(%126 : memref<1x768xf32, #tpu.memory_space<vmem>>) target_semaphore(%128 : memref<!tpu.dma_semaphore, #tpu.memory_space<semaphore_mem>>)
      %c3_i32_86 = arith.constant 3 : i32
      %129 = arith.addi %104, %c3_i32_86 : i32
      %130 = arith.index_cast %129 : i32 to index
      %131 = memref.load %arg2[%130] : memref<16xi32, #tpu.memory_space<smem>>
      %c0_i32_87 = arith.constant 0 : i32
      %c0_i32_88 = arith.constant 0 : i32
      %c0_i32_89 = arith.constant 0 : i32
      %132 = tpu.memref_slice %arg3[%131, %c0_i32_89] : memref<32x768xf32, #tpu.memory_space<any>> -> memref<1x768xf32, #tpu.memory_space<any>>
      %c0_i32_90 = arith.constant 0 : i32
      %133 = tpu.memref_slice %arg7[%c0_i32_87, %c3_i32_86, %c0_i32_90] : memref<2x8x768xf32, #tpu.memory_space<vmem>> -> memref<1x1x768xf32, #tpu.memory_space<vmem>>
      %134 = tpu.memref_squeeze %133 : memref<1x1x768xf32, #tpu.memory_space<vmem>> -> memref<1x768xf32, #tpu.memory_space<vmem>>
      %135 = tpu.memref_slice %arg8[%c0_i32_88] : memref<2x!tpu.dma_semaphore, #tpu.memory_space<semaphore_mem>> -> memref<1x!tpu.dma_semaphore, #tpu.memory_space<semaphore_mem>>
      %136 = tpu.memref_squeeze %135 : memref<1x!tpu.dma_semaphore, #tpu.memory_space<semaphore_mem>> -> memref<!tpu.dma_semaphore, #tpu.memory_space<semaphore_mem>>
      tpu.enqueue_dma source(%132 : memref<1x768xf32, #tpu.memory_space<any>>) target(%134 : memref<1x768xf32, #tpu.memory_space<vmem>>) target_semaphore(%136 : memref<!tpu.dma_semaphore, #tpu.memory_space<semaphore_mem>>)
      %c4_i32_91 = arith.constant 4 : i32
      %137 = arith.addi %104, %c4_i32_91 : i32
      %138 = arith.index_cast %137 : i32 to index
      %139 = memref.load %arg2[%138] : memref<16xi32, #tpu.memory_space<smem>>
      %c0_i32_92 = arith.constant 0 : i32
      %c0_i32_93 = arith.constant 0 : i32
      %c0_i32_94 = arith.constant 0 : i32
      %140 = tpu.memref_slice %arg3[%139, %c0_i32_94] : memref<32x768xf32, #tpu.memory_space<any>> -> memref<1x768xf32, #tpu.memory_space<any>>
      %c0_i32_95 = arith.constant 0 : i32
      %141 = tpu.memref_slice %arg7[%c0_i32_92, %c4_i32_91, %c0_i32_95] : memref<2x8x768xf32, #tpu.memory_space<vmem>> -> memref<1x1x768xf32, #tpu.memory_space<vmem>>
      %142 = tpu.memref_squeeze %141 : memref<1x1x768xf32, #tpu.memory_space<vmem>> -> memref<1x768xf32, #tpu.memory_space<vmem>>
      %143 = tpu.memref_slice %arg8[%c0_i32_93] : memref<2x!tpu.dma_semaphore, #tpu.memory_space<semaphore_mem>> -> memref<1x!tpu.dma_semaphore, #tpu.memory_space<semaphore_mem>>
      %144 = tpu.memref_squeeze %143 : memref<1x!tpu.dma_semaphore, #tpu.memory_space<semaphore_mem>> -> memref<!tpu.dma_semaphore, #tpu.memory_space<semaphore_mem>>
      tpu.enqueue_dma source(%140 : memref<1x768xf32, #tpu.memory_space<any>>) target(%142 : memref<1x768xf32, #tpu.memory_space<vmem>>) target_semaphore(%144 : memref<!tpu.dma_semaphore, #tpu.memory_space<semaphore_mem>>)
      %c5_i32_96 = arith.constant 5 : i32
      %145 = arith.addi %104, %c5_i32_96 : i32
      %146 = arith.index_cast %145 : i32 to index
      %147 = memref.load %arg2[%146] : memref<16xi32, #tpu.memory_space<smem>>
      %c0_i32_97 = arith.constant 0 : i32
      %c0_i32_98 = arith.constant 0 : i32
      %c0_i32_99 = arith.constant 0 : i32
      %148 = tpu.memref_slice %arg3[%147, %c0_i32_99] : memref<32x768xf32, #tpu.memory_space<any>> -> memref<1x768xf32, #tpu.memory_space<any>>
      %c0_i32_100 = arith.constant 0 : i32
      %149 = tpu.memref_slice %arg7[%c0_i32_97, %c5_i32_96, %c0_i32_100] : memref<2x8x768xf32, #tpu.memory_space<vmem>> -> memref<1x1x768xf32, #tpu.memory_space<vmem>>
      %150 = tpu.memref_squeeze %149 : memref<1x1x768xf32, #tpu.memory_space<vmem>> -> memref<1x768xf32, #tpu.memory_space<vmem>>
      %151 = tpu.memref_slice %arg8[%c0_i32_98] : memref<2x!tpu.dma_semaphore, #tpu.memory_space<semaphore_mem>> -> memref<1x!tpu.dma_semaphore, #tpu.memory_space<semaphore_mem>>
      %152 = tpu.memref_squeeze %151 : memref<1x!tpu.dma_semaphore, #tpu.memory_space<semaphore_mem>> -> memref<!tpu.dma_semaphore, #tpu.memory_space<semaphore_mem>>
      tpu.enqueue_dma source(%148 : memref<1x768xf32, #tpu.memory_space<any>>) target(%150 : memref<1x768xf32, #tpu.memory_space<vmem>>) target_semaphore(%152 : memref<!tpu.dma_semaphore, #tpu.memory_space<semaphore_mem>>)
      %c6_i32_101 = arith.constant 6 : i32
      %153 = arith.addi %104, %c6_i32_101 : i32
      %154 = arith.index_cast %153 : i32 to index
      %155 = memref.load %arg2[%154] : memref<16xi32, #tpu.memory_space<smem>>
      %c0_i32_102 = arith.constant 0 : i32
      %c0_i32_103 = arith.constant 0 : i32
      %c0_i32_104 = arith.constant 0 : i32
      %156 = tpu.memref_slice %arg3[%155, %c0_i32_104] : memref<32x768xf32, #tpu.memory_space<any>> -> memref<1x768xf32, #tpu.memory_space<any>>
      %c0_i32_105 = arith.constant 0 : i32
      %157 = tpu.memref_slice %arg7[%c0_i32_102, %c6_i32_101, %c0_i32_105] : memref<2x8x768xf32, #tpu.memory_space<vmem>> -> memref<1x1x768xf32, #tpu.memory_space<vmem>>
      %158 = tpu.memref_squeeze %157 : memref<1x1x768xf32, #tpu.memory_space<vmem>> -> memref<1x768xf32, #tpu.memory_space<vmem>>
      %159 = tpu.memref_slice %arg8[%c0_i32_103] : memref<2x!tpu.dma_semaphore, #tpu.memory_space<semaphore_mem>> -> memref<1x!tpu.dma_semaphore, #tpu.memory_space<semaphore_mem>>
      %160 = tpu.memref_squeeze %159 : memref<1x!tpu.dma_semaphore, #tpu.memory_space<semaphore_mem>> -> memref<!tpu.dma_semaphore, #tpu.memory_space<semaphore_mem>>
      tpu.enqueue_dma source(%156 : memref<1x768xf32, #tpu.memory_space<any>>) target(%158 : memref<1x768xf32, #tpu.memory_space<vmem>>) target_semaphore(%160 : memref<!tpu.dma_semaphore, #tpu.memory_space<semaphore_mem>>)
      %c7_i32_106 = arith.constant 7 : i32
      %161 = arith.addi %104, %c7_i32_106 : i32
      %162 = arith.index_cast %161 : i32 to index
      %163 = memref.load %arg2[%162] : memref<16xi32, #tpu.memory_space<smem>>
      %c0_i32_107 = arith.constant 0 : i32
      %c0_i32_108 = arith.constant 0 : i32
      %c0_i32_109 = arith.constant 0 : i32
      %164 = tpu.memref_slice %arg3[%163, %c0_i32_109] : memref<32x768xf32, #tpu.memory_space<any>> -> memref<1x768xf32, #tpu.memory_space<any>>
      %c0_i32_110 = arith.constant 0 : i32
      %165 = tpu.memref_slice %arg7[%c0_i32_107, %c7_i32_106, %c0_i32_110] : memref<2x8x768xf32, #tpu.memory_space<vmem>> -> memref<1x1x768xf32, #tpu.memory_space<vmem>>
      %166 = tpu.memref_squeeze %165 : memref<1x1x768xf32, #tpu.memory_space<vmem>> -> memref<1x768xf32, #tpu.memory_space<vmem>>
      %167 = tpu.memref_slice %arg8[%c0_i32_108] : memref<2x!tpu.dma_semaphore, #tpu.memory_space<semaphore_mem>> -> memref<1x!tpu.dma_semaphore, #tpu.memory_space<semaphore_mem>>
      %168 = tpu.memref_squeeze %167 : memref<1x!tpu.dma_semaphore, #tpu.memory_space<semaphore_mem>> -> memref<!tpu.dma_semaphore, #tpu.memory_space<semaphore_mem>>
      tpu.enqueue_dma source(%164 : memref<1x768xf32, #tpu.memory_space<any>>) target(%166 : memref<1x768xf32, #tpu.memory_space<vmem>>) target_semaphore(%168 : memref<!tpu.dma_semaphore, #tpu.memory_space<semaphore_mem>>)
      %c8_i32_111 = arith.constant 8 : i32
    } else {
    }
    %c16_i32 = arith.constant 16 : i32
    %5 = arith.muli %1, %c16_i32 : i32
    %c8_i32 = arith.constant 8 : i32
    %6 = arith.addi %5, %c8_i32 : i32
    %c0_i32_1 = arith.constant 0 : i32
    %7 = arith.addi %6, %c0_i32_1 : i32
    %8 = arith.index_cast %7 : i32 to index
    %9 = memref.load %arg2[%8] : memref<16xi32, #tpu.memory_space<smem>>
    %c1_i32_2 = arith.constant 1 : i32
    %c1_i32_3 = arith.constant 1 : i32
    %c0_i32_4 = arith.constant 0 : i32
    %10 = tpu.memref_slice %arg3[%9, %c0_i32_4] : memref<32x768xf32, #tpu.memory_space<any>> -> memref<1x768xf32, #tpu.memory_space<any>>
    %c0_i32_5 = arith.constant 0 : i32
    %11 = tpu.memref_slice %arg7[%c1_i32_2, %c0_i32_1, %c0_i32_5] : memref<2x8x768xf32, #tpu.memory_space<vmem>> -> memref<1x1x768xf32, #tpu.memory_space<vmem>>
    %12 = tpu.memref_squeeze %11 : memref<1x1x768xf32, #tpu.memory_space<vmem>> -> memref<1x768xf32, #tpu.memory_space<vmem>>
    %13 = tpu.memref_slice %arg8[%c1_i32_3] : memref<2x!tpu.dma_semaphore, #tpu.memory_space<semaphore_mem>> -> memref<1x!tpu.dma_semaphore, #tpu.memory_space<semaphore_mem>>
    %14 = tpu.memref_squeeze %13 : memref<1x!tpu.dma_semaphore, #tpu.memory_space<semaphore_mem>> -> memref<!tpu.dma_semaphore, #tpu.memory_space<semaphore_mem>>
    tpu.enqueue_dma source(%10 : memref<1x768xf32, #tpu.memory_space<any>>) target(%12 : memref<1x768xf32, #tpu.memory_space<vmem>>) target_semaphore(%14 : memref<!tpu.dma_semaphore, #tpu.memory_space<semaphore_mem>>)
    %c1_i32_6 = arith.constant 1 : i32
    %15 = arith.addi %6, %c1_i32_6 : i32
    %16 = arith.index_cast %15 : i32 to index
    %17 = memref.load %arg2[%16] : memref<16xi32, #tpu.memory_space<smem>>
    %c1_i32_7 = arith.constant 1 : i32
    %c1_i32_8 = arith.constant 1 : i32
    %c0_i32_9 = arith.constant 0 : i32
    %18 = tpu.memref_slice %arg3[%17, %c0_i32_9] : memref<32x768xf32, #tpu.memory_space<any>> -> memref<1x768xf32, #tpu.memory_space<any>>
    %c0_i32_10 = arith.constant 0 : i32
    %19 = tpu.memref_slice %arg7[%c1_i32_7, %c1_i32_6, %c0_i32_10] : memref<2x8x768xf32, #tpu.memory_space<vmem>> -> memref<1x1x768xf32, #tpu.memory_space<vmem>>
    %20 = tpu.memref_squeeze %19 : memref<1x1x768xf32, #tpu.memory_space<vmem>> -> memref<1x768xf32, #tpu.memory_space<vmem>>
    %21 = tpu.memref_slice %arg8[%c1_i32_8] : memref<2x!tpu.dma_semaphore, #tpu.memory_space<semaphore_mem>> -> memref<1x!tpu.dma_semaphore, #tpu.memory_space<semaphore_mem>>
    %22 = tpu.memref_squeeze %21 : memref<1x!tpu.dma_semaphore, #tpu.memory_space<semaphore_mem>> -> memref<!tpu.dma_semaphore, #tpu.memory_space<semaphore_mem>>
    tpu.enqueue_dma source(%18 : memref<1x768xf32, #tpu.memory_space<any>>) target(%20 : memref<1x768xf32, #tpu.memory_space<vmem>>) target_semaphore(%22 : memref<!tpu.dma_semaphore, #tpu.memory_space<semaphore_mem>>)
    %c2_i32 = arith.constant 2 : i32
    %23 = arith.addi %6, %c2_i32 : i32
    %24 = arith.index_cast %23 : i32 to index
    %25 = memref.load %arg2[%24] : memref<16xi32, #tpu.memory_space<smem>>
    %c1_i32_11 = arith.constant 1 : i32
    %c1_i32_12 = arith.constant 1 : i32
    %c0_i32_13 = arith.constant 0 : i32
    %26 = tpu.memref_slice %arg3[%25, %c0_i32_13] : memref<32x768xf32, #tpu.memory_space<any>> -> memref<1x768xf32, #tpu.memory_space<any>>
    %c0_i32_14 = arith.constant 0 : i32
    %27 = tpu.memref_slice %arg7[%c1_i32_11, %c2_i32, %c0_i32_14] : memref<2x8x768xf32, #tpu.memory_space<vmem>> -> memref<1x1x768xf32, #tpu.memory_space<vmem>>
    %28 = tpu.memref_squeeze %27 : memref<1x1x768xf32, #tpu.memory_space<vmem>> -> memref<1x768xf32, #tpu.memory_space<vmem>>
    %29 = tpu.memref_slice %arg8[%c1_i32_12] : memref<2x!tpu.dma_semaphore, #tpu.memory_space<semaphore_mem>> -> memref<1x!tpu.dma_semaphore, #tpu.memory_space<semaphore_mem>>
    %30 = tpu.memref_squeeze %29 : memref<1x!tpu.dma_semaphore, #tpu.memory_space<semaphore_mem>> -> memref<!tpu.dma_semaphore, #tpu.memory_space<semaphore_mem>>
    tpu.enqueue_dma source(%26 : memref<1x768xf32, #tpu.memory_space<any>>) target(%28 : memref<1x768xf32, #tpu.memory_space<vmem>>) target_semaphore(%30 : memref<!tpu.dma_semaphore, #tpu.memory_space<semaphore_mem>>)
    %c3_i32 = arith.constant 3 : i32
    %31 = arith.addi %6, %c3_i32 : i32
    %32 = arith.index_cast %31 : i32 to index
    %33 = memref.load %arg2[%32] : memref<16xi32, #tpu.memory_space<smem>>
    %c1_i32_15 = arith.constant 1 : i32
    %c1_i32_16 = arith.constant 1 : i32
    %c0_i32_17 = arith.constant 0 : i32
    %34 = tpu.memref_slice %arg3[%33, %c0_i32_17] : memref<32x768xf32, #tpu.memory_space<any>> -> memref<1x768xf32, #tpu.memory_space<any>>
    %c0_i32_18 = arith.constant 0 : i32
    %35 = tpu.memref_slice %arg7[%c1_i32_15, %c3_i32, %c0_i32_18] : memref<2x8x768xf32, #tpu.memory_space<vmem>> -> memref<1x1x768xf32, #tpu.memory_space<vmem>>
    %36 = tpu.memref_squeeze %35 : memref<1x1x768xf32, #tpu.memory_space<vmem>> -> memref<1x768xf32, #tpu.memory_space<vmem>>
    %37 = tpu.memref_slice %arg8[%c1_i32_16] : memref<2x!tpu.dma_semaphore, #tpu.memory_space<semaphore_mem>> -> memref<1x!tpu.dma_semaphore, #tpu.memory_space<semaphore_mem>>
    %38 = tpu.memref_squeeze %37 : memref<1x!tpu.dma_semaphore, #tpu.memory_space<semaphore_mem>> -> memref<!tpu.dma_semaphore, #tpu.memory_space<semaphore_mem>>
    tpu.enqueue_dma source(%34 : memref<1x768xf32, #tpu.memory_space<any>>) target(%36 : memref<1x768xf32, #tpu.memory_space<vmem>>) target_semaphore(%38 : memref<!tpu.dma_semaphore, #tpu.memory_space<semaphore_mem>>)
    %c4_i32 = arith.constant 4 : i32
    %39 = arith.addi %6, %c4_i32 : i32
    %40 = arith.index_cast %39 : i32 to index
    %41 = memref.load %arg2[%40] : memref<16xi32, #tpu.memory_space<smem>>
    %c1_i32_19 = arith.constant 1 : i32
    %c1_i32_20 = arith.constant 1 : i32
    %c0_i32_21 = arith.constant 0 : i32
    %42 = tpu.memref_slice %arg3[%41, %c0_i32_21] : memref<32x768xf32, #tpu.memory_space<any>> -> memref<1x768xf32, #tpu.memory_space<any>>
    %c0_i32_22 = arith.constant 0 : i32
    %43 = tpu.memref_slice %arg7[%c1_i32_19, %c4_i32, %c0_i32_22] : memref<2x8x768xf32, #tpu.memory_space<vmem>> -> memref<1x1x768xf32, #tpu.memory_space<vmem>>
    %44 = tpu.memref_squeeze %43 : memref<1x1x768xf32, #tpu.memory_space<vmem>> -> memref<1x768xf32, #tpu.memory_space<vmem>>
    %45 = tpu.memref_slice %arg8[%c1_i32_20] : memref<2x!tpu.dma_semaphore, #tpu.memory_space<semaphore_mem>> -> memref<1x!tpu.dma_semaphore, #tpu.memory_space<semaphore_mem>>
    %46 = tpu.memref_squeeze %45 : memref<1x!tpu.dma_semaphore, #tpu.memory_space<semaphore_mem>> -> memref<!tpu.dma_semaphore, #tpu.memory_space<semaphore_mem>>
    tpu.enqueue_dma source(%42 : memref<1x768xf32, #tpu.memory_space<any>>) target(%44 : memref<1x768xf32, #tpu.memory_space<vmem>>) target_semaphore(%46 : memref<!tpu.dma_semaphore, #tpu.memory_space<semaphore_mem>>)
    %c5_i32 = arith.constant 5 : i32
    %47 = arith.addi %6, %c5_i32 : i32
    %48 = arith.index_cast %47 : i32 to index
    %49 = memref.load %arg2[%48] : memref<16xi32, #tpu.memory_space<smem>>
    %c1_i32_23 = arith.constant 1 : i32
    %c1_i32_24 = arith.constant 1 : i32
    %c0_i32_25 = arith.constant 0 : i32
    %50 = tpu.memref_slice %arg3[%49, %c0_i32_25] : memref<32x768xf32, #tpu.memory_space<any>> -> memref<1x768xf32, #tpu.memory_space<any>>
    %c0_i32_26 = arith.constant 0 : i32
    %51 = tpu.memref_slice %arg7[%c1_i32_23, %c5_i32, %c0_i32_26] : memref<2x8x768xf32, #tpu.memory_space<vmem>> -> memref<1x1x768xf32, #tpu.memory_space<vmem>>
    %52 = tpu.memref_squeeze %51 : memref<1x1x768xf32, #tpu.memory_space<vmem>> -> memref<1x768xf32, #tpu.memory_space<vmem>>
    %53 = tpu.memref_slice %arg8[%c1_i32_24] : memref<2x!tpu.dma_semaphore, #tpu.memory_space<semaphore_mem>> -> memref<1x!tpu.dma_semaphore, #tpu.memory_space<semaphore_mem>>
    %54 = tpu.memref_squeeze %53 : memref<1x!tpu.dma_semaphore, #tpu.memory_space<semaphore_mem>> -> memref<!tpu.dma_semaphore, #tpu.memory_space<semaphore_mem>>
    tpu.enqueue_dma source(%50 : memref<1x768xf32, #tpu.memory_space<any>>) target(%52 : memref<1x768xf32, #tpu.memory_space<vmem>>) target_semaphore(%54 : memref<!tpu.dma_semaphore, #tpu.memory_space<semaphore_mem>>)
    %c6_i32 = arith.constant 6 : i32
    %55 = arith.addi %6, %c6_i32 : i32
    %56 = arith.index_cast %55 : i32 to index
    %57 = memref.load %arg2[%56] : memref<16xi32, #tpu.memory_space<smem>>
    %c1_i32_27 = arith.constant 1 : i32
    %c1_i32_28 = arith.constant 1 : i32
    %c0_i32_29 = arith.constant 0 : i32
    %58 = tpu.memref_slice %arg3[%57, %c0_i32_29] : memref<32x768xf32, #tpu.memory_space<any>> -> memref<1x768xf32, #tpu.memory_space<any>>
    %c0_i32_30 = arith.constant 0 : i32
    %59 = tpu.memref_slice %arg7[%c1_i32_27, %c6_i32, %c0_i32_30] : memref<2x8x768xf32, #tpu.memory_space<vmem>> -> memref<1x1x768xf32, #tpu.memory_space<vmem>>
    %60 = tpu.memref_squeeze %59 : memref<1x1x768xf32, #tpu.memory_space<vmem>> -> memref<1x768xf32, #tpu.memory_space<vmem>>
    %61 = tpu.memref_slice %arg8[%c1_i32_28] : memref<2x!tpu.dma_semaphore, #tpu.memory_space<semaphore_mem>> -> memref<1x!tpu.dma_semaphore, #tpu.memory_space<semaphore_mem>>
    %62 = tpu.memref_squeeze %61 : memref<1x!tpu.dma_semaphore, #tpu.memory_space<semaphore_mem>> -> memref<!tpu.dma_semaphore, #tpu.memory_space<semaphore_mem>>
    tpu.enqueue_dma source(%58 : memref<1x768xf32, #tpu.memory_space<any>>) target(%60 : memref<1x768xf32, #tpu.memory_space<vmem>>) target_semaphore(%62 : memref<!tpu.dma_semaphore, #tpu.memory_space<semaphore_mem>>)
    %c7_i32 = arith.constant 7 : i32
    %63 = arith.addi %6, %c7_i32 : i32
    %64 = arith.index_cast %63 : i32 to index
    %65 = memref.load %arg2[%64] : memref<16xi32, #tpu.memory_space<smem>>
    %c1_i32_31 = arith.constant 1 : i32
    %c1_i32_32 = arith.constant 1 : i32
    %c0_i32_33 = arith.constant 0 : i32
    %66 = tpu.memref_slice %arg3[%65, %c0_i32_33] : memref<32x768xf32, #tpu.memory_space<any>> -> memref<1x768xf32, #tpu.memory_space<any>>
    %c0_i32_34 = arith.constant 0 : i32
    %67 = tpu.memref_slice %arg7[%c1_i32_31, %c7_i32, %c0_i32_34] : memref<2x8x768xf32, #tpu.memory_space<vmem>> -> memref<1x1x768xf32, #tpu.memory_space<vmem>>
    %68 = tpu.memref_squeeze %67 : memref<1x1x768xf32, #tpu.memory_space<vmem>> -> memref<1x768xf32, #tpu.memory_space<vmem>>
    %69 = tpu.memref_slice %arg8[%c1_i32_32] : memref<2x!tpu.dma_semaphore, #tpu.memory_space<semaphore_mem>> -> memref<1x!tpu.dma_semaphore, #tpu.memory_space<semaphore_mem>>
    %70 = tpu.memref_squeeze %69 : memref<1x!tpu.dma_semaphore, #tpu.memory_space<semaphore_mem>> -> memref<!tpu.dma_semaphore, #tpu.memory_space<semaphore_mem>>
    tpu.enqueue_dma source(%66 : memref<1x768xf32, #tpu.memory_space<any>>) target(%68 : memref<1x768xf32, #tpu.memory_space<vmem>>) target_semaphore(%70 : memref<!tpu.dma_semaphore, #tpu.memory_space<semaphore_mem>>)
    %c8_i32_35 = arith.constant 8 : i32
    %c0_i32_36 = arith.constant 0 : i32
    %c0_i32_37 = arith.constant 0 : i32
    %c0_i32_38 = arith.constant 0 : i32
    %c0_i32_39 = arith.constant 0 : i32
    %c0_i32_40 = arith.constant 0 : i32
    %71 = tpu.memref_slice %arg7[%c0_i32_36, %c0_i32_39, %c0_i32_40] : memref<2x8x768xf32, #tpu.memory_space<vmem>> -> memref<1x8x768xf32, #tpu.memory_space<vmem>>
    %72 = tpu.memref_squeeze %71 : memref<1x8x768xf32, #tpu.memory_space<vmem>> -> memref<8x768xf32, #tpu.memory_space<vmem>>
    %c0_i32_41 = arith.constant 0 : i32
    %c0_i32_42 = arith.constant 0 : i32
    %73 = tpu.memref_slice %arg7[%c0_i32_37, %c0_i32_41, %c0_i32_42] : memref<2x8x768xf32, #tpu.memory_space<vmem>> -> memref<1x8x768xf32, #tpu.memory_space<vmem>>
    %74 = tpu.memref_squeeze %73 : memref<1x8x768xf32, #tpu.memory_space<vmem>> -> memref<8x768xf32, #tpu.memory_space<vmem>>
    %75 = tpu.memref_slice %arg8[%c0_i32_38] : memref<2x!tpu.dma_semaphore, #tpu.memory_space<semaphore_mem>> -> memref<1x!tpu.dma_semaphore, #tpu.memory_space<semaphore_mem>>
    %76 = tpu.memref_squeeze %75 : memref<1x!tpu.dma_semaphore, #tpu.memory_space<semaphore_mem>> -> memref<!tpu.dma_semaphore, #tpu.memory_space<semaphore_mem>>
    tpu.wait_dma2 semaphore(%76 : memref<!tpu.dma_semaphore, #tpu.memory_space<semaphore_mem>>) src(%72 : memref<8x768xf32, #tpu.memory_space<vmem>>) dst(%74 : memref<8x768xf32, #tpu.memory_space<vmem>>)
    %c0 = arith.constant 0 : index
    %c0_43 = arith.constant 0 : index
    %c0_44 = arith.constant 0 : index
    %77 = vector.load %arg7[%c0, %c0_43, %c0_44] : memref<2x8x768xf32, #tpu.memory_space<vmem>>, vector<1x8x768xf32>
    %78 = vector.shape_cast %77 : vector<1x8x768xf32> to vector<8x768xf32>
    %c0_45 = arith.constant 0 : index
    %c0_46 = arith.constant 0 : index
    %79 = vector.load %arg4[%c0_45, %c0_46] : memref<768x128xf32, #tpu.memory_space<vmem>>, vector<768x128xf32>
    %cst = arith.constant dense<0.000000e+00> : vector<8x128xf32>
    %80 = tpu.matmul %78, %79, %cst {dimension_numbers = #tpu.dot_dimension_numbers<[1], [0], [0], [1], [0, 0, 1, 1], [], []>} : vector<8x768xf32>, vector<768x128xf32>, vector<8x128xf32> -> vector<8x128xf32>
    %c0_47 = arith.constant 0 : index
    %c0_48 = arith.constant 0 : index
    %81 = vector.load %arg5[%c0_47, %c0_48] : memref<1x128xf32, #tpu.memory_space<vmem>>, vector<1x128xf32>
    %82 = vector.broadcast %81 : vector<1x128xf32> to vector<8x128xf32>
    %83 = arith.addf %80, %82 : vector<8x128xf32>
    %c0_49 = arith.constant 0 : index
    %c0_50 = arith.constant 0 : index
    %84 = vector.load %arg6[%c0_49, %c0_50] : memref<16x128xf32, #tpu.memory_space<vmem>>, vector<8x128xf32>
    tpu.vector_store %arg6[%c0_49, %c0_50], %83 {strides = array<i32>} : memref<16x128xf32, #tpu.memory_space<vmem>>, vector<8x128xf32>,
    %c1_i32_51 = arith.constant 1 : i32
    %85 = arith.addi %arg1, %c1_i32_51 : i32
    %c1_i32_52 = arith.constant 1 : i32
    %86 = arith.cmpi slt, %85, %c1_i32_52 : i32
    %87 = arith.extui %86 : i1 to i32
    %c0_i32_53 = arith.constant 0 : i32
    %88 = arith.cmpi ne, %87, %c0_i32_53 : i32
    scf.if %88 {
      %c1_i32_69 = arith.constant 1 : i32
      %103 = arith.addi %1, %c1_i32_69 : i32
      %c16_i32_70 = arith.constant 16 : i32
      %104 = arith.muli %103, %c16_i32_70 : i32
      %c0_i32_71 = arith.constant 0 : i32
      %105 = arith.addi %104, %c0_i32_71 : i32
      %c0_i32_72 = arith.constant 0 : i32
      %106 = arith.addi %105, %c0_i32_72 : i32
      %107 = arith.index_cast %106 : i32 to index
      %108 = memref.load %arg2[%107] : memref<16xi32, #tpu.memory_space<smem>>
      %c0_i32_73 = arith.constant 0 : i32
      %c0_i32_74 = arith.constant 0 : i32
      %c0_i32_75 = arith.constant 0 : i32
      %109 = tpu.memref_slice %arg3[%108, %c0_i32_75] : memref<32x768xf32, #tpu.memory_space<any>> -> memref<1x768xf32, #tpu.memory_space<any>>
      %c0_i32_76 = arith.constant 0 : i32
      %110 = tpu.memref_slice %arg7[%c0_i32_73, %c0_i32_72, %c0_i32_76] : memref<2x8x768xf32, #tpu.memory_space<vmem>> -> memref<1x1x768xf32, #tpu.memory_space<vmem>>
      %111 = tpu.memref_squeeze %110 : memref<1x1x768xf32, #tpu.memory_space<vmem>> -> memref<1x768xf32, #tpu.memory_space<vmem>>
      %112 = tpu.memref_slice %arg8[%c0_i32_74] : memref<2x!tpu.dma_semaphore, #tpu.memory_space<semaphore_mem>> -> memref<1x!tpu.dma_semaphore, #tpu.memory_space<semaphore_mem>>
      %113 = tpu.memref_squeeze %112 : memref<1x!tpu.dma_semaphore, #tpu.memory_space<semaphore_mem>> -> memref<!tpu.dma_semaphore, #tpu.memory_space<semaphore_mem>>
      tpu.enqueue_dma source(%109 : memref<1x768xf32, #tpu.memory_space<any>>) target(%111 : memref<1x768xf32, #tpu.memory_space<vmem>>) target_semaphore(%113 : memref<!tpu.dma_semaphore, #tpu.memory_space<semaphore_mem>>)
      %c1_i32_77 = arith.constant 1 : i32
      %114 = arith.addi %105, %c1_i32_77 : i32
      %115 = arith.index_cast %114 : i32 to index
      %116 = memref.load %arg2[%115] : memref<16xi32, #tpu.memory_space<smem>>
      %c0_i32_78 = arith.constant 0 : i32
      %c0_i32_79 = arith.constant 0 : i32
      %c0_i32_80 = arith.constant 0 : i32
      %117 = tpu.memref_slice %arg3[%116, %c0_i32_80] : memref<32x768xf32, #tpu.memory_space<any>> -> memref<1x768xf32, #tpu.memory_space<any>>
      %c0_i32_81 = arith.constant 0 : i32
      %118 = tpu.memref_slice %arg7[%c0_i32_78, %c1_i32_77, %c0_i32_81] : memref<2x8x768xf32, #tpu.memory_space<vmem>> -> memref<1x1x768xf32, #tpu.memory_space<vmem>>
      %119 = tpu.memref_squeeze %118 : memref<1x1x768xf32, #tpu.memory_space<vmem>> -> memref<1x768xf32, #tpu.memory_space<vmem>>
      %120 = tpu.memref_slice %arg8[%c0_i32_79] : memref<2x!tpu.dma_semaphore, #tpu.memory_space<semaphore_mem>> -> memref<1x!tpu.dma_semaphore, #tpu.memory_space<semaphore_mem>>
      %121 = tpu.memref_squeeze %120 : memref<1x!tpu.dma_semaphore, #tpu.memory_space<semaphore_mem>> -> memref<!tpu.dma_semaphore, #tpu.memory_space<semaphore_mem>>
      tpu.enqueue_dma source(%117 : memref<1x768xf32, #tpu.memory_space<any>>) target(%119 : memref<1x768xf32, #tpu.memory_space<vmem>>) target_semaphore(%121 : memref<!tpu.dma_semaphore, #tpu.memory_space<semaphore_mem>>)
      %c2_i32_82 = arith.constant 2 : i32
      %122 = arith.addi %105, %c2_i32_82 : i32
      %123 = arith.index_cast %122 : i32 to index
      %124 = memref.load %arg2[%123] : memref<16xi32, #tpu.memory_space<smem>>
      %c0_i32_83 = arith.constant 0 : i32
      %c0_i32_84 = arith.constant 0 : i32
      %c0_i32_85 = arith.constant 0 : i32
      %125 = tpu.memref_slice %arg3[%124, %c0_i32_85] : memref<32x768xf32, #tpu.memory_space<any>> -> memref<1x768xf32, #tpu.memory_space<any>>
      %c0_i32_86 = arith.constant 0 : i32
      %126 = tpu.memref_slice %arg7[%c0_i32_83, %c2_i32_82, %c0_i32_86] : memref<2x8x768xf32, #tpu.memory_space<vmem>> -> memref<1x1x768xf32, #tpu.memory_space<vmem>>
      %127 = tpu.memref_squeeze %126 : memref<1x1x768xf32, #tpu.memory_space<vmem>> -> memref<1x768xf32, #tpu.memory_space<vmem>>
      %128 = tpu.memref_slice %arg8[%c0_i32_84] : memref<2x!tpu.dma_semaphore, #tpu.memory_space<semaphore_mem>> -> memref<1x!tpu.dma_semaphore, #tpu.memory_space<semaphore_mem>>
      %129 = tpu.memref_squeeze %128 : memref<1x!tpu.dma_semaphore, #tpu.memory_space<semaphore_mem>> -> memref<!tpu.dma_semaphore, #tpu.memory_space<semaphore_mem>>
      tpu.enqueue_dma source(%125 : memref<1x768xf32, #tpu.memory_space<any>>) target(%127 : memref<1x768xf32, #tpu.memory_space<vmem>>) target_semaphore(%129 : memref<!tpu.dma_semaphore, #tpu.memory_space<semaphore_mem>>)
      %c3_i32_87 = arith.constant 3 : i32
      %130 = arith.addi %105, %c3_i32_87 : i32
      %131 = arith.index_cast %130 : i32 to index
      %132 = memref.load %arg2[%131] : memref<16xi32, #tpu.memory_space<smem>>
      %c0_i32_88 = arith.constant 0 : i32
      %c0_i32_89 = arith.constant 0 : i32
      %c0_i32_90 = arith.constant 0 : i32
      %133 = tpu.memref_slice %arg3[%132, %c0_i32_90] : memref<32x768xf32, #tpu.memory_space<any>> -> memref<1x768xf32, #tpu.memory_space<any>>
      %c0_i32_91 = arith.constant 0 : i32
      %134 = tpu.memref_slice %arg7[%c0_i32_88, %c3_i32_87, %c0_i32_91] : memref<2x8x768xf32, #tpu.memory_space<vmem>> -> memref<1x1x768xf32, #tpu.memory_space<vmem>>
      %135 = tpu.memref_squeeze %134 : memref<1x1x768xf32, #tpu.memory_space<vmem>> -> memref<1x768xf32, #tpu.memory_space<vmem>>
      %136 = tpu.memref_slice %arg8[%c0_i32_89] : memref<2x!tpu.dma_semaphore, #tpu.memory_space<semaphore_mem>> -> memref<1x!tpu.dma_semaphore, #tpu.memory_space<semaphore_mem>>
      %137 = tpu.memref_squeeze %136 : memref<1x!tpu.dma_semaphore, #tpu.memory_space<semaphore_mem>> -> memref<!tpu.dma_semaphore, #tpu.memory_space<semaphore_mem>>
      tpu.enqueue_dma source(%133 : memref<1x768xf32, #tpu.memory_space<any>>) target(%135 : memref<1x768xf32, #tpu.memory_space<vmem>>) target_semaphore(%137 : memref<!tpu.dma_semaphore, #tpu.memory_space<semaphore_mem>>)
      %c4_i32_92 = arith.constant 4 : i32
      %138 = arith.addi %105, %c4_i32_92 : i32
      %139 = arith.index_cast %138 : i32 to index
      %140 = memref.load %arg2[%139] : memref<16xi32, #tpu.memory_space<smem>>
      %c0_i32_93 = arith.constant 0 : i32
      %c0_i32_94 = arith.constant 0 : i32
      %c0_i32_95 = arith.constant 0 : i32
      %141 = tpu.memref_slice %arg3[%140, %c0_i32_95] : memref<32x768xf32, #tpu.memory_space<any>> -> memref<1x768xf32, #tpu.memory_space<any>>
      %c0_i32_96 = arith.constant 0 : i32
      %142 = tpu.memref_slice %arg7[%c0_i32_93, %c4_i32_92, %c0_i32_96] : memref<2x8x768xf32, #tpu.memory_space<vmem>> -> memref<1x1x768xf32, #tpu.memory_space<vmem>>
      %143 = tpu.memref_squeeze %142 : memref<1x1x768xf32, #tpu.memory_space<vmem>> -> memref<1x768xf32, #tpu.memory_space<vmem>>
      %144 = tpu.memref_slice %arg8[%c0_i32_94] : memref<2x!tpu.dma_semaphore, #tpu.memory_space<semaphore_mem>> -> memref<1x!tpu.dma_semaphore, #tpu.memory_space<semaphore_mem>>
      %145 = tpu.memref_squeeze %144 : memref<1x!tpu.dma_semaphore, #tpu.memory_space<semaphore_mem>> -> memref<!tpu.dma_semaphore, #tpu.memory_space<semaphore_mem>>
      tpu.enqueue_dma source(%141 : memref<1x768xf32, #tpu.memory_space<any>>) target(%143 : memref<1x768xf32, #tpu.memory_space<vmem>>) target_semaphore(%145 : memref<!tpu.dma_semaphore, #tpu.memory_space<semaphore_mem>>)
      %c5_i32_97 = arith.constant 5 : i32
      %146 = arith.addi %105, %c5_i32_97 : i32
      %147 = arith.index_cast %146 : i32 to index
      %148 = memref.load %arg2[%147] : memref<16xi32, #tpu.memory_space<smem>>
      %c0_i32_98 = arith.constant 0 : i32
      %c0_i32_99 = arith.constant 0 : i32
      %c0_i32_100 = arith.constant 0 : i32
      %149 = tpu.memref_slice %arg3[%148, %c0_i32_100] : memref<32x768xf32, #tpu.memory_space<any>> -> memref<1x768xf32, #tpu.memory_space<any>>
      %c0_i32_101 = arith.constant 0 : i32
      %150 = tpu.memref_slice %arg7[%c0_i32_98, %c5_i32_97, %c0_i32_101] : memref<2x8x768xf32, #tpu.memory_space<vmem>> -> memref<1x1x768xf32, #tpu.memory_space<vmem>>
      %151 = tpu.memref_squeeze %150 : memref<1x1x768xf32, #tpu.memory_space<vmem>> -> memref<1x768xf32, #tpu.memory_space<vmem>>
      %152 = tpu.memref_slice %arg8[%c0_i32_99] : memref<2x!tpu.dma_semaphore, #tpu.memory_space<semaphore_mem>> -> memref<1x!tpu.dma_semaphore, #tpu.memory_space<semaphore_mem>>
      %153 = tpu.memref_squeeze %152 : memref<1x!tpu.dma_semaphore, #tpu.memory_space<semaphore_mem>> -> memref<!tpu.dma_semaphore, #tpu.memory_space<semaphore_mem>>
      tpu.enqueue_dma source(%149 : memref<1x768xf32, #tpu.memory_space<any>>) target(%151 : memref<1x768xf32, #tpu.memory_space<vmem>>) target_semaphore(%153 : memref<!tpu.dma_semaphore, #tpu.memory_space<semaphore_mem>>)
      %c6_i32_102 = arith.constant 6 : i32
      %154 = arith.addi %105, %c6_i32_102 : i32
      %155 = arith.index_cast %154 : i32 to index
      %156 = memref.load %arg2[%155] : memref<16xi32, #tpu.memory_space<smem>>
      %c0_i32_103 = arith.constant 0 : i32
      %c0_i32_104 = arith.constant 0 : i32
      %c0_i32_105 = arith.constant 0 : i32
      %157 = tpu.memref_slice %arg3[%156, %c0_i32_105] : memref<32x768xf32, #tpu.memory_space<any>> -> memref<1x768xf32, #tpu.memory_space<any>>
      %c0_i32_106 = arith.constant 0 : i32
      %158 = tpu.memref_slice %arg7[%c0_i32_103, %c6_i32_102, %c0_i32_106] : memref<2x8x768xf32, #tpu.memory_space<vmem>> -> memref<1x1x768xf32, #tpu.memory_space<vmem>>
      %159 = tpu.memref_squeeze %158 : memref<1x1x768xf32, #tpu.memory_space<vmem>> -> memref<1x768xf32, #tpu.memory_space<vmem>>
      %160 = tpu.memref_slice %arg8[%c0_i32_104] : memref<2x!tpu.dma_semaphore, #tpu.memory_space<semaphore_mem>> -> memref<1x!tpu.dma_semaphore, #tpu.memory_space<semaphore_mem>>
      %161 = tpu.memref_squeeze %160 : memref<1x!tpu.dma_semaphore, #tpu.memory_space<semaphore_mem>> -> memref<!tpu.dma_semaphore, #tpu.memory_space<semaphore_mem>>
      tpu.enqueue_dma source(%157 : memref<1x768xf32, #tpu.memory_space<any>>) target(%159 : memref<1x768xf32, #tpu.memory_space<vmem>>) target_semaphore(%161 : memref<!tpu.dma_semaphore, #tpu.memory_space<semaphore_mem>>)
      %c7_i32_107 = arith.constant 7 : i32
      %162 = arith.addi %105, %c7_i32_107 : i32
      %163 = arith.index_cast %162 : i32 to index
      %164 = memref.load %arg2[%163] : memref<16xi32, #tpu.memory_space<smem>>
      %c0_i32_108 = arith.constant 0 : i32
      %c0_i32_109 = arith.constant 0 : i32
      %c0_i32_110 = arith.constant 0 : i32
      %165 = tpu.memref_slice %arg3[%164, %c0_i32_110] : memref<32x768xf32, #tpu.memory_space<any>> -> memref<1x768xf32, #tpu.memory_space<any>>
      %c0_i32_111 = arith.constant 0 : i32
      %166 = tpu.memref_slice %arg7[%c0_i32_108, %c7_i32_107, %c0_i32_111] : memref<2x8x768xf32, #tpu.memory_space<vmem>> -> memref<1x1x768xf32, #tpu.memory_space<vmem>>
      %167 = tpu.memref_squeeze %166 : memref<1x1x768xf32, #tpu.memory_space<vmem>> -> memref<1x768xf32, #tpu.memory_space<vmem>>
      %168 = tpu.memref_slice %arg8[%c0_i32_109] : memref<2x!tpu.dma_semaphore, #tpu.memory_space<semaphore_mem>> -> memref<1x!tpu.dma_semaphore, #tpu.memory_space<semaphore_mem>>
      %169 = tpu.memref_squeeze %168 : memref<1x!tpu.dma_semaphore, #tpu.memory_space<semaphore_mem>> -> memref<!tpu.dma_semaphore, #tpu.memory_space<semaphore_mem>>
      tpu.enqueue_dma source(%165 : memref<1x768xf32, #tpu.memory_space<any>>) target(%167 : memref<1x768xf32, #tpu.memory_space<vmem>>) target_semaphore(%169 : memref<!tpu.dma_semaphore, #tpu.memory_space<semaphore_mem>>)
      %c8_i32_112 = arith.constant 8 : i32
    } else {
    }
    %c1_i32_54 = arith.constant 1 : i32
    %c1_i32_55 = arith.constant 1 : i32
    %c1_i32_56 = arith.constant 1 : i32
    %c0_i32_57 = arith.constant 0 : i32
    %c0_i32_58 = arith.constant 0 : i32
    %89 = tpu.memref_slice %arg7[%c1_i32_54, %c0_i32_57, %c0_i32_58] : memref<2x8x768xf32, #tpu.memory_space<vmem>> -> memref<1x8x768xf32, #tpu.memory_space<vmem>>
    %90 = tpu.memref_squeeze %89 : memref<1x8x768xf32, #tpu.memory_space<vmem>> -> memref<8x768xf32, #tpu.memory_space<vmem>>
    %c0_i32_59 = arith.constant 0 : i32
    %c0_i32_60 = arith.constant 0 : i32
    %91 = tpu.memref_slice %arg7[%c1_i32_55, %c0_i32_59, %c0_i32_60] : memref<2x8x768xf32, #tpu.memory_space<vmem>> -> memref<1x8x768xf32, #tpu.memory_space<vmem>>
    %92 = tpu.memref_squeeze %91 : memref<1x8x768xf32, #tpu.memory_space<vmem>> -> memref<8x768xf32, #tpu.memory_space<vmem>>
    %93 = tpu.memref_slice %arg8[%c1_i32_56] : memref<2x!tpu.dma_semaphore, #tpu.memory_space<semaphore_mem>> -> memref<1x!tpu.dma_semaphore, #tpu.memory_space<semaphore_mem>>
    %94 = tpu.memref_squeeze %93 : memref<1x!tpu.dma_semaphore, #tpu.memory_space<semaphore_mem>> -> memref<!tpu.dma_semaphore, #tpu.memory_space<semaphore_mem>>
    tpu.wait_dma2 semaphore(%94 : memref<!tpu.dma_semaphore, #tpu.memory_space<semaphore_mem>>) src(%90 : memref<8x768xf32, #tpu.memory_space<vmem>>) dst(%92 : memref<8x768xf32, #tpu.memory_space<vmem>>)
    %c1 = arith.constant 1 : index
    %c0_61 = arith.constant 0 : index
    %c0_62 = arith.constant 0 : index
    %95 = vector.load %arg7[%c1, %c0_61, %c0_62] : memref<2x8x768xf32, #tpu.memory_space<vmem>>, vector<1x8x768xf32>
    %96 = vector.shape_cast %95 : vector<1x8x768xf32> to vector<8x768xf32>
    %c0_63 = arith.constant 0 : index
    %c0_64 = arith.constant 0 : index
    %97 = vector.load %arg4[%c0_63, %c0_64] : memref<768x128xf32, #tpu.memory_space<vmem>>, vector<768x128xf32>
    %cst_65 = arith.constant dense<0.000000e+00> : vector<8x128xf32>
    %98 = tpu.matmul %96, %97, %cst_65 {dimension_numbers = #tpu.dot_dimension_numbers<[1], [0], [0], [1], [0, 0, 1, 1], [], []>} : vector<8x768xf32>, vector<768x128xf32>, vector<8x128xf32> -> vector<8x128xf32>
    %c0_66 = arith.constant 0 : index
    %c0_67 = arith.constant 0 : index
    %99 = vector.load %arg5[%c0_66, %c0_67] : memref<1x128xf32, #tpu.memory_space<vmem>>, vector<1x128xf32>
    %100 = vector.broadcast %99 : vector<1x128xf32> to vector<8x128xf32>
    %101 = arith.addf %98, %100 : vector<8x128xf32>
    %c8 = arith.constant 8 : index
    %c0_68 = arith.constant 0 : index
    %102 = vector.load %arg6[%c8, %c0_68] : memref<16x128xf32, #tpu.memory_space<vmem>>, vector<8x128xf32>
    tpu.vector_store %arg6[%c8, %c0_68], %101 {strides = array<i32>} : memref<16x128xf32, #tpu.memory_space<vmem>>, vector<8x128xf32>,
    return
  }
  func.func @transform_1(%arg0: i32, %arg1: i32, %arg2: memref<16xi32, #tpu.memory_space<smem>>) -> (i32, i32) {
    %c0_i32 = arith.constant 0 : i32
    %c0_i32_0 = arith.constant 0 : i32
    %c0_i32_1 = arith.constant 0 : i32
    return %c0_i32, %c0_i32_0 : i32, i32
  }
  func.func @transform_2(%arg0: i32, %arg1: i32, %arg2: memref<16xi32, #tpu.memory_space<smem>>) -> (i32, i32) {
    %c0_i32 = arith.constant 0 : i32
    %c0_i32_0 = arith.constant 0 : i32
    %c0_i32_1 = arith.constant 0 : i32
    return %c0_i32, %c0_i32_0 : i32, i32
  }
  func.func @transform_3(%arg0: i32, %arg1: i32, %arg2: memref<16xi32, #tpu.memory_space<smem>>) -> (i32, i32) {
    %c1_i32 = arith.constant 1 : i32
    %0 = arith.muli %arg0, %c1_i32 : i32
    %1 = arith.addi %0, %arg1 : i32
    %c0_i32 = arith.constant 0 : i32
    %c0_i32_0 = arith.constant 0 : i32
    return %1, %c0_i32 : i32, i32
  }
}

</mosaic_0001>

<llo_original>
// kernel: lookup_news_encoder.1
$region0: #{lookup_news_encoder.1}
  #allocation0 [shape = 'u32[]', space=smem, size = 0x4, offset = 0x4, fixed_abs, tag = 'smem constant byte address 0x4 - core index']
  #allocation1 [shape = 'u32[144,128]{1,0:T(1,128)}', space=vmem, size = 0x12000, scoped, tag = 'internal scratch']
  #allocation2 [shape = 'f32[2,8,768]{2,1,0:T(8,128)}', space=vmem, size = 0xc000, scoped, tag = 'scratch operand']
  #allocation3 [shape = 's32[2]{0}', space=sflag, size = 0x8, scoped, tag = 'scratch operand']
  #allocation4 [shape = 's32[1]{0}', space=sflag, size = 0x4, scoped, tag = 'scoped memory for lookup_news_encoder.1']
  #allocation5 [shape = 'u8[512]{0}', space=smem, size = 0x200, scoped, tag = 'prefetched SMEM operand 0']
  #allocation8 [shape = 's32[]', space=sflag, size = 0x4, offset = 0, fixed_abs, tag = 'sflag constant byte address 0x0 - dummy sync flag']
  #allocation9 [shape = 's32[]', space=sflag, size = 0x4, offset = 0, fixed_abs, tag = 'sflag constant byte address 0x0 - dummy sync flag']
  #allocation10 [shape = 's32[]', space=sflag, size = 0x4, offset = 0, fixed_abs, tag = 'sflag constant byte address 0x0 - dummy sync flag']
  #allocation11 [shape = 's32[]', space=sflag, size = 0x4, offset = 0, fixed_abs, tag = 'sflag constant byte address 0x0 - dummy sync flag']
  #allocation12 [shape = 's32[]', space=sflag, size = 0x4, offset = 0, fixed_abs, tag = 'sflag constant byte address 0x0 - dummy sync flag']
  #allocation13 [shape = 's32[]', space=sflag, size = 0x4, offset = 0, fixed_abs, tag = 'sflag constant byte address 0x0 - dummy sync flag']
  #allocation14 [shape = 's32[]', space=sflag, size = 0x4, offset = 0, fixed_abs, tag = 'sflag constant byte address 0x0 - dummy sync flag']
  #allocation15 [shape = 's32[]', space=sflag, size = 0x4, offset = 0, fixed_abs, tag = 'sflag constant byte address 0x0 - dummy sync flag']
  #allocation16 [shape = 's32[]', space=sflag, size = 0x4, offset = 0, fixed_abs, tag = 'sflag constant byte address 0x0 - dummy sync flag']
  #allocation17 [shape = 's32[]', space=sflag, size = 0x4, offset = 0, fixed_abs, tag = 'sflag constant byte address 0x0 - dummy sync flag']
  #allocation18 [shape = 's32[]', space=sflag, size = 0x4, offset = 0, fixed_abs, tag = 'sflag constant byte address 0x0 - dummy sync flag']
  #allocation19 [shape = 's32[]', space=sflag, size = 0x4, offset = 0, fixed_abs, tag = 'sflag constant byte address 0x0 - dummy sync flag']
  #allocation20 [shape = 's32[]', space=sflag, size = 0x4, offset = 0, fixed_abs, tag = 'sflag constant byte address 0x0 - dummy sync flag']
  #allocation21 [shape = 's32[]', space=sflag, size = 0x4, offset = 0, fixed_abs, tag = 'sflag constant byte address 0x0 - dummy sync flag']
  #allocation22 [shape = 's32[]', space=sflag, size = 0x4, offset = 0, fixed_abs, tag = 'sflag constant byte address 0x0 - dummy sync flag']
  #allocation23 [shape = 's32[]', space=sflag, size = 0x4, offset = 0, fixed_abs, tag = 'sflag constant byte address 0x0 - dummy sync flag']
  #allocation24 [shape = 's32[]', space=sflag, size = 0x4, offset = 0, fixed_abs, tag = 'sflag constant byte address 0x0 - dummy sync flag']
  #allocation25 [shape = 's32[]', space=sflag, size = 0x4, offset = 0, fixed_abs, tag = 'sflag constant byte address 0x0 - dummy sync flag']
  #allocation26 [shape = 's32[]', space=sflag, size = 0x4, offset = 0, fixed_abs, tag = 'sflag constant byte address 0x0 - dummy sync flag']
  #allocation27 [shape = 's32[]', space=sflag, size = 0x4, offset = 0, fixed_abs, tag = 'sflag constant byte address 0x0 - dummy sync flag']
  #allocation28 [shape = 's32[]', space=sflag, size = 0x4, offset = 0, fixed_abs, tag = 'sflag constant byte address 0x0 - dummy sync flag']
  #allocation29 [shape = 's32[]', space=sflag, size = 0x4, offset = 0, fixed_abs, tag = 'sflag constant byte address 0x0 - dummy sync flag']
  #allocation30 [shape = 's32[]', space=sflag, size = 0x4, offset = 0, fixed_abs, tag = 'sflag constant byte address 0x0 - dummy sync flag']
  #allocation31 [shape = 's32[]', space=sflag, size = 0x4, offset = 0, fixed_abs, tag = 'sflag constant byte address 0x0 - dummy sync flag']
  %s0 = inlined_call_operand.vmem [shape: s32[16], index: 0, kind: input, shape index: {}]
  %s1 = inlined_call_operand.vmem [shape: f32[32,768], index: 1, kind: input, shape index: {}]
  %s2 = inlined_call_operand.hbm [shape: f32[768,128], index: 2, kind: input, shape index: {}]
  %s3 = inlined_call_operand.vmem [shape: f32[1,128], index: 3, kind: input, shape index: {}]
  %s4 = inlined_call_operand.vmem [shape: f32[16,128], index: 4, kind: output, shape index: {}]
  %s5 = sld [smem:[#allocation0]]
  $region750: #{lookup_news_encoder.1} parent=0
    _
  %s7 = ssub.s32 1, %s5
  %s8 = scalar_select 0, %s7, %s5
  %s9 = sshll.u32 %s0, 4
  %s10 = int_to_ptr.vmem [resolvable:$true] %s9
  %12 = dma.vmem_to_smem %s10, 16, [#allocation5], [#allocation4]
  %13 = dma.done [#allocation4], 16
  %14 = sfence
  $region1: #{lookup_news_encoder.1} parent=0
    #allocation6 [shape = 'u8[393216]{0}', space=vmem, size = 0x60000, scoped, tag = 'input window, operand 2, single buffered']
    #allocation7 [shape = 's32[1]{0}', space=sflag, size = 0x4, scoped, tag = 'scoped memory for lookup_news_encoder.1']
    %15 = vsyncpa [#allocation7], 0
    // Predicated region
    $region2: #{lookup_news_encoder.1} parent=1 // pred_check
      _
    $region3: #{lookup_news_encoder.1} parent=1 // pred_check_branch
      %17 = sbr.rel (0) target = $region5
    $region4: #{lookup_news_encoder.1} parent=1 // pred_region
      %s19 = ssub.s32 12288, 12288
      %20 = vsyncadd [#allocation7], %s19
      %s21 = sshll.u32 [#allocation6], 4
      %s22 = int_to_ptr.vmem [resolvable:$true] %s21
      %27 = dma.hbm_to_vmem [thread:$0]  %s2, 12288, %s22, [#allocation7], 128, 128, 8
    $region5: #{lookup_news_encoder.1} parent=1 // pred_fallthru
      _
    // Predicated region
    $region6: #{lookup_news_encoder.1} parent=1 // pred_check
      _
    $region7: #{lookup_news_encoder.1} parent=1 // pred_check_branch
      %29 = sbr.rel (0) target = $region9
    $region8: #{lookup_news_encoder.1} parent=1 // pred_region
      _
    $region9: #{lookup_news_encoder.1} parent=1 // pred_fallthru
      _
    // Predicated region
    $region10: #{lookup_news_encoder.1} parent=1 // pred_check
      _
    $region11: #{lookup_news_encoder.1} parent=1 // pred_check_branch
      %31 = sbr.rel (0) target = $region13
    $region12: #{lookup_news_encoder.1} parent=1 // pred_region
      %32 = dma.done [#allocation7], 12288
    $region13: #{lookup_news_encoder.1} parent=1 // pred_fallthru
      _
    %s33 = sadd.s32 0, 0
    %s34 = smul.u32 2, %s33
    %p35 = scmp.lt.s32.totalorder %s34, 1
    %s36 = scalar_select %p35, %s34, 1
    %s37 = smul.addr %s36, 8
    %s38 = scalar_lea.vmem %s4, %s37
    %s39 = sadd.s32 0, 0
    %s40 = smul.u32 2, %s39
    %p41 = scmp.lt.s32.totalorder %s40, 1
    %s42 = scalar_select %p41, %s40, 1
    %s43 = smul.addr %s42, 8
    %s44 = scalar_lea.vmem %s4, %s43
    %s45 = sadd.s32 0, 0
    %s46 = smul.u32 2, %s45
    %s47 = sadd.s32 0, 0
    %p48 = scmp.eq.s32.totalorder 0, 0
    // Predicated region
    $region14: #{lookup_news_encoder.1} parent=1 // pred_check
      %p49 = pneg %p48
    $region15: #{lookup_news_encoder.1} parent=1 // pred_check_branch
      %51 = sbr.rel (%p49) target = $region17
    $region16: #{lookup_news_encoder.1} parent=1 // pred_region
      %s52 = smul.u32 %s47, 16
      %s53 = sld [smem:[#allocation5 + %s52]]
      %s54 = sshrl.u32 %s53, 3
      %s55 = sand.u32 %s53, 7
      %s56 = smul.u32 %s54, 48
      %s57 = sadd.s32 %s55, %s56
      %s58 = scalar_lea.vmem %s1, %s57
      %p60 = scmp.lt.u32.totalorder 1, 8
      %p61 = pneg %p60
      // Predicated region
      $region18: #{lookup_news_encoder.1} parent=16 // pred_check
        _
      $region19: #{lookup_news_encoder.1} parent=16 // pred_check_branch
        %63 = sbr.rel (%p60) target = $region21
      $region20: #{lookup_news_encoder.1} parent=16 // pred_region
        %s88 = sand.u32 1, 7
        %p89 = scmp.eq.s32.totalorder %s88, 0
        %p90 = pneg %p89
        // Predicated region
        $region33: #{lookup_news_encoder.1} parent=20 // pred_check
          _
        $region34: #{lookup_news_encoder.1} parent=20 // pred_check_branch
          %92 = sbr.rel (%p89) target = $region36
        $region35: #{lookup_news_encoder.1} parent=20 // pred_region
          %s93 = sand.u32 1, 7
          %s94 = ssub.s32 1, %s93
          %s95 = scalar_lea.vmem %s58, %s94
          %s96 = ssub.s32 1, %s93
          %s97 = scalar_lea.vmem [#allocation2], %s96
          %s98 = sshllo.u32 0, %s93
          loop: start=0, step=1, limit=1
          $region37: #{lookup_news_encoder.1} parent=35 // loop_pre_header
            _
          $region38: #{lookup_news_encoder.1} parent=35 // loop_header
            %s100 = sphi 0, %s104
            %p101 = scmp.ge.s32.totalorder %s100, 1
            %s105 = sphi %s95, %s95
            %s106 = sphi %s97, %s97
          $region39: #{lookup_news_encoder.1} parent=35 // loop_header_branch
            %103 = sbr.rel (%p101) target = $region43
          $region40: #{lookup_news_encoder.1} parent=35 // loop_body
            %v107 = vld [vmem:[%s105] sm:%s98]
            %108 = vst [vmem:[%s106] sm:%s98] %v107
            %v109 = vld [vmem:[%s105 + $0x8] sm:%s98]
            %110 = vst [vmem:[%s106 + $0x8] sm:%s98] %v109
            %v111 = vld [vmem:[%s105 + $0x10] sm:%s98]
            %112 = vst [vmem:[%s106 + $0x10] sm:%s98] %v111
            %v113 = vld [vmem:[%s105 + $0x18] sm:%s98]
            %114 = vst [vmem:[%s106 + $0x18] sm:%s98] %v113
            %v115 = vld [vmem:[%s105 + $0x20] sm:%s98]
            %116 = vst [vmem:[%s106 + $0x20] sm:%s98] %v115
            %v117 = vld [vmem:[%s105 + $0x28] sm:%s98]
            %118 = vst [vmem:[%s106 + $0x28] sm:%s98] %v117
          $region41: #{lookup_news_encoder.1} parent=35 // loop_footer
            %s104 = sadd.s32 1, %s100
          $region42: #{lookup_news_encoder.1} parent=35 // loop_footer_branch
            %99 = sbr.rel target = $region38
          $region43: #{lookup_news_encoder.1} parent=35 // loop_exit
            _
        $region36: #{lookup_news_encoder.1} parent=20 // pred_fallthru
          _
      $region21: #{lookup_news_encoder.1} parent=16 // pred_fallthru
        _
      // Predicated region
      $region22: #{lookup_news_encoder.1} parent=16 // pred_check
        %p64 = pneg %p60
      $region23: #{lookup_news_encoder.1} parent=16 // pred_check_branch
        %66 = sbr.rel (%p64) target = $region25
      $region24: #{lookup_news_encoder.1} parent=16 // pred_region
        %s67 = sshllo.u32 0, 1
        loop: start=0, step=1, limit=1
        $region26: #{lookup_news_encoder.1} parent=24 // loop_pre_header
          _
        $region27: #{lookup_news_encoder.1} parent=24 // loop_header
          %s69 = sphi 0, %s73
          %p70 = scmp.ge.s32.totalorder %s69, 1
          %s74 = sphi %s58, %s58
          %s75 = sphi [#allocation2], [#allocation2]
        $region28: #{lookup_news_encoder.1} parent=24 // loop_header_branch
          %72 = sbr.rel (%p70) target = $region32
        $region29: #{lookup_news_encoder.1} parent=24 // loop_body
          %v76 = vld [vmem:[%s74] sm:%s67]
          %77 = vst [vmem:[%s75] sm:%s67] %v76
          %v78 = vld [vmem:[%s74 + $0x8] sm:%s67]
          %79 = vst [vmem:[%s75 + $0x8] sm:%s67] %v78
          %v80 = vld [vmem:[%s74 + $0x10] sm:%s67]
          %81 = vst [vmem:[%s75 + $0x10] sm:%s67] %v80
          %v82 = vld [vmem:[%s74 + $0x18] sm:%s67]
          %83 = vst [vmem:[%s75 + $0x18] sm:%s67] %v82
          %v84 = vld [vmem:[%s74 + $0x20] sm:%s67]
          %85 = vst [vmem:[%s75 + $0x20] sm:%s67] %v84
          %v86 = vld [vmem:[%s74 + $0x28] sm:%s67]
          %87 = vst [vmem:[%s75 + $0x28] sm:%s67] %v86
        $region30: #{lookup_news_encoder.1} parent=24 // loop_footer
          %s73 = sadd.s32 1, %s69
        $region31: #{lookup_news_encoder.1} parent=24 // loop_footer_branch
          %68 = sbr.rel target = $region27
        $region32: #{lookup_news_encoder.1} parent=24 // loop_exit
          _
      $region25: #{lookup_news_encoder.1} parent=16 // pred_fallthru
        _
      // Predicated region
      $region44: #{lookup_news_encoder.1} parent=16 // pred_check
        _
      $region45: #{lookup_news_encoder.1} parent=16 // pred_check_branch
        %121 = sbr.rel (0) target = $region47
      $region46: #{lookup_news_encoder.1} parent=16 // pred_region
        %122 = vsyncadd [#allocation3], 96
      $region47: #{lookup_news_encoder.1} parent=16 // pred_fallthru
        _
      %s123 = sadd.s32 %s52, 1
      %s124 = sld [smem:[#allocation5 + %s123]]
      %s125 = sshrl.u32 %s124, 3
      %s126 = sand.u32 %s124, 7
      %s127 = smul.u32 %s125, 48
      %s128 = sadd.s32 %s126, %s127
      %s129 = scalar_lea.vmem %s1, %s128
      %s130 = scalar_lea.vmem [#allocation2], 1
      %p132 = scmp.lt.u32.totalorder 1, 8
      %p133 = pneg %p132
      // Predicated region
      $region48: #{lookup_news_encoder.1} parent=16 // pred_check
        _
      $region49: #{lookup_news_encoder.1} parent=16 // pred_check_branch
        %135 = sbr.rel (%p132) target = $region51
      $region50: #{lookup_news_encoder.1} parent=16 // pred_region
        %s160 = sand.u32 1, 7
        %p161 = scmp.eq.s32.totalorder %s160, 0
        %p162 = pneg %p161
        // Predicated region
        $region63: #{lookup_news_encoder.1} parent=50 // pred_check
          _
        $region64: #{lookup_news_encoder.1} parent=50 // pred_check_branch
          %164 = sbr.rel (%p161) target = $region66
        $region65: #{lookup_news_encoder.1} parent=50 // pred_region
          %s165 = sand.u32 1, 7
          %s166 = ssub.s32 1, %s165
          %s167 = scalar_lea.vmem %s129, %s166
          %s168 = ssub.s32 1, %s165
          %s169 = scalar_lea.vmem %s130, %s168 [#allocation2]
          %s170 = sshllo.u32 0, %s165
          loop: start=0, step=1, limit=1
          $region67: #{lookup_news_encoder.1} parent=65 // loop_pre_header
            _
          $region68: #{lookup_news_encoder.1} parent=65 // loop_header
            %s172 = sphi 0, %s176
            %p173 = scmp.ge.s32.totalorder %s172, 1
            %s177 = sphi %s167, %s167
            %s178 = sphi %s169, %s169
          $region69: #{lookup_news_encoder.1} parent=65 // loop_header_branch
            %175 = sbr.rel (%p173) target = $region73
          $region70: #{lookup_news_encoder.1} parent=65 // loop_body
            %v179 = vld [vmem:[%s177] sm:%s170]
            %180 = vst [vmem:[%s178] sm:%s170] %v179
            %v181 = vld [vmem:[%s177 + $0x8] sm:%s170]
            %182 = vst [vmem:[%s178 + $0x8] sm:%s170] %v181
            %v183 = vld [vmem:[%s177 + $0x10] sm:%s170]
            %184 = vst [vmem:[%s178 + $0x10] sm:%s170] %v183
            %v185 = vld [vmem:[%s177 + $0x18] sm:%s170]
            %186 = vst [vmem:[%s178 + $0x18] sm:%s170] %v185
            %v187 = vld [vmem:[%s177 + $0x20] sm:%s170]
            %188 = vst [vmem:[%s178 + $0x20] sm:%s170] %v187
            %v189 = vld [vmem:[%s177 + $0x28] sm:%s170]
            %190 = vst [vmem:[%s178 + $0x28] sm:%s170] %v189
          $region71: #{lookup_news_encoder.1} parent=65 // loop_footer
            %s176 = sadd.s32 1, %s172
          $region72: #{lookup_news_encoder.1} parent=65 // loop_footer_branch
            %171 = sbr.rel target = $region68
          $region73: #{lookup_news_encoder.1} parent=65 // loop_exit
            _
        $region66: #{lookup_news_encoder.1} parent=50 // pred_fallthru
          _
      $region51: #{lookup_news_encoder.1} parent=16 // pred_fallthru
        _
      // Predicated region
      $region52: #{lookup_news_encoder.1} parent=16 // pred_check
        %p136 = pneg %p132
      $region53: #{lookup_news_encoder.1} parent=16 // pred_check_branch
        %138 = sbr.rel (%p136) target = $region55
      $region54: #{lookup_news_encoder.1} parent=16 // pred_region
        %s139 = sshllo.u32 0, 1
        loop: start=0, step=1, limit=1
        $region56: #{lookup_news_encoder.1} parent=54 // loop_pre_header
          _
        $region57: #{lookup_news_encoder.1} parent=54 // loop_header
          %s141 = sphi 0, %s145
          %p142 = scmp.ge.s32.totalorder %s141, 1
          %s146 = sphi %s129, %s129
          %s147 = sphi %s130, %s130
        $region58: #{lookup_news_encoder.1} parent=54 // loop_header_branch
          %144 = sbr.rel (%p142) target = $region62
        $region59: #{lookup_news_encoder.1} parent=54 // loop_body
          %v148 = vld [vmem:[%s146] sm:%s139]
          %149 = vst [vmem:[%s147] sm:%s139] %v148
          %v150 = vld [vmem:[%s146 + $0x8] sm:%s139]
          %151 = vst [vmem:[%s147 + $0x8] sm:%s139] %v150
          %v152 = vld [vmem:[%s146 + $0x10] sm:%s139]
          %153 = vst [vmem:[%s147 + $0x10] sm:%s139] %v152
          %v154 = vld [vmem:[%s146 + $0x18] sm:%s139]
          %155 = vst [vmem:[%s147 + $0x18] sm:%s139] %v154
          %v156 = vld [vmem:[%s146 + $0x20] sm:%s139]
          %157 = vst [vmem:[%s147 + $0x20] sm:%s139] %v156
          %v158 = vld [vmem:[%s146 + $0x28] sm:%s139]
          %159 = vst [vmem:[%s147 + $0x28] sm:%s139] %v158
        $region60: #{lookup_news_encoder.1} parent=54 // loop_footer
          %s145 = sadd.s32 1, %s141
        $region61: #{lookup_news_encoder.1} parent=54 // loop_footer_branch
          %140 = sbr.rel target = $region57
        $region62: #{lookup_news_encoder.1} parent=54 // loop_exit
          _
      $region55: #{lookup_news_encoder.1} parent=16 // pred_fallthru
        _
      // Predicated region
      $region74: #{lookup_news_encoder.1} parent=16 // pred_check
        _
      $region75: #{lookup_news_encoder.1} parent=16 // pred_check_branch
        %193 = sbr.rel (0) target = $region77
      $region76: #{lookup_news_encoder.1} parent=16 // pred_region
        %194 = vsyncadd [#allocation3], 96
      $region77: #{lookup_news_encoder.1} parent=16 // pred_fallthru
        _
      %s195 = sadd.s32 %s52, 2
      %s196 = sld [smem:[#allocation5 + %s195]]
      %s197 = sshrl.u32 %s196, 3
      %s198 = sand.u32 %s196, 7
      %s199 = smul.u32 %s197, 48
      %s200 = sadd.s32 %s198, %s199
      %s201 = scalar_lea.vmem %s1, %s200
      %s202 = scalar_lea.vmem [#allocation2], 2
      %p204 = scmp.lt.u32.totalorder 1, 8
      %p205 = pneg %p204
      // Predicated region
      $region78: #{lookup_news_encoder.1} parent=16 // pred_check
        _
      $region79: #{lookup_news_encoder.1} parent=16 // pred_check_branch
        %207 = sbr.rel (%p204) target = $region81
      $region80: #{lookup_news_encoder.1} parent=16 // pred_region
        %s232 = sand.u32 1, 7
        %p233 = scmp.eq.s32.totalorder %s232, 0
        %p234 = pneg %p233
        // Predicated region
        $region93: #{lookup_news_encoder.1} parent=80 // pred_check
          _
        $region94: #{lookup_news_encoder.1} parent=80 // pred_check_branch
          %236 = sbr.rel (%p233) target = $region96
        $region95: #{lookup_news_encoder.1} parent=80 // pred_region
          %s237 = sand.u32 1, 7
          %s238 = ssub.s32 1, %s237
          %s239 = scalar_lea.vmem %s201, %s238
          %s240 = ssub.s32 1, %s237
          %s241 = scalar_lea.vmem %s202, %s240 [#allocation2]
          %s242 = sshllo.u32 0, %s237
          loop: start=0, step=1, limit=1
          $region97: #{lookup_news_encoder.1} parent=95 // loop_pre_header
            _
          $region98: #{lookup_news_encoder.1} parent=95 // loop_header
            %s244 = sphi 0, %s248
            %p245 = scmp.ge.s32.totalorder %s244, 1
            %s249 = sphi %s239, %s239
            %s250 = sphi %s241, %s241
          $region99: #{lookup_news_encoder.1} parent=95 // loop_header_branch
            %247 = sbr.rel (%p245) target = $region103
          $region100: #{lookup_news_encoder.1} parent=95 // loop_body
            %v251 = vld [vmem:[%s249] sm:%s242]
            %252 = vst [vmem:[%s250] sm:%s242] %v251
            %v253 = vld [vmem:[%s249 + $0x8] sm:%s242]
            %254 = vst [vmem:[%s250 + $0x8] sm:%s242] %v253
            %v255 = vld [vmem:[%s249 + $0x10] sm:%s242]
            %256 = vst [vmem:[%s250 + $0x10] sm:%s242] %v255
            %v257 = vld [vmem:[%s249 + $0x18] sm:%s242]
            %258 = vst [vmem:[%s250 + $0x18] sm:%s242] %v257
            %v259 = vld [vmem:[%s249 + $0x20] sm:%s242]
            %260 = vst [vmem:[%s250 + $0x20] sm:%s242] %v259
            %v261 = vld [vmem:[%s249 + $0x28] sm:%s242]
            %262 = vst [vmem:[%s250 + $0x28] sm:%s242] %v261
          $region101: #{lookup_news_encoder.1} parent=95 // loop_footer
            %s248 = sadd.s32 1, %s244
          $region102: #{lookup_news_encoder.1} parent=95 // loop_footer_branch
            %243 = sbr.rel target = $region98
          $region103: #{lookup_news_encoder.1} parent=95 // loop_exit
            _
        $region96: #{lookup_news_encoder.1} parent=80 // pred_fallthru
          _
      $region81: #{lookup_news_encoder.1} parent=16 // pred_fallthru
        _
      // Predicated region
      $region82: #{lookup_news_encoder.1} parent=16 // pred_check
        %p208 = pneg %p204
      $region83: #{lookup_news_encoder.1} parent=16 // pred_check_branch
        %210 = sbr.rel (%p208) target = $region85
      $region84: #{lookup_news_encoder.1} parent=16 // pred_region
        %s211 = sshllo.u32 0, 1
        loop: start=0, step=1, limit=1
        $region86: #{lookup_news_encoder.1} parent=84 // loop_pre_header
          _
        $region87: #{lookup_news_encoder.1} parent=84 // loop_header
          %s213 = sphi 0, %s217
          %p214 = scmp.ge.s32.totalorder %s213, 1
          %s218 = sphi %s201, %s201
          %s219 = sphi %s202, %s202
        $region88: #{lookup_news_encoder.1} parent=84 // loop_header_branch
          %216 = sbr.rel (%p214) target = $region92
        $region89: #{lookup_news_encoder.1} parent=84 // loop_body
          %v220 = vld [vmem:[%s218] sm:%s211]
          %221 = vst [vmem:[%s219] sm:%s211] %v220
          %v222 = vld [vmem:[%s218 + $0x8] sm:%s211]
          %223 = vst [vmem:[%s219 + $0x8] sm:%s211] %v222
          %v224 = vld [vmem:[%s218 + $0x10] sm:%s211]
          %225 = vst [vmem:[%s219 + $0x10] sm:%s211] %v224
          %v226 = vld [vmem:[%s218 + $0x18] sm:%s211]
          %227 = vst [vmem:[%s219 + $0x18] sm:%s211] %v226
          %v228 = vld [vmem:[%s218 + $0x20] sm:%s211]
          %229 = vst [vmem:[%s219 + $0x20] sm:%s211] %v228
          %v230 = vld [vmem:[%s218 + $0x28] sm:%s211]
          %231 = vst [vmem:[%s219 + $0x28] sm:%s211] %v230
        $region90: #{lookup_news_encoder.1} parent=84 // loop_footer
          %s217 = sadd.s32 1, %s213
        $region91: #{lookup_news_encoder.1} parent=84 // loop_footer_branch
          %212 = sbr.rel target = $region87
        $region92: #{lookup_news_encoder.1} parent=84 // loop_exit
          _
      $region85: #{lookup_news_encoder.1} parent=16 // pred_fallthru
        _
      // Predicated region
      $region104: #{lookup_news_encoder.1} parent=16 // pred_check
        _
      $region105: #{lookup_news_encoder.1} parent=16 // pred_check_branch
        %265 = sbr.rel (0) target = $region107
      $region106: #{lookup_news_encoder.1} parent=16 // pred_region
        %266 = vsyncadd [#allocation3], 96
      $region107: #{lookup_news_encoder.1} parent=16 // pred_fallthru
        _
      %s267 = sadd.s32 %s52, 3
      %s268 = sld [smem:[#allocation5 + %s267]]
      %s269 = sshrl.u32 %s268, 3
      %s270 = sand.u32 %s268, 7
      %s271 = smul.u32 %s269, 48
      %s272 = sadd.s32 %s270, %s271
      %s273 = scalar_lea.vmem %s1, %s272
      %s274 = scalar_lea.vmem [#allocation2], 3
      %p276 = scmp.lt.u32.totalorder 1, 8
      %p277 = pneg %p276
      // Predicated region
      $region108: #{lookup_news_encoder.1} parent=16 // pred_check
        _
      $region109: #{lookup_news_encoder.1} parent=16 // pred_check_branch
        %279 = sbr.rel (%p276) target = $region111
      $region110: #{lookup_news_encoder.1} parent=16 // pred_region
        %s304 = sand.u32 1, 7
        %p305 = scmp.eq.s32.totalorder %s304, 0
        %p306 = pneg %p305
        // Predicated region
        $region123: #{lookup_news_encoder.1} parent=110 // pred_check
          _
        $region124: #{lookup_news_encoder.1} parent=110 // pred_check_branch
          %308 = sbr.rel (%p305) target = $region126
        $region125: #{lookup_news_encoder.1} parent=110 // pred_region
          %s309 = sand.u32 1, 7
          %s310 = ssub.s32 1, %s309
          %s311 = scalar_lea.vmem %s273, %s310
          %s312 = ssub.s32 1, %s309
          %s313 = scalar_lea.vmem %s274, %s312 [#allocation2]
          %s314 = sshllo.u32 0, %s309
          loop: start=0, step=1, limit=1
          $region127: #{lookup_news_encoder.1} parent=125 // loop_pre_header
            _
          $region128: #{lookup_news_encoder.1} parent=125 // loop_header
            %s316 = sphi 0, %s320
            %p317 = scmp.ge.s32.totalorder %s316, 1
            %s321 = sphi %s311, %s311
            %s322 = sphi %s313, %s313
          $region129: #{lookup_news_encoder.1} parent=125 // loop_header_branch
            %319 = sbr.rel (%p317) target = $region133
          $region130: #{lookup_news_encoder.1} parent=125 // loop_body
            %v323 = vld [vmem:[%s321] sm:%s314]
            %324 = vst [vmem:[%s322] sm:%s314] %v323
            %v325 = vld [vmem:[%s321 + $0x8] sm:%s314]
            %326 = vst [vmem:[%s322 + $0x8] sm:%s314] %v325
            %v327 = vld [vmem:[%s321 + $0x10] sm:%s314]
            %328 = vst [vmem:[%s322 + $0x10] sm:%s314] %v327
            %v329 = vld [vmem:[%s321 + $0x18] sm:%s314]
            %330 = vst [vmem:[%s322 + $0x18] sm:%s314] %v329
            %v331 = vld [vmem:[%s321 + $0x20] sm:%s314]
            %332 = vst [vmem:[%s322 + $0x20] sm:%s314] %v331
            %v333 = vld [vmem:[%s321 + $0x28] sm:%s314]
            %334 = vst [vmem:[%s322 + $0x28] sm:%s314] %v333
          $region131: #{lookup_news_encoder.1} parent=125 // loop_footer
            %s320 = sadd.s32 1, %s316
          $region132: #{lookup_news_encoder.1} parent=125 // loop_footer_branch
            %315 = sbr.rel target = $region128
          $region133: #{lookup_news_encoder.1} parent=125 // loop_exit
            _
        $region126: #{lookup_news_encoder.1} parent=110 // pred_fallthru
          _
      $region111: #{lookup_news_encoder.1} parent=16 // pred_fallthru
        _
      // Predicated region
      $region112: #{lookup_news_encoder.1} parent=16 // pred_check
        %p280 = pneg %p276
      $region113: #{lookup_news_encoder.1} parent=16 // pred_check_branch
        %282 = sbr.rel (%p280) target = $region115
      $region114: #{lookup_news_encoder.1} parent=16 // pred_region
        %s283 = sshllo.u32 0, 1
        loop: start=0, step=1, limit=1
        $region116: #{lookup_news_encoder.1} parent=114 // loop_pre_header
          _
        $region117: #{lookup_news_encoder.1} parent=114 // loop_header
          %s285 = sphi 0, %s289
          %p286 = scmp.ge.s32.totalorder %s285, 1
          %s290 = sphi %s273, %s273
          %s291 = sphi %s274, %s274
        $region118: #{lookup_news_encoder.1} parent=114 // loop_header_branch
          %288 = sbr.rel (%p286) target = $region122
        $region119: #{lookup_news_encoder.1} parent=114 // loop_body
          %v292 = vld [vmem:[%s290] sm:%s283]
          %293 = vst [vmem:[%s291] sm:%s283] %v292
          %v294 = vld [vmem:[%s290 + $0x8] sm:%s283]
          %295 = vst [vmem:[%s291 + $0x8] sm:%s283] %v294
          %v296 = vld [vmem:[%s290 + $0x10] sm:%s283]
          %297 = vst [vmem:[%s291 + $0x10] sm:%s283] %v296
          %v298 = vld [vmem:[%s290 + $0x18] sm:%s283]
          %299 = vst [vmem:[%s291 + $0x18] sm:%s283] %v298
          %v300 = vld [vmem:[%s290 + $0x20] sm:%s283]
          %301 = vst [vmem:[%s291 + $0x20] sm:%s283] %v300
          %v302 = vld [vmem:[%s290 + $0x28] sm:%s283]
          %303 = vst [vmem:[%s291 + $0x28] sm:%s283] %v302
        $region120: #{lookup_news_encoder.1} parent=114 // loop_footer
          %s289 = sadd.s32 1, %s285
        $region121: #{lookup_news_encoder.1} parent=114 // loop_footer_branch
          %284 = sbr.rel target = $region117
        $region122: #{lookup_news_encoder.1} parent=114 // loop_exit
          _
      $region115: #{lookup_news_encoder.1} parent=16 // pred_fallthru
        _
      // Predicated region
      $region134: #{lookup_news_encoder.1} parent=16 // pred_check
        _
      $region135: #{lookup_news_encoder.1} parent=16 // pred_check_branch
        %337 = sbr.rel (0) target = $region137
      $region136: #{lookup_news_encoder.1} parent=16 // pred_region
        %338 = vsyncadd [#allocation3], 96
      $region137: #{lookup_news_encoder.1} parent=16 // pred_fallthru
        _
      %s339 = sadd.s32 %s52, 4
      %s340 = sld [smem:[#allocation5 + %s339]]
      %s341 = sshrl.u32 %s340, 3
      %s342 = sand.u32 %s340, 7
      %s343 = smul.u32 %s341, 48
      %s344 = sadd.s32 %s342, %s343
      %s345 = scalar_lea.vmem %s1, %s344
      %s346 = scalar_lea.vmem [#allocation2], 4
      %p348 = scmp.lt.u32.totalorder 1, 8
      %p349 = pneg %p348
      // Predicated region
      $region138: #{lookup_news_encoder.1} parent=16 // pred_check
        _
      $region139: #{lookup_news_encoder.1} parent=16 // pred_check_branch
        %351 = sbr.rel (%p348) target = $region141
      $region140: #{lookup_news_encoder.1} parent=16 // pred_region
        %s376 = sand.u32 1, 7
        %p377 = scmp.eq.s32.totalorder %s376, 0
        %p378 = pneg %p377
        // Predicated region
        $region153: #{lookup_news_encoder.1} parent=140 // pred_check
          _
        $region154: #{lookup_news_encoder.1} parent=140 // pred_check_branch
          %380 = sbr.rel (%p377) target = $region156
        $region155: #{lookup_news_encoder.1} parent=140 // pred_region
          %s381 = sand.u32 1, 7
          %s382 = ssub.s32 1, %s381
          %s383 = scalar_lea.vmem %s345, %s382
          %s384 = ssub.s32 1, %s381
          %s385 = scalar_lea.vmem %s346, %s384 [#allocation2]
          %s386 = sshllo.u32 0, %s381
          loop: start=0, step=1, limit=1
          $region157: #{lookup_news_encoder.1} parent=155 // loop_pre_header
            _
          $region158: #{lookup_news_encoder.1} parent=155 // loop_header
            %s388 = sphi 0, %s392
            %p389 = scmp.ge.s32.totalorder %s388, 1
            %s393 = sphi %s383, %s383
            %s394 = sphi %s385, %s385
          $region159: #{lookup_news_encoder.1} parent=155 // loop_header_branch
            %391 = sbr.rel (%p389) target = $region163
          $region160: #{lookup_news_encoder.1} parent=155 // loop_body
            %v395 = vld [vmem:[%s393] sm:%s386]
            %396 = vst [vmem:[%s394] sm:%s386] %v395
            %v397 = vld [vmem:[%s393 + $0x8] sm:%s386]
            %398 = vst [vmem:[%s394 + $0x8] sm:%s386] %v397
            %v399 = vld [vmem:[%s393 + $0x10] sm:%s386]
            %400 = vst [vmem:[%s394 + $0x10] sm:%s386] %v399
            %v401 = vld [vmem:[%s393 + $0x18] sm:%s386]
            %402 = vst [vmem:[%s394 + $0x18] sm:%s386] %v401
            %v403 = vld [vmem:[%s393 + $0x20] sm:%s386]
            %404 = vst [vmem:[%s394 + $0x20] sm:%s386] %v403
            %v405 = vld [vmem:[%s393 + $0x28] sm:%s386]
            %406 = vst [vmem:[%s394 + $0x28] sm:%s386] %v405
          $region161: #{lookup_news_encoder.1} parent=155 // loop_footer
            %s392 = sadd.s32 1, %s388
          $region162: #{lookup_news_encoder.1} parent=155 // loop_footer_branch
            %387 = sbr.rel target = $region158
          $region163: #{lookup_news_encoder.1} parent=155 // loop_exit
            _
        $region156: #{lookup_news_encoder.1} parent=140 // pred_fallthru
          _
      $region141: #{lookup_news_encoder.1} parent=16 // pred_fallthru
        _
      // Predicated region
      $region142: #{lookup_news_encoder.1} parent=16 // pred_check
        %p352 = pneg %p348
      $region143: #{lookup_news_encoder.1} parent=16 // pred_check_branch
        %354 = sbr.rel (%p352) target = $region145
      $region144: #{lookup_news_encoder.1} parent=16 // pred_region
        %s355 = sshllo.u32 0, 1
        loop: start=0, step=1, limit=1
        $region146: #{lookup_news_encoder.1} parent=144 // loop_pre_header
          _
        $region147: #{lookup_news_encoder.1} parent=144 // loop_header
          %s357 = sphi 0, %s361
          %p358 = scmp.ge.s32.totalorder %s357, 1
          %s362 = sphi %s345, %s345
          %s363 = sphi %s346, %s346
        $region148: #{lookup_news_encoder.1} parent=144 // loop_header_branch
          %360 = sbr.rel (%p358) target = $region152
        $region149: #{lookup_news_encoder.1} parent=144 // loop_body
          %v364 = vld [vmem:[%s362] sm:%s355]
          %365 = vst [vmem:[%s363] sm:%s355] %v364
          %v366 = vld [vmem:[%s362 + $0x8] sm:%s355]
          %367 = vst [vmem:[%s363 + $0x8] sm:%s355] %v366
          %v368 = vld [vmem:[%s362 + $0x10] sm:%s355]
          %369 = vst [vmem:[%s363 + $0x10] sm:%s355] %v368
          %v370 = vld [vmem:[%s362 + $0x18] sm:%s355]
          %371 = vst [vmem:[%s363 + $0x18] sm:%s355] %v370
          %v372 = vld [vmem:[%s362 + $0x20] sm:%s355]
          %373 = vst [vmem:[%s363 + $0x20] sm:%s355] %v372
          %v374 = vld [vmem:[%s362 + $0x28] sm:%s355]
          %375 = vst [vmem:[%s363 + $0x28] sm:%s355] %v374
        $region150: #{lookup_news_encoder.1} parent=144 // loop_footer
          %s361 = sadd.s32 1, %s357
        $region151: #{lookup_news_encoder.1} parent=144 // loop_footer_branch
          %356 = sbr.rel target = $region147
        $region152: #{lookup_news_encoder.1} parent=144 // loop_exit
          _
      $region145: #{lookup_news_encoder.1} parent=16 // pred_fallthru
        _
      // Predicated region
      $region164: #{lookup_news_encoder.1} parent=16 // pred_check
        _
      $region165: #{lookup_news_encoder.1} parent=16 // pred_check_branch
        %409 = sbr.rel (0) target = $region167
      $region166: #{lookup_news_encoder.1} parent=16 // pred_region
        %410 = vsyncadd [#allocation3], 96
      $region167: #{lookup_news_encoder.1} parent=16 // pred_fallthru
        _
      %s411 = sadd.s32 %s52, 5
      %s412 = sld [smem:[#allocation5 + %s411]]
      %s413 = sshrl.u32 %s412, 3
      %s414 = sand.u32 %s412, 7
      %s415 = smul.u32 %s413, 48
      %s416 = sadd.s32 %s414, %s415
      %s417 = scalar_lea.vmem %s1, %s416
      %s418 = scalar_lea.vmem [#allocation2], 5
      %p420 = scmp.lt.u32.totalorder 1, 8
      %p421 = pneg %p420
      // Predicated region
      $region168: #{lookup_news_encoder.1} parent=16 // pred_check
        _
      $region169: #{lookup_news_encoder.1} parent=16 // pred_check_branch
        %423 = sbr.rel (%p420) target = $region171
      $region170: #{lookup_news_encoder.1} parent=16 // pred_region
        %s448 = sand.u32 1, 7
        %p449 = scmp.eq.s32.totalorder %s448, 0
        %p450 = pneg %p449
        // Predicated region
        $region183: #{lookup_news_encoder.1} parent=170 // pred_check
          _
        $region184: #{lookup_news_encoder.1} parent=170 // pred_check_branch
          %452 = sbr.rel (%p449) target = $region186
        $region185: #{lookup_news_encoder.1} parent=170 // pred_region
          %s453 = sand.u32 1, 7
          %s454 = ssub.s32 1, %s453
          %s455 = scalar_lea.vmem %s417, %s454
          %s456 = ssub.s32 1, %s453
          %s457 = scalar_lea.vmem %s418, %s456 [#allocation2]
          %s458 = sshllo.u32 0, %s453
          loop: start=0, step=1, limit=1
          $region187: #{lookup_news_encoder.1} parent=185 // loop_pre_header
            _
          $region188: #{lookup_news_encoder.1} parent=185 // loop_header
            %s460 = sphi 0, %s464
            %p461 = scmp.ge.s32.totalorder %s460, 1
            %s465 = sphi %s455, %s455
            %s466 = sphi %s457, %s457
          $region189: #{lookup_news_encoder.1} parent=185 // loop_header_branch
            %463 = sbr.rel (%p461) target = $region193
          $region190: #{lookup_news_encoder.1} parent=185 // loop_body
            %v467 = vld [vmem:[%s465] sm:%s458]
            %468 = vst [vmem:[%s466] sm:%s458] %v467
            %v469 = vld [vmem:[%s465 + $0x8] sm:%s458]
            %470 = vst [vmem:[%s466 + $0x8] sm:%s458] %v469
            %v471 = vld [vmem:[%s465 + $0x10] sm:%s458]
            %472 = vst [vmem:[%s466 + $0x10] sm:%s458] %v471
            %v473 = vld [vmem:[%s465 + $0x18] sm:%s458]
            %474 = vst [vmem:[%s466 + $0x18] sm:%s458] %v473
            %v475 = vld [vmem:[%s465 + $0x20] sm:%s458]
            %476 = vst [vmem:[%s466 + $0x20] sm:%s458] %v475
            %v477 = vld [vmem:[%s465 + $0x28] sm:%s458]
            %478 = vst [vmem:[%s466 + $0x28] sm:%s458] %v477
          $region191: #{lookup_news_encoder.1} parent=185 // loop_footer
            %s464 = sadd.s32 1, %s460
          $region192: #{lookup_news_encoder.1} parent=185 // loop_footer_branch
            %459 = sbr.rel target = $region188
          $region193: #{lookup_news_encoder.1} parent=185 // loop_exit
            _
        $region186: #{lookup_news_encoder.1} parent=170 // pred_fallthru
          _
      $region171: #{lookup_news_encoder.1} parent=16 // pred_fallthru
        _
      // Predicated region
      $region172: #{lookup_news_encoder.1} parent=16 // pred_check
        %p424 = pneg %p420
      $region173: #{lookup_news_encoder.1} parent=16 // pred_check_branch
        %426 = sbr.rel (%p424) target = $region175
      $region174: #{lookup_news_encoder.1} parent=16 // pred_region
        %s427 = sshllo.u32 0, 1
        loop: start=0, step=1, limit=1
        $region176: #{lookup_news_encoder.1} parent=174 // loop_pre_header
          _
        $region177: #{lookup_news_encoder.1} parent=174 // loop_header
          %s429 = sphi 0, %s433
          %p430 = scmp.ge.s32.totalorder %s429, 1
          %s434 = sphi %s417, %s417
          %s435 = sphi %s418, %s418
        $region178: #{lookup_news_encoder.1} parent=174 // loop_header_branch
          %432 = sbr.rel (%p430) target = $region182
        $region179: #{lookup_news_encoder.1} parent=174 // loop_body
          %v436 = vld [vmem:[%s434] sm:%s427]
          %437 = vst [vmem:[%s435] sm:%s427] %v436
          %v438 = vld [vmem:[%s434 + $0x8] sm:%s427]
          %439 = vst [vmem:[%s435 + $0x8] sm:%s427] %v438
          %v440 = vld [vmem:[%s434 + $0x10] sm:%s427]
          %441 = vst [vmem:[%s435 + $0x10] sm:%s427] %v440
          %v442 = vld [vmem:[%s434 + $0x18] sm:%s427]
          %443 = vst [vmem:[%s435 + $0x18] sm:%s427] %v442
          %v444 = vld [vmem:[%s434 + $0x20] sm:%s427]
          %445 = vst [vmem:[%s435 + $0x20] sm:%s427] %v444
          %v446 = vld [vmem:[%s434 + $0x28] sm:%s427]
          %447 = vst [vmem:[%s435 + $0x28] sm:%s427] %v446
        $region180: #{lookup_news_encoder.1} parent=174 // loop_footer
          %s433 = sadd.s32 1, %s429
        $region181: #{lookup_news_encoder.1} parent=174 // loop_footer_branch
          %428 = sbr.rel target = $region177
        $region182: #{lookup_news_encoder.1} parent=174 // loop_exit
          _
      $region175: #{lookup_news_encoder.1} parent=16 // pred_fallthru
        _
      // Predicated region
      $region194: #{lookup_news_encoder.1} parent=16 // pred_check
        _
      $region195: #{lookup_news_encoder.1} parent=16 // pred_check_branch
        %481 = sbr.rel (0) target = $region197
      $region196: #{lookup_news_encoder.1} parent=16 // pred_region
        %482 = vsyncadd [#allocation3], 96
      $region197: #{lookup_news_encoder.1} parent=16 // pred_fallthru
        _
      %s483 = sadd.s32 %s52, 6
      %s484 = sld [smem:[#allocation5 + %s483]]
      %s485 = sshrl.u32 %s484, 3
      %s486 = sand.u32 %s484, 7
      %s487 = smul.u32 %s485, 48
      %s488 = sadd.s32 %s486, %s487
      %s489 = scalar_lea.vmem %s1, %s488
      %s490 = scalar_lea.vmem [#allocation2], 6
      %p492 = scmp.lt.u32.totalorder 1, 8
      %p493 = pneg %p492
      // Predicated region
      $region198: #{lookup_news_encoder.1} parent=16 // pred_check
        _
      $region199: #{lookup_news_encoder.1} parent=16 // pred_check_branch
        %495 = sbr.rel (%p492) target = $region201
      $region200: #{lookup_news_encoder.1} parent=16 // pred_region
        %s520 = sand.u32 1, 7
        %p521 = scmp.eq.s32.totalorder %s520, 0
        %p522 = pneg %p521
        // Predicated region
        $region213: #{lookup_news_encoder.1} parent=200 // pred_check
          _
        $region214: #{lookup_news_encoder.1} parent=200 // pred_check_branch
          %524 = sbr.rel (%p521) target = $region216
        $region215: #{lookup_news_encoder.1} parent=200 // pred_region
          %s525 = sand.u32 1, 7
          %s526 = ssub.s32 1, %s525
          %s527 = scalar_lea.vmem %s489, %s526
          %s528 = ssub.s32 1, %s525
          %s529 = scalar_lea.vmem %s490, %s528 [#allocation2]
          %s530 = sshllo.u32 0, %s525
          loop: start=0, step=1, limit=1
          $region217: #{lookup_news_encoder.1} parent=215 // loop_pre_header
            _
          $region218: #{lookup_news_encoder.1} parent=215 // loop_header
            %s532 = sphi 0, %s536
            %p533 = scmp.ge.s32.totalorder %s532, 1
            %s537 = sphi %s527, %s527
            %s538 = sphi %s529, %s529
          $region219: #{lookup_news_encoder.1} parent=215 // loop_header_branch
            %535 = sbr.rel (%p533) target = $region223
          $region220: #{lookup_news_encoder.1} parent=215 // loop_body
            %v539 = vld [vmem:[%s537] sm:%s530]
            %540 = vst [vmem:[%s538] sm:%s530] %v539
            %v541 = vld [vmem:[%s537 + $0x8] sm:%s530]
            %542 = vst [vmem:[%s538 + $0x8] sm:%s530] %v541
            %v543 = vld [vmem:[%s537 + $0x10] sm:%s530]
            %544 = vst [vmem:[%s538 + $0x10] sm:%s530] %v543
            %v545 = vld [vmem:[%s537 + $0x18] sm:%s530]
            %546 = vst [vmem:[%s538 + $0x18] sm:%s530] %v545
            %v547 = vld [vmem:[%s537 + $0x20] sm:%s530]
            %548 = vst [vmem:[%s538 + $0x20] sm:%s530] %v547
            %v549 = vld [vmem:[%s537 + $0x28] sm:%s530]
            %550 = vst [vmem:[%s538 + $0x28] sm:%s530] %v549
          $region221: #{lookup_news_encoder.1} parent=215 // loop_footer
            %s536 = sadd.s32 1, %s532
          $region222: #{lookup_news_encoder.1} parent=215 // loop_footer_branch
            %531 = sbr.rel target = $region218
          $region223: #{lookup_news_encoder.1} parent=215 // loop_exit
            _
        $region216: #{lookup_news_encoder.1} parent=200 // pred_fallthru
          _
      $region201: #{lookup_news_encoder.1} parent=16 // pred_fallthru
        _
      // Predicated region
      $region202: #{lookup_news_encoder.1} parent=16 // pred_check
        %p496 = pneg %p492
      $region203: #{lookup_news_encoder.1} parent=16 // pred_check_branch
        %498 = sbr.rel (%p496) target = $region205
      $region204: #{lookup_news_encoder.1} parent=16 // pred_region
        %s499 = sshllo.u32 0, 1
        loop: start=0, step=1, limit=1
        $region206: #{lookup_news_encoder.1} parent=204 // loop_pre_header
          _
        $region207: #{lookup_news_encoder.1} parent=204 // loop_header
          %s501 = sphi 0, %s505
          %p502 = scmp.ge.s32.totalorder %s501, 1
          %s506 = sphi %s489, %s489
          %s507 = sphi %s490, %s490
        $region208: #{lookup_news_encoder.1} parent=204 // loop_header_branch
          %504 = sbr.rel (%p502) target = $region212
        $region209: #{lookup_news_encoder.1} parent=204 // loop_body
          %v508 = vld [vmem:[%s506] sm:%s499]
          %509 = vst [vmem:[%s507] sm:%s499] %v508
          %v510 = vld [vmem:[%s506 + $0x8] sm:%s499]
          %511 = vst [vmem:[%s507 + $0x8] sm:%s499] %v510
          %v512 = vld [vmem:[%s506 + $0x10] sm:%s499]
          %513 = vst [vmem:[%s507 + $0x10] sm:%s499] %v512
          %v514 = vld [vmem:[%s506 + $0x18] sm:%s499]
          %515 = vst [vmem:[%s507 + $0x18] sm:%s499] %v514
          %v516 = vld [vmem:[%s506 + $0x20] sm:%s499]
          %517 = vst [vmem:[%s507 + $0x20] sm:%s499] %v516
          %v518 = vld [vmem:[%s506 + $0x28] sm:%s499]
          %519 = vst [vmem:[%s507 + $0x28] sm:%s499] %v518
        $region210: #{lookup_news_encoder.1} parent=204 // loop_footer
          %s505 = sadd.s32 1, %s501
        $region211: #{lookup_news_encoder.1} parent=204 // loop_footer_branch
          %500 = sbr.rel target = $region207
        $region212: #{lookup_news_encoder.1} parent=204 // loop_exit
          _
      $region205: #{lookup_news_encoder.1} parent=16 // pred_fallthru
        _
      // Predicated region
      $region224: #{lookup_news_encoder.1} parent=16 // pred_check
        _
      $region225: #{lookup_news_encoder.1} parent=16 // pred_check_branch
        %553 = sbr.rel (0) target = $region227
      $region226: #{lookup_news_encoder.1} parent=16 // pred_region
        %554 = vsyncadd [#allocation3], 96
      $region227: #{lookup_news_encoder.1} parent=16 // pred_fallthru
        _
      %s555 = sadd.s32 %s52, 7
      %s556 = sld [smem:[#allocation5 + %s555]]
      %s557 = sshrl.u32 %s556, 3
      %s558 = sand.u32 %s556, 7
      %s559 = smul.u32 %s557, 48
      %s560 = sadd.s32 %s558, %s559
      %s561 = scalar_lea.vmem %s1, %s560
      %s562 = scalar_lea.vmem [#allocation2], 7
      %p564 = scmp.lt.u32.totalorder 1, 8
      %p565 = pneg %p564
      // Predicated region
      $region228: #{lookup_news_encoder.1} parent=16 // pred_check
        _
      $region229: #{lookup_news_encoder.1} parent=16 // pred_check_branch
        %567 = sbr.rel (%p564) target = $region231
      $region230: #{lookup_news_encoder.1} parent=16 // pred_region
        %s592 = sand.u32 1, 7
        %p593 = scmp.eq.s32.totalorder %s592, 0
        %p594 = pneg %p593
        // Predicated region
        $region243: #{lookup_news_encoder.1} parent=230 // pred_check
          _
        $region244: #{lookup_news_encoder.1} parent=230 // pred_check_branch
          %596 = sbr.rel (%p593) target = $region246
        $region245: #{lookup_news_encoder.1} parent=230 // pred_region
          %s597 = sand.u32 1, 7
          %s598 = ssub.s32 1, %s597
          %s599 = scalar_lea.vmem %s561, %s598
          %s600 = ssub.s32 1, %s597
          %s601 = scalar_lea.vmem %s562, %s600 [#allocation2]
          %s602 = sshllo.u32 0, %s597
          loop: start=0, step=1, limit=1
          $region247: #{lookup_news_encoder.1} parent=245 // loop_pre_header
            _
          $region248: #{lookup_news_encoder.1} parent=245 // loop_header
            %s604 = sphi 0, %s608
            %p605 = scmp.ge.s32.totalorder %s604, 1
            %s609 = sphi %s599, %s599
            %s610 = sphi %s601, %s601
          $region249: #{lookup_news_encoder.1} parent=245 // loop_header_branch
            %607 = sbr.rel (%p605) target = $region253
          $region250: #{lookup_news_encoder.1} parent=245 // loop_body
            %v611 = vld [vmem:[%s609] sm:%s602]
            %612 = vst [vmem:[%s610] sm:%s602] %v611
            %v613 = vld [vmem:[%s609 + $0x8] sm:%s602]
            %614 = vst [vmem:[%s610 + $0x8] sm:%s602] %v613
            %v615 = vld [vmem:[%s609 + $0x10] sm:%s602]
            %616 = vst [vmem:[%s610 + $0x10] sm:%s602] %v615
            %v617 = vld [vmem:[%s609 + $0x18] sm:%s602]
            %618 = vst [vmem:[%s610 + $0x18] sm:%s602] %v617
            %v619 = vld [vmem:[%s609 + $0x20] sm:%s602]
            %620 = vst [vmem:[%s610 + $0x20] sm:%s602] %v619
            %v621 = vld [vmem:[%s609 + $0x28] sm:%s602]
            %622 = vst [vmem:[%s610 + $0x28] sm:%s602] %v621
          $region251: #{lookup_news_encoder.1} parent=245 // loop_footer
            %s608 = sadd.s32 1, %s604
          $region252: #{lookup_news_encoder.1} parent=245 // loop_footer_branch
            %603 = sbr.rel target = $region248
          $region253: #{lookup_news_encoder.1} parent=245 // loop_exit
            _
        $region246: #{lookup_news_encoder.1} parent=230 // pred_fallthru
          _
      $region231: #{lookup_news_encoder.1} parent=16 // pred_fallthru
        _
      // Predicated region
      $region232: #{lookup_news_encoder.1} parent=16 // pred_check
        %p568 = pneg %p564
      $region233: #{lookup_news_encoder.1} parent=16 // pred_check_branch
        %570 = sbr.rel (%p568) target = $region235
      $region234: #{lookup_news_encoder.1} parent=16 // pred_region
        %s571 = sshllo.u32 0, 1
        loop: start=0, step=1, limit=1
        $region236: #{lookup_news_encoder.1} parent=234 // loop_pre_header
          _
        $region237: #{lookup_news_encoder.1} parent=234 // loop_header
          %s573 = sphi 0, %s577
          %p574 = scmp.ge.s32.totalorder %s573, 1
          %s578 = sphi %s561, %s561
          %s579 = sphi %s562, %s562
        $region238: #{lookup_news_encoder.1} parent=234 // loop_header_branch
          %576 = sbr.rel (%p574) target = $region242
        $region239: #{lookup_news_encoder.1} parent=234 // loop_body
          %v580 = vld [vmem:[%s578] sm:%s571]
          %581 = vst [vmem:[%s579] sm:%s571] %v580
          %v582 = vld [vmem:[%s578 + $0x8] sm:%s571]
          %583 = vst [vmem:[%s579 + $0x8] sm:%s571] %v582
          %v584 = vld [vmem:[%s578 + $0x10] sm:%s571]
          %585 = vst [vmem:[%s579 + $0x10] sm:%s571] %v584
          %v586 = vld [vmem:[%s578 + $0x18] sm:%s571]
          %587 = vst [vmem:[%s579 + $0x18] sm:%s571] %v586
          %v588 = vld [vmem:[%s578 + $0x20] sm:%s571]
          %589 = vst [vmem:[%s579 + $0x20] sm:%s571] %v588
          %v590 = vld [vmem:[%s578 + $0x28] sm:%s571]
          %591 = vst [vmem:[%s579 + $0x28] sm:%s571] %v590
        $region240: #{lookup_news_encoder.1} parent=234 // loop_footer
          %s577 = sadd.s32 1, %s573
        $region241: #{lookup_news_encoder.1} parent=234 // loop_footer_branch
          %572 = sbr.rel target = $region237
        $region242: #{lookup_news_encoder.1} parent=234 // loop_exit
          _
      $region235: #{lookup_news_encoder.1} parent=16 // pred_fallthru
        _
      // Predicated region
      $region254: #{lookup_news_encoder.1} parent=16 // pred_check
        _
      $region255: #{lookup_news_encoder.1} parent=16 // pred_check_branch
        %625 = sbr.rel (0) target = $region257
      $region256: #{lookup_news_encoder.1} parent=16 // pred_region
        %626 = vsyncadd [#allocation3], 96
      $region257: #{lookup_news_encoder.1} parent=16 // pred_fallthru
        _
    $region17: #{lookup_news_encoder.1} parent=1 // pred_fallthru
      _
    %s627 = smul.u32 %s47, 16
    %s628 = sadd.s32 %s627, 8
    %s629 = sld [smem:[#allocation5 + %s628]]
    %s630 = sshrl.u32 %s629, 3
    %s631 = sand.u32 %s629, 7
    %s632 = smul.u32 %s630, 48
    %s633 = sadd.s32 %s631, %s632
    %s634 = scalar_lea.vmem %s1, %s633
    %s635 = scalar_lea.vmem [#allocation2], 48
    %s636 = scalar_lea.sflag [#allocation3], 1
    %p638 = scmp.lt.u32.totalorder 1, 8
    %p639 = pneg %p638
    // Predicated region
    $region258: #{lookup_news_encoder.1} parent=1 // pred_check
      _
    $region259: #{lookup_news_encoder.1} parent=1 // pred_check_branch
      %641 = sbr.rel (%p638) target = $region261
    $region260: #{lookup_news_encoder.1} parent=1 // pred_region
      %s666 = sand.u32 1, 7
      %p667 = scmp.eq.s32.totalorder %s666, 0
      %p668 = pneg %p667
      // Predicated region
      $region273: #{lookup_news_encoder.1} parent=260 // pred_check
        _
      $region274: #{lookup_news_encoder.1} parent=260 // pred_check_branch
        %670 = sbr.rel (%p667) target = $region276
      $region275: #{lookup_news_encoder.1} parent=260 // pred_region
        %s671 = sand.u32 1, 7
        %s672 = ssub.s32 1, %s671
        %s673 = scalar_lea.vmem %s634, %s672
        %s674 = ssub.s32 1, %s671
        %s675 = scalar_lea.vmem %s635, %s674 [#allocation2]
        %s676 = sshllo.u32 0, %s671
        loop: start=0, step=1, limit=1
        $region277: #{lookup_news_encoder.1} parent=275 // loop_pre_header
          _
        $region278: #{lookup_news_encoder.1} parent=275 // loop_header
          %s678 = sphi 0, %s682
          %p679 = scmp.ge.s32.totalorder %s678, 1
          %s683 = sphi %s673, %s673
          %s684 = sphi %s675, %s675
        $region279: #{lookup_news_encoder.1} parent=275 // loop_header_branch
          %681 = sbr.rel (%p679) target = $region283
        $region280: #{lookup_news_encoder.1} parent=275 // loop_body
          %v685 = vld [vmem:[%s683] sm:%s676]
          %686 = vst [vmem:[%s684] sm:%s676] %v685
          %v687 = vld [vmem:[%s683 + $0x8] sm:%s676]
          %688 = vst [vmem:[%s684 + $0x8] sm:%s676] %v687
          %v689 = vld [vmem:[%s683 + $0x10] sm:%s676]
          %690 = vst [vmem:[%s684 + $0x10] sm:%s676] %v689
          %v691 = vld [vmem:[%s683 + $0x18] sm:%s676]
          %692 = vst [vmem:[%s684 + $0x18] sm:%s676] %v691
          %v693 = vld [vmem:[%s683 + $0x20] sm:%s676]
          %694 = vst [vmem:[%s684 + $0x20] sm:%s676] %v693
          %v695 = vld [vmem:[%s683 + $0x28] sm:%s676]
          %696 = vst [vmem:[%s684 + $0x28] sm:%s676] %v695
        $region281: #{lookup_news_encoder.1} parent=275 // loop_footer
          %s682 = sadd.s32 1, %s678
        $region282: #{lookup_news_encoder.1} parent=275 // loop_footer_branch
          %677 = sbr.rel target = $region278
        $region283: #{lookup_news_encoder.1} parent=275 // loop_exit
          _
      $region276: #{lookup_news_encoder.1} parent=260 // pred_fallthru
        _
    $region261: #{lookup_news_encoder.1} parent=1 // pred_fallthru
      _
    // Predicated region
    $region262: #{lookup_news_encoder.1} parent=1 // pred_check
      %p642 = pneg %p638
    $region263: #{lookup_news_encoder.1} parent=1 // pred_check_branch
      %644 = sbr.rel (%p642) target = $region265
    $region264: #{lookup_news_encoder.1} parent=1 // pred_region
      %s645 = sshllo.u32 0, 1
      loop: start=0, step=1, limit=1
      $region266: #{lookup_news_encoder.1} parent=264 // loop_pre_header
        _
      $region267: #{lookup_news_encoder.1} parent=264 // loop_header
        %s647 = sphi 0, %s651
        %p648 = scmp.ge.s32.totalorder %s647, 1
        %s652 = sphi %s634, %s634
        %s653 = sphi %s635, %s635
      $region268: #{lookup_news_encoder.1} parent=264 // loop_header_branch
        %650 = sbr.rel (%p648) target = $region272
      $region269: #{lookup_news_encoder.1} parent=264 // loop_body
        %v654 = vld [vmem:[%s652] sm:%s645]
        %655 = vst [vmem:[%s653] sm:%s645] %v654
        %v656 = vld [vmem:[%s652 + $0x8] sm:%s645]
        %657 = vst [vmem:[%s653 + $0x8] sm:%s645] %v656
        %v658 = vld [vmem:[%s652 + $0x10] sm:%s645]
        %659 = vst [vmem:[%s653 + $0x10] sm:%s645] %v658
        %v660 = vld [vmem:[%s652 + $0x18] sm:%s645]
        %661 = vst [vmem:[%s653 + $0x18] sm:%s645] %v660
        %v662 = vld [vmem:[%s652 + $0x20] sm:%s645]
        %663 = vst [vmem:[%s653 + $0x20] sm:%s645] %v662
        %v664 = vld [vmem:[%s652 + $0x28] sm:%s645]
        %665 = vst [vmem:[%s653 + $0x28] sm:%s645] %v664
      $region270: #{lookup_news_encoder.1} parent=264 // loop_footer
        %s651 = sadd.s32 1, %s647
      $region271: #{lookup_news_encoder.1} parent=264 // loop_footer_branch
        %646 = sbr.rel target = $region267
      $region272: #{lookup_news_encoder.1} parent=264 // loop_exit
        _
    $region265: #{lookup_news_encoder.1} parent=1 // pred_fallthru
      _
    // Predicated region
    $region284: #{lookup_news_encoder.1} parent=1 // pred_check
      _
    $region285: #{lookup_news_encoder.1} parent=1 // pred_check_branch
      %699 = sbr.rel (0) target = $region287
    $region286: #{lookup_news_encoder.1} parent=1 // pred_region
      %700 = vsyncadd %s636, 96
    $region287: #{lookup_news_encoder.1} parent=1 // pred_fallthru
      _
    %s701 = sadd.s32 %s627, 9
    %s702 = sld [smem:[#allocation5 + %s701]]
    %s703 = sshrl.u32 %s702, 3
    %s704 = sand.u32 %s702, 7
    %s705 = smul.u32 %s703, 48
    %s706 = sadd.s32 %s704, %s705
    %s707 = scalar_lea.vmem %s1, %s706
    %s708 = scalar_lea.vmem [#allocation2], 49
    %p710 = scmp.lt.u32.totalorder 1, 8
    %p711 = pneg %p710
    // Predicated region
    $region288: #{lookup_news_encoder.1} parent=1 // pred_check
      _
    $region289: #{lookup_news_encoder.1} parent=1 // pred_check_branch
      %713 = sbr.rel (%p710) target = $region291
    $region290: #{lookup_news_encoder.1} parent=1 // pred_region
      %s738 = sand.u32 1, 7
      %p739 = scmp.eq.s32.totalorder %s738, 0
      %p740 = pneg %p739
      // Predicated region
      $region303: #{lookup_news_encoder.1} parent=290 // pred_check
        _
      $region304: #{lookup_news_encoder.1} parent=290 // pred_check_branch
        %742 = sbr.rel (%p739) target = $region306
      $region305: #{lookup_news_encoder.1} parent=290 // pred_region
        %s743 = sand.u32 1, 7
        %s744 = ssub.s32 1, %s743
        %s745 = scalar_lea.vmem %s707, %s744
        %s746 = ssub.s32 1, %s743
        %s747 = scalar_lea.vmem %s708, %s746 [#allocation2]
        %s748 = sshllo.u32 0, %s743
        loop: start=0, step=1, limit=1
        $region307: #{lookup_news_encoder.1} parent=305 // loop_pre_header
          _
        $region308: #{lookup_news_encoder.1} parent=305 // loop_header
          %s750 = sphi 0, %s754
          %p751 = scmp.ge.s32.totalorder %s750, 1
          %s755 = sphi %s745, %s745
          %s756 = sphi %s747, %s747
        $region309: #{lookup_news_encoder.1} parent=305 // loop_header_branch
          %753 = sbr.rel (%p751) target = $region313
        $region310: #{lookup_news_encoder.1} parent=305 // loop_body
          %v757 = vld [vmem:[%s755] sm:%s748]
          %758 = vst [vmem:[%s756] sm:%s748] %v757
          %v759 = vld [vmem:[%s755 + $0x8] sm:%s748]
          %760 = vst [vmem:[%s756 + $0x8] sm:%s748] %v759
          %v761 = vld [vmem:[%s755 + $0x10] sm:%s748]
          %762 = vst [vmem:[%s756 + $0x10] sm:%s748] %v761
          %v763 = vld [vmem:[%s755 + $0x18] sm:%s748]
          %764 = vst [vmem:[%s756 + $0x18] sm:%s748] %v763
          %v765 = vld [vmem:[%s755 + $0x20] sm:%s748]
          %766 = vst [vmem:[%s756 + $0x20] sm:%s748] %v765
          %v767 = vld [vmem:[%s755 + $0x28] sm:%s748]
          %768 = vst [vmem:[%s756 + $0x28] sm:%s748] %v767
        $region311: #{lookup_news_encoder.1} parent=305 // loop_footer
          %s754 = sadd.s32 1, %s750
        $region312: #{lookup_news_encoder.1} parent=305 // loop_footer_branch
          %749 = sbr.rel target = $region308
        $region313: #{lookup_news_encoder.1} parent=305 // loop_exit
          _
      $region306: #{lookup_news_encoder.1} parent=290 // pred_fallthru
        _
    $region291: #{lookup_news_encoder.1} parent=1 // pred_fallthru
      _
    // Predicated region
    $region292: #{lookup_news_encoder.1} parent=1 // pred_check
      %p714 = pneg %p710
    $region293: #{lookup_news_encoder.1} parent=1 // pred_check_branch
      %716 = sbr.rel (%p714) target = $region295
    $region294: #{lookup_news_encoder.1} parent=1 // pred_region
      %s717 = sshllo.u32 0, 1
      loop: start=0, step=1, limit=1
      $region296: #{lookup_news_encoder.1} parent=294 // loop_pre_header
        _
      $region297: #{lookup_news_encoder.1} parent=294 // loop_header
        %s719 = sphi 0, %s723
        %p720 = scmp.ge.s32.totalorder %s719, 1
        %s724 = sphi %s707, %s707
        %s725 = sphi %s708, %s708
      $region298: #{lookup_news_encoder.1} parent=294 // loop_header_branch
        %722 = sbr.rel (%p720) target = $region302
      $region299: #{lookup_news_encoder.1} parent=294 // loop_body
        %v726 = vld [vmem:[%s724] sm:%s717]
        %727 = vst [vmem:[%s725] sm:%s717] %v726
        %v728 = vld [vmem:[%s724 + $0x8] sm:%s717]
        %729 = vst [vmem:[%s725 + $0x8] sm:%s717] %v728
        %v730 = vld [vmem:[%s724 + $0x10] sm:%s717]
        %731 = vst [vmem:[%s725 + $0x10] sm:%s717] %v730
        %v732 = vld [vmem:[%s724 + $0x18] sm:%s717]
        %733 = vst [vmem:[%s725 + $0x18] sm:%s717] %v732
        %v734 = vld [vmem:[%s724 + $0x20] sm:%s717]
        %735 = vst [vmem:[%s725 + $0x20] sm:%s717] %v734
        %v736 = vld [vmem:[%s724 + $0x28] sm:%s717]
        %737 = vst [vmem:[%s725 + $0x28] sm:%s717] %v736
      $region300: #{lookup_news_encoder.1} parent=294 // loop_footer
        %s723 = sadd.s32 1, %s719
      $region301: #{lookup_news_encoder.1} parent=294 // loop_footer_branch
        %718 = sbr.rel target = $region297
      $region302: #{lookup_news_encoder.1} parent=294 // loop_exit
        _
    $region295: #{lookup_news_encoder.1} parent=1 // pred_fallthru
      _
    // Predicated region
    $region314: #{lookup_news_encoder.1} parent=1 // pred_check
      _
    $region315: #{lookup_news_encoder.1} parent=1 // pred_check_branch
      %771 = sbr.rel (0) target = $region317
    $region316: #{lookup_news_encoder.1} parent=1 // pred_region
      %772 = vsyncadd %s636, 96
    $region317: #{lookup_news_encoder.1} parent=1 // pred_fallthru
      _
    %s773 = sadd.s32 %s627, 10
    %s774 = sld [smem:[#allocation5 + %s773]]
    %s775 = sshrl.u32 %s774, 3
    %s776 = sand.u32 %s774, 7
    %s777 = smul.u32 %s775, 48
    %s778 = sadd.s32 %s776, %s777
    %s779 = scalar_lea.vmem %s1, %s778
    %s780 = scalar_lea.vmem [#allocation2], 50
    %p782 = scmp.lt.u32.totalorder 1, 8
    %p783 = pneg %p782
    // Predicated region
    $region318: #{lookup_news_encoder.1} parent=1 // pred_check
      _
    $region319: #{lookup_news_encoder.1} parent=1 // pred_check_branch
      %785 = sbr.rel (%p782) target = $region321
    $region320: #{lookup_news_encoder.1} parent=1 // pred_region
      %s810 = sand.u32 1, 7
      %p811 = scmp.eq.s32.totalorder %s810, 0
      %p812 = pneg %p811
      // Predicated region
      $region333: #{lookup_news_encoder.1} parent=320 // pred_check
        _
      $region334: #{lookup_news_encoder.1} parent=320 // pred_check_branch
        %814 = sbr.rel (%p811) target = $region336
      $region335: #{lookup_news_encoder.1} parent=320 // pred_region
        %s815 = sand.u32 1, 7
        %s816 = ssub.s32 1, %s815
        %s817 = scalar_lea.vmem %s779, %s816
        %s818 = ssub.s32 1, %s815
        %s819 = scalar_lea.vmem %s780, %s818 [#allocation2]
        %s820 = sshllo.u32 0, %s815
        loop: start=0, step=1, limit=1
        $region337: #{lookup_news_encoder.1} parent=335 // loop_pre_header
          _
        $region338: #{lookup_news_encoder.1} parent=335 // loop_header
          %s822 = sphi 0, %s826
          %p823 = scmp.ge.s32.totalorder %s822, 1
          %s827 = sphi %s817, %s817
          %s828 = sphi %s819, %s819
        $region339: #{lookup_news_encoder.1} parent=335 // loop_header_branch
          %825 = sbr.rel (%p823) target = $region343
        $region340: #{lookup_news_encoder.1} parent=335 // loop_body
          %v829 = vld [vmem:[%s827] sm:%s820]
          %830 = vst [vmem:[%s828] sm:%s820] %v829
          %v831 = vld [vmem:[%s827 + $0x8] sm:%s820]
          %832 = vst [vmem:[%s828 + $0x8] sm:%s820] %v831
          %v833 = vld [vmem:[%s827 + $0x10] sm:%s820]
          %834 = vst [vmem:[%s828 + $0x10] sm:%s820] %v833
          %v835 = vld [vmem:[%s827 + $0x18] sm:%s820]
          %836 = vst [vmem:[%s828 + $0x18] sm:%s820] %v835
          %v837 = vld [vmem:[%s827 + $0x20] sm:%s820]
          %838 = vst [vmem:[%s828 + $0x20] sm:%s820] %v837
          %v839 = vld [vmem:[%s827 + $0x28] sm:%s820]
          %840 = vst [vmem:[%s828 + $0x28] sm:%s820] %v839
        $region341: #{lookup_news_encoder.1} parent=335 // loop_footer
          %s826 = sadd.s32 1, %s822
        $region342: #{lookup_news_encoder.1} parent=335 // loop_footer_branch
          %821 = sbr.rel target = $region338
        $region343: #{lookup_news_encoder.1} parent=335 // loop_exit
          _
      $region336: #{lookup_news_encoder.1} parent=320 // pred_fallthru
        _
    $region321: #{lookup_news_encoder.1} parent=1 // pred_fallthru
      _
    // Predicated region
    $region322: #{lookup_news_encoder.1} parent=1 // pred_check
      %p786 = pneg %p782
    $region323: #{lookup_news_encoder.1} parent=1 // pred_check_branch
      %788 = sbr.rel (%p786) target = $region325
    $region324: #{lookup_news_encoder.1} parent=1 // pred_region
      %s789 = sshllo.u32 0, 1
      loop: start=0, step=1, limit=1
      $region326: #{lookup_news_encoder.1} parent=324 // loop_pre_header
        _
      $region327: #{lookup_news_encoder.1} parent=324 // loop_header
        %s791 = sphi 0, %s795
        %p792 = scmp.ge.s32.totalorder %s791, 1
        %s796 = sphi %s779, %s779
        %s797 = sphi %s780, %s780
      $region328: #{lookup_news_encoder.1} parent=324 // loop_header_branch
        %794 = sbr.rel (%p792) target = $region332
      $region329: #{lookup_news_encoder.1} parent=324 // loop_body
        %v798 = vld [vmem:[%s796] sm:%s789]
        %799 = vst [vmem:[%s797] sm:%s789] %v798
        %v800 = vld [vmem:[%s796 + $0x8] sm:%s789]
        %801 = vst [vmem:[%s797 + $0x8] sm:%s789] %v800
        %v802 = vld [vmem:[%s796 + $0x10] sm:%s789]
        %803 = vst [vmem:[%s797 + $0x10] sm:%s789] %v802
        %v804 = vld [vmem:[%s796 + $0x18] sm:%s789]
        %805 = vst [vmem:[%s797 + $0x18] sm:%s789] %v804
        %v806 = vld [vmem:[%s796 + $0x20] sm:%s789]
        %807 = vst [vmem:[%s797 + $0x20] sm:%s789] %v806
        %v808 = vld [vmem:[%s796 + $0x28] sm:%s789]
        %809 = vst [vmem:[%s797 + $0x28] sm:%s789] %v808
      $region330: #{lookup_news_encoder.1} parent=324 // loop_footer
        %s795 = sadd.s32 1, %s791
      $region331: #{lookup_news_encoder.1} parent=324 // loop_footer_branch
        %790 = sbr.rel target = $region327
      $region332: #{lookup_news_encoder.1} parent=324 // loop_exit
        _
    $region325: #{lookup_news_encoder.1} parent=1 // pred_fallthru
      _
    // Predicated region
    $region344: #{lookup_news_encoder.1} parent=1 // pred_check
      _
    $region345: #{lookup_news_encoder.1} parent=1 // pred_check_branch
      %843 = sbr.rel (0) target = $region347
    $region346: #{lookup_news_encoder.1} parent=1 // pred_region
      %844 = vsyncadd %s636, 96
    $region347: #{lookup_news_encoder.1} parent=1 // pred_fallthru
      _
    %s845 = sadd.s32 %s627, 11
    %s846 = sld [smem:[#allocation5 + %s845]]
    %s847 = sshrl.u32 %s846, 3
    %s848 = sand.u32 %s846, 7
    %s849 = smul.u32 %s847, 48
    %s850 = sadd.s32 %s848, %s849
    %s851 = scalar_lea.vmem %s1, %s850
    %s852 = scalar_lea.vmem [#allocation2], 51
    %p854 = scmp.lt.u32.totalorder 1, 8
    %p855 = pneg %p854
    // Predicated region
    $region348: #{lookup_news_encoder.1} parent=1 // pred_check
      _
    $region349: #{lookup_news_encoder.1} parent=1 // pred_check_branch
      %857 = sbr.rel (%p854) target = $region351
    $region350: #{lookup_news_encoder.1} parent=1 // pred_region
      %s882 = sand.u32 1, 7
      %p883 = scmp.eq.s32.totalorder %s882, 0
      %p884 = pneg %p883
      // Predicated region
      $region363: #{lookup_news_encoder.1} parent=350 // pred_check
        _
      $region364: #{lookup_news_encoder.1} parent=350 // pred_check_branch
        %886 = sbr.rel (%p883) target = $region366
      $region365: #{lookup_news_encoder.1} parent=350 // pred_region
        %s887 = sand.u32 1, 7
        %s888 = ssub.s32 1, %s887
        %s889 = scalar_lea.vmem %s851, %s888
        %s890 = ssub.s32 1, %s887
        %s891 = scalar_lea.vmem %s852, %s890 [#allocation2]
        %s892 = sshllo.u32 0, %s887
        loop: start=0, step=1, limit=1
        $region367: #{lookup_news_encoder.1} parent=365 // loop_pre_header
          _
        $region368: #{lookup_news_encoder.1} parent=365 // loop_header
          %s894 = sphi 0, %s898
          %p895 = scmp.ge.s32.totalorder %s894, 1
          %s899 = sphi %s889, %s889
          %s900 = sphi %s891, %s891
        $region369: #{lookup_news_encoder.1} parent=365 // loop_header_branch
          %897 = sbr.rel (%p895) target = $region373
        $region370: #{lookup_news_encoder.1} parent=365 // loop_body
          %v901 = vld [vmem:[%s899] sm:%s892]
          %902 = vst [vmem:[%s900] sm:%s892] %v901
          %v903 = vld [vmem:[%s899 + $0x8] sm:%s892]
          %904 = vst [vmem:[%s900 + $0x8] sm:%s892] %v903
          %v905 = vld [vmem:[%s899 + $0x10] sm:%s892]
          %906 = vst [vmem:[%s900 + $0x10] sm:%s892] %v905
          %v907 = vld [vmem:[%s899 + $0x18] sm:%s892]
          %908 = vst [vmem:[%s900 + $0x18] sm:%s892] %v907
          %v909 = vld [vmem:[%s899 + $0x20] sm:%s892]
          %910 = vst [vmem:[%s900 + $0x20] sm:%s892] %v909
          %v911 = vld [vmem:[%s899 + $0x28] sm:%s892]
          %912 = vst [vmem:[%s900 + $0x28] sm:%s892] %v911
        $region371: #{lookup_news_encoder.1} parent=365 // loop_footer
          %s898 = sadd.s32 1, %s894
        $region372: #{lookup_news_encoder.1} parent=365 // loop_footer_branch
          %893 = sbr.rel target = $region368
        $region373: #{lookup_news_encoder.1} parent=365 // loop_exit
          _
      $region366: #{lookup_news_encoder.1} parent=350 // pred_fallthru
        _
    $region351: #{lookup_news_encoder.1} parent=1 // pred_fallthru
      _
    // Predicated region
    $region352: #{lookup_news_encoder.1} parent=1 // pred_check
      %p858 = pneg %p854
    $region353: #{lookup_news_encoder.1} parent=1 // pred_check_branch
      %860 = sbr.rel (%p858) target = $region355
    $region354: #{lookup_news_encoder.1} parent=1 // pred_region
      %s861 = sshllo.u32 0, 1
      loop: start=0, step=1, limit=1
      $region356: #{lookup_news_encoder.1} parent=354 // loop_pre_header
        _
      $region357: #{lookup_news_encoder.1} parent=354 // loop_header
        %s863 = sphi 0, %s867
        %p864 = scmp.ge.s32.totalorder %s863, 1
        %s868 = sphi %s851, %s851
        %s869 = sphi %s852, %s852
      $region358: #{lookup_news_encoder.1} parent=354 // loop_header_branch
        %866 = sbr.rel (%p864) target = $region362
      $region359: #{lookup_news_encoder.1} parent=354 // loop_body
        %v870 = vld [vmem:[%s868] sm:%s861]
        %871 = vst [vmem:[%s869] sm:%s861] %v870
        %v872 = vld [vmem:[%s868 + $0x8] sm:%s861]
        %873 = vst [vmem:[%s869 + $0x8] sm:%s861] %v872
        %v874 = vld [vmem:[%s868 + $0x10] sm:%s861]
        %875 = vst [vmem:[%s869 + $0x10] sm:%s861] %v874
        %v876 = vld [vmem:[%s868 + $0x18] sm:%s861]
        %877 = vst [vmem:[%s869 + $0x18] sm:%s861] %v876
        %v878 = vld [vmem:[%s868 + $0x20] sm:%s861]
        %879 = vst [vmem:[%s869 + $0x20] sm:%s861] %v878
        %v880 = vld [vmem:[%s868 + $0x28] sm:%s861]
        %881 = vst [vmem:[%s869 + $0x28] sm:%s861] %v880
      $region360: #{lookup_news_encoder.1} parent=354 // loop_footer
        %s867 = sadd.s32 1, %s863
      $region361: #{lookup_news_encoder.1} parent=354 // loop_footer_branch
        %862 = sbr.rel target = $region357
      $region362: #{lookup_news_encoder.1} parent=354 // loop_exit
        _
    $region355: #{lookup_news_encoder.1} parent=1 // pred_fallthru
      _
    // Predicated region
    $region374: #{lookup_news_encoder.1} parent=1 // pred_check
      _
    $region375: #{lookup_news_encoder.1} parent=1 // pred_check_branch
      %915 = sbr.rel (0) target = $region377
    $region376: #{lookup_news_encoder.1} parent=1 // pred_region
      %916 = vsyncadd %s636, 96
    $region377: #{lookup_news_encoder.1} parent=1 // pred_fallthru
      _
    %s917 = sadd.s32 %s627, 12
    %s918 = sld [smem:[#allocation5 + %s917]]
    %s919 = sshrl.u32 %s918, 3
    %s920 = sand.u32 %s918, 7
    %s921 = smul.u32 %s919, 48
    %s922 = sadd.s32 %s920, %s921
    %s923 = scalar_lea.vmem %s1, %s922
    %s924 = scalar_lea.vmem [#allocation2], 52
    %p926 = scmp.lt.u32.totalorder 1, 8
    %p927 = pneg %p926
    // Predicated region
    $region378: #{lookup_news_encoder.1} parent=1 // pred_check
      _
    $region379: #{lookup_news_encoder.1} parent=1 // pred_check_branch
      %929 = sbr.rel (%p926) target = $region381
    $region380: #{lookup_news_encoder.1} parent=1 // pred_region
      %s954 = sand.u32 1, 7
      %p955 = scmp.eq.s32.totalorder %s954, 0
      %p956 = pneg %p955
      // Predicated region
      $region393: #{lookup_news_encoder.1} parent=380 // pred_check
        _
      $region394: #{lookup_news_encoder.1} parent=380 // pred_check_branch
        %958 = sbr.rel (%p955) target = $region396
      $region395: #{lookup_news_encoder.1} parent=380 // pred_region
        %s959 = sand.u32 1, 7
        %s960 = ssub.s32 1, %s959
        %s961 = scalar_lea.vmem %s923, %s960
        %s962 = ssub.s32 1, %s959
        %s963 = scalar_lea.vmem %s924, %s962 [#allocation2]
        %s964 = sshllo.u32 0, %s959
        loop: start=0, step=1, limit=1
        $region397: #{lookup_news_encoder.1} parent=395 // loop_pre_header
          _
        $region398: #{lookup_news_encoder.1} parent=395 // loop_header
          %s966 = sphi 0, %s970
          %p967 = scmp.ge.s32.totalorder %s966, 1
          %s971 = sphi %s961, %s961
          %s972 = sphi %s963, %s963
        $region399: #{lookup_news_encoder.1} parent=395 // loop_header_branch
          %969 = sbr.rel (%p967) target = $region403
        $region400: #{lookup_news_encoder.1} parent=395 // loop_body
          %v973 = vld [vmem:[%s971] sm:%s964]
          %974 = vst [vmem:[%s972] sm:%s964] %v973
          %v975 = vld [vmem:[%s971 + $0x8] sm:%s964]
          %976 = vst [vmem:[%s972 + $0x8] sm:%s964] %v975
          %v977 = vld [vmem:[%s971 + $0x10] sm:%s964]
          %978 = vst [vmem:[%s972 + $0x10] sm:%s964] %v977
          %v979 = vld [vmem:[%s971 + $0x18] sm:%s964]
          %980 = vst [vmem:[%s972 + $0x18] sm:%s964] %v979
          %v981 = vld [vmem:[%s971 + $0x20] sm:%s964]
          %982 = vst [vmem:[%s972 + $0x20] sm:%s964] %v981
          %v983 = vld [vmem:[%s971 + $0x28] sm:%s964]
          %984 = vst [vmem:[%s972 + $0x28] sm:%s964] %v983
        $region401: #{lookup_news_encoder.1} parent=395 // loop_footer
          %s970 = sadd.s32 1, %s966
        $region402: #{lookup_news_encoder.1} parent=395 // loop_footer_branch
          %965 = sbr.rel target = $region398
        $region403: #{lookup_news_encoder.1} parent=395 // loop_exit
          _
      $region396: #{lookup_news_encoder.1} parent=380 // pred_fallthru
        _
    $region381: #{lookup_news_encoder.1} parent=1 // pred_fallthru
      _
    // Predicated region
    $region382: #{lookup_news_encoder.1} parent=1 // pred_check
      %p930 = pneg %p926
    $region383: #{lookup_news_encoder.1} parent=1 // pred_check_branch
      %932 = sbr.rel (%p930) target = $region385
    $region384: #{lookup_news_encoder.1} parent=1 // pred_region
      %s933 = sshllo.u32 0, 1
      loop: start=0, step=1, limit=1
      $region386: #{lookup_news_encoder.1} parent=384 // loop_pre_header
        _
      $region387: #{lookup_news_encoder.1} parent=384 // loop_header
        %s935 = sphi 0, %s939
        %p936 = scmp.ge.s32.totalorder %s935, 1
        %s940 = sphi %s923, %s923
        %s941 = sphi %s924, %s924
      $region388: #{lookup_news_encoder.1} parent=384 // loop_header_branch
        %938 = sbr.rel (%p936) target = $region392
      $region389: #{lookup_news_encoder.1} parent=384 // loop_body
        %v942 = vld [vmem:[%s940] sm:%s933]
        %943 = vst [vmem:[%s941] sm:%s933] %v942
        %v944 = vld [vmem:[%s940 + $0x8] sm:%s933]
        %945 = vst [vmem:[%s941 + $0x8] sm:%s933] %v944
        %v946 = vld [vmem:[%s940 + $0x10] sm:%s933]
        %947 = vst [vmem:[%s941 + $0x10] sm:%s933] %v946
        %v948 = vld [vmem:[%s940 + $0x18] sm:%s933]
        %949 = vst [vmem:[%s941 + $0x18] sm:%s933] %v948
        %v950 = vld [vmem:[%s940 + $0x20] sm:%s933]
        %951 = vst [vmem:[%s941 + $0x20] sm:%s933] %v950
        %v952 = vld [vmem:[%s940 + $0x28] sm:%s933]
        %953 = vst [vmem:[%s941 + $0x28] sm:%s933] %v952
      $region390: #{lookup_news_encoder.1} parent=384 // loop_footer
        %s939 = sadd.s32 1, %s935
      $region391: #{lookup_news_encoder.1} parent=384 // loop_footer_branch
        %934 = sbr.rel target = $region387
      $region392: #{lookup_news_encoder.1} parent=384 // loop_exit
        _
    $region385: #{lookup_news_encoder.1} parent=1 // pred_fallthru
      _
    // Predicated region
    $region404: #{lookup_news_encoder.1} parent=1 // pred_check
      _
    $region405: #{lookup_news_encoder.1} parent=1 // pred_check_branch
      %987 = sbr.rel (0) target = $region407
    $region406: #{lookup_news_encoder.1} parent=1 // pred_region
      %988 = vsyncadd %s636, 96
    $region407: #{lookup_news_encoder.1} parent=1 // pred_fallthru
      _
    %s989 = sadd.s32 %s627, 13
    %s990 = sld [smem:[#allocation5 + %s989]]
    %s991 = sshrl.u32 %s990, 3
    %s992 = sand.u32 %s990, 7
    %s993 = smul.u32 %s991, 48
    %s994 = sadd.s32 %s992, %s993
    %s995 = scalar_lea.vmem %s1, %s994
    %s996 = scalar_lea.vmem [#allocation2], 53
    %p998 = scmp.lt.u32.totalorder 1, 8
    %p999 = pneg %p998
    // Predicated region
    $region408: #{lookup_news_encoder.1} parent=1 // pred_check
      _
    $region409: #{lookup_news_encoder.1} parent=1 // pred_check_branch
      %1001 = sbr.rel (%p998) target = $region411
    $region410: #{lookup_news_encoder.1} parent=1 // pred_region
      %s1026 = sand.u32 1, 7
      %p1027 = scmp.eq.s32.totalorder %s1026, 0
      %p1028 = pneg %p1027
      // Predicated region
      $region423: #{lookup_news_encoder.1} parent=410 // pred_check
        _
      $region424: #{lookup_news_encoder.1} parent=410 // pred_check_branch
        %1030 = sbr.rel (%p1027) target = $region426
      $region425: #{lookup_news_encoder.1} parent=410 // pred_region
        %s1031 = sand.u32 1, 7
        %s1032 = ssub.s32 1, %s1031
        %s1033 = scalar_lea.vmem %s995, %s1032
        %s1034 = ssub.s32 1, %s1031
        %s1035 = scalar_lea.vmem %s996, %s1034 [#allocation2]
        %s1036 = sshllo.u32 0, %s1031
        loop: start=0, step=1, limit=1
        $region427: #{lookup_news_encoder.1} parent=425 // loop_pre_header
          _
        $region428: #{lookup_news_encoder.1} parent=425 // loop_header
          %s1038 = sphi 0, %s1042
          %p1039 = scmp.ge.s32.totalorder %s1038, 1
          %s1043 = sphi %s1033, %s1033
          %s1044 = sphi %s1035, %s1035
        $region429: #{lookup_news_encoder.1} parent=425 // loop_header_branch
          %1041 = sbr.rel (%p1039) target = $region433
        $region430: #{lookup_news_encoder.1} parent=425 // loop_body
          %v1045 = vld [vmem:[%s1043] sm:%s1036]
          %1046 = vst [vmem:[%s1044] sm:%s1036] %v1045
          %v1047 = vld [vmem:[%s1043 + $0x8] sm:%s1036]
          %1048 = vst [vmem:[%s1044 + $0x8] sm:%s1036] %v1047
          %v1049 = vld [vmem:[%s1043 + $0x10] sm:%s1036]
          %1050 = vst [vmem:[%s1044 + $0x10] sm:%s1036] %v1049
          %v1051 = vld [vmem:[%s1043 + $0x18] sm:%s1036]
          %1052 = vst [vmem:[%s1044 + $0x18] sm:%s1036] %v1051
          %v1053 = vld [vmem:[%s1043 + $0x20] sm:%s1036]
          %1054 = vst [vmem:[%s1044 + $0x20] sm:%s1036] %v1053
          %v1055 = vld [vmem:[%s1043 + $0x28] sm:%s1036]
          %1056 = vst [vmem:[%s1044 + $0x28] sm:%s1036] %v1055
        $region431: #{lookup_news_encoder.1} parent=425 // loop_footer
          %s1042 = sadd.s32 1, %s1038
        $region432: #{lookup_news_encoder.1} parent=425 // loop_footer_branch
          %1037 = sbr.rel target = $region428
        $region433: #{lookup_news_encoder.1} parent=425 // loop_exit
          _
      $region426: #{lookup_news_encoder.1} parent=410 // pred_fallthru
        _
    $region411: #{lookup_news_encoder.1} parent=1 // pred_fallthru
      _
    // Predicated region
    $region412: #{lookup_news_encoder.1} parent=1 // pred_check
      %p1002 = pneg %p998
    $region413: #{lookup_news_encoder.1} parent=1 // pred_check_branch
      %1004 = sbr.rel (%p1002) target = $region415
    $region414: #{lookup_news_encoder.1} parent=1 // pred_region
      %s1005 = sshllo.u32 0, 1
      loop: start=0, step=1, limit=1
      $region416: #{lookup_news_encoder.1} parent=414 // loop_pre_header
        _
      $region417: #{lookup_news_encoder.1} parent=414 // loop_header
        %s1007 = sphi 0, %s1011
        %p1008 = scmp.ge.s32.totalorder %s1007, 1
        %s1012 = sphi %s995, %s995
        %s1013 = sphi %s996, %s996
      $region418: #{lookup_news_encoder.1} parent=414 // loop_header_branch
        %1010 = sbr.rel (%p1008) target = $region422
      $region419: #{lookup_news_encoder.1} parent=414 // loop_body
        %v1014 = vld [vmem:[%s1012] sm:%s1005]
        %1015 = vst [vmem:[%s1013] sm:%s1005] %v1014
        %v1016 = vld [vmem:[%s1012 + $0x8] sm:%s1005]
        %1017 = vst [vmem:[%s1013 + $0x8] sm:%s1005] %v1016
        %v1018 = vld [vmem:[%s1012 + $0x10] sm:%s1005]
        %1019 = vst [vmem:[%s1013 + $0x10] sm:%s1005] %v1018
        %v1020 = vld [vmem:[%s1012 + $0x18] sm:%s1005]
        %1021 = vst [vmem:[%s1013 + $0x18] sm:%s1005] %v1020
        %v1022 = vld [vmem:[%s1012 + $0x20] sm:%s1005]
        %1023 = vst [vmem:[%s1013 + $0x20] sm:%s1005] %v1022
        %v1024 = vld [vmem:[%s1012 + $0x28] sm:%s1005]
        %1025 = vst [vmem:[%s1013 + $0x28] sm:%s1005] %v1024
      $region420: #{lookup_news_encoder.1} parent=414 // loop_footer
        %s1011 = sadd.s32 1, %s1007
      $region421: #{lookup_news_encoder.1} parent=414 // loop_footer_branch
        %1006 = sbr.rel target = $region417
      $region422: #{lookup_news_encoder.1} parent=414 // loop_exit
        _
    $region415: #{lookup_news_encoder.1} parent=1 // pred_fallthru
      _
    // Predicated region
    $region434: #{lookup_news_encoder.1} parent=1 // pred_check
      _
    $region435: #{lookup_news_encoder.1} parent=1 // pred_check_branch
      %1059 = sbr.rel (0) target = $region437
    $region436: #{lookup_news_encoder.1} parent=1 // pred_region
      %1060 = vsyncadd %s636, 96
    $region437: #{lookup_news_encoder.1} parent=1 // pred_fallthru
      _
    %s1061 = sadd.s32 %s627, 14
    %s1062 = sld [smem:[#allocation5 + %s1061]]
    %s1063 = sshrl.u32 %s1062, 3
    %s1064 = sand.u32 %s1062, 7
    %s1065 = smul.u32 %s1063, 48
    %s1066 = sadd.s32 %s1064, %s1065
    %s1067 = scalar_lea.vmem %s1, %s1066
    %s1068 = scalar_lea.vmem [#allocation2], 54
    %p1070 = scmp.lt.u32.totalorder 1, 8
    %p1071 = pneg %p1070
    // Predicated region
    $region438: #{lookup_news_encoder.1} parent=1 // pred_check
      _
    $region439: #{lookup_news_encoder.1} parent=1 // pred_check_branch
      %1073 = sbr.rel (%p1070) target = $region441
    $region440: #{lookup_news_encoder.1} parent=1 // pred_region
      %s1098 = sand.u32 1, 7
      %p1099 = scmp.eq.s32.totalorder %s1098, 0
      %p1100 = pneg %p1099
      // Predicated region
      $region453: #{lookup_news_encoder.1} parent=440 // pred_check
        _
      $region454: #{lookup_news_encoder.1} parent=440 // pred_check_branch
        %1102 = sbr.rel (%p1099) target = $region456
      $region455: #{lookup_news_encoder.1} parent=440 // pred_region
        %s1103 = sand.u32 1, 7
        %s1104 = ssub.s32 1, %s1103
        %s1105 = scalar_lea.vmem %s1067, %s1104
        %s1106 = ssub.s32 1, %s1103
        %s1107 = scalar_lea.vmem %s1068, %s1106 [#allocation2]
        %s1108 = sshllo.u32 0, %s1103
        loop: start=0, step=1, limit=1
        $region457: #{lookup_news_encoder.1} parent=455 // loop_pre_header
          _
        $region458: #{lookup_news_encoder.1} parent=455 // loop_header
          %s1110 = sphi 0, %s1114
          %p1111 = scmp.ge.s32.totalorder %s1110, 1
          %s1115 = sphi %s1105, %s1105
          %s1116 = sphi %s1107, %s1107
        $region459: #{lookup_news_encoder.1} parent=455 // loop_header_branch
          %1113 = sbr.rel (%p1111) target = $region463
        $region460: #{lookup_news_encoder.1} parent=455 // loop_body
          %v1117 = vld [vmem:[%s1115] sm:%s1108]
          %1118 = vst [vmem:[%s1116] sm:%s1108] %v1117
          %v1119 = vld [vmem:[%s1115 + $0x8] sm:%s1108]
          %1120 = vst [vmem:[%s1116 + $0x8] sm:%s1108] %v1119
          %v1121 = vld [vmem:[%s1115 + $0x10] sm:%s1108]
          %1122 = vst [vmem:[%s1116 + $0x10] sm:%s1108] %v1121
          %v1123 = vld [vmem:[%s1115 + $0x18] sm:%s1108]
          %1124 = vst [vmem:[%s1116 + $0x18] sm:%s1108] %v1123
          %v1125 = vld [vmem:[%s1115 + $0x20] sm:%s1108]
          %1126 = vst [vmem:[%s1116 + $0x20] sm:%s1108] %v1125
          %v1127 = vld [vmem:[%s1115 + $0x28] sm:%s1108]
          %1128 = vst [vmem:[%s1116 + $0x28] sm:%s1108] %v1127
        $region461: #{lookup_news_encoder.1} parent=455 // loop_footer
          %s1114 = sadd.s32 1, %s1110
        $region462: #{lookup_news_encoder.1} parent=455 // loop_footer_branch
          %1109 = sbr.rel target = $region458
        $region463: #{lookup_news_encoder.1} parent=455 // loop_exit
          _
      $region456: #{lookup_news_encoder.1} parent=440 // pred_fallthru
        _
    $region441: #{lookup_news_encoder.1} parent=1 // pred_fallthru
      _
    // Predicated region
    $region442: #{lookup_news_encoder.1} parent=1 // pred_check
      %p1074 = pneg %p1070
    $region443: #{lookup_news_encoder.1} parent=1 // pred_check_branch
      %1076 = sbr.rel (%p1074) target = $region445
    $region444: #{lookup_news_encoder.1} parent=1 // pred_region
      %s1077 = sshllo.u32 0, 1
      loop: start=0, step=1, limit=1
      $region446: #{lookup_news_encoder.1} parent=444 // loop_pre_header
        _
      $region447: #{lookup_news_encoder.1} parent=444 // loop_header
        %s1079 = sphi 0, %s1083
        %p1080 = scmp.ge.s32.totalorder %s1079, 1
        %s1084 = sphi %s1067, %s1067
        %s1085 = sphi %s1068, %s1068
      $region448: #{lookup_news_encoder.1} parent=444 // loop_header_branch
        %1082 = sbr.rel (%p1080) target = $region452
      $region449: #{lookup_news_encoder.1} parent=444 // loop_body
        %v1086 = vld [vmem:[%s1084] sm:%s1077]
        %1087 = vst [vmem:[%s1085] sm:%s1077] %v1086
        %v1088 = vld [vmem:[%s1084 + $0x8] sm:%s1077]
        %1089 = vst [vmem:[%s1085 + $0x8] sm:%s1077] %v1088
        %v1090 = vld [vmem:[%s1084 + $0x10] sm:%s1077]
        %1091 = vst [vmem:[%s1085 + $0x10] sm:%s1077] %v1090
        %v1092 = vld [vmem:[%s1084 + $0x18] sm:%s1077]
        %1093 = vst [vmem:[%s1085 + $0x18] sm:%s1077] %v1092
        %v1094 = vld [vmem:[%s1084 + $0x20] sm:%s1077]
        %1095 = vst [vmem:[%s1085 + $0x20] sm:%s1077] %v1094
        %v1096 = vld [vmem:[%s1084 + $0x28] sm:%s1077]
        %1097 = vst [vmem:[%s1085 + $0x28] sm:%s1077] %v1096
      $region450: #{lookup_news_encoder.1} parent=444 // loop_footer
        %s1083 = sadd.s32 1, %s1079
      $region451: #{lookup_news_encoder.1} parent=444 // loop_footer_branch
        %1078 = sbr.rel target = $region447
      $region452: #{lookup_news_encoder.1} parent=444 // loop_exit
        _
    $region445: #{lookup_news_encoder.1} parent=1 // pred_fallthru
      _
    // Predicated region
    $region464: #{lookup_news_encoder.1} parent=1 // pred_check
      _
    $region465: #{lookup_news_encoder.1} parent=1 // pred_check_branch
      %1131 = sbr.rel (0) target = $region467
    $region466: #{lookup_news_encoder.1} parent=1 // pred_region
      %1132 = vsyncadd %s636, 96
    $region467: #{lookup_news_encoder.1} parent=1 // pred_fallthru
      _
    %s1133 = sadd.s32 %s627, 15
    %s1134 = sld [smem:[#allocation5 + %s1133]]
    %s1135 = sshrl.u32 %s1134, 3
    %s1136 = sand.u32 %s1134, 7
    %s1137 = smul.u32 %s1135, 48
    %s1138 = sadd.s32 %s1136, %s1137
    %s1139 = scalar_lea.vmem %s1, %s1138
    %s1140 = scalar_lea.vmem [#allocation2], 55
    %p1142 = scmp.lt.u32.totalorder 1, 8
    %p1143 = pneg %p1142
    // Predicated region
    $region468: #{lookup_news_encoder.1} parent=1 // pred_check
      _
    $region469: #{lookup_news_encoder.1} parent=1 // pred_check_branch
      %1145 = sbr.rel (%p1142) target = $region471
    $region470: #{lookup_news_encoder.1} parent=1 // pred_region
      %s1170 = sand.u32 1, 7
      %p1171 = scmp.eq.s32.totalorder %s1170, 0
      %p1172 = pneg %p1171
      // Predicated region
      $region483: #{lookup_news_encoder.1} parent=470 // pred_check
        _
      $region484: #{lookup_news_encoder.1} parent=470 // pred_check_branch
        %1174 = sbr.rel (%p1171) target = $region486
      $region485: #{lookup_news_encoder.1} parent=470 // pred_region
        %s1175 = sand.u32 1, 7
        %s1176 = ssub.s32 1, %s1175
        %s1177 = scalar_lea.vmem %s1139, %s1176
        %s1178 = ssub.s32 1, %s1175
        %s1179 = scalar_lea.vmem %s1140, %s1178 [#allocation2]
        %s1180 = sshllo.u32 0, %s1175
        loop: start=0, step=1, limit=1
        $region487: #{lookup_news_encoder.1} parent=485 // loop_pre_header
          _
        $region488: #{lookup_news_encoder.1} parent=485 // loop_header
          %s1182 = sphi 0, %s1186
          %p1183 = scmp.ge.s32.totalorder %s1182, 1
          %s1187 = sphi %s1177, %s1177
          %s1188 = sphi %s1179, %s1179
        $region489: #{lookup_news_encoder.1} parent=485 // loop_header_branch
          %1185 = sbr.rel (%p1183) target = $region493
        $region490: #{lookup_news_encoder.1} parent=485 // loop_body
          %v1189 = vld [vmem:[%s1187] sm:%s1180]
          %1190 = vst [vmem:[%s1188] sm:%s1180] %v1189
          %v1191 = vld [vmem:[%s1187 + $0x8] sm:%s1180]
          %1192 = vst [vmem:[%s1188 + $0x8] sm:%s1180] %v1191
          %v1193 = vld [vmem:[%s1187 + $0x10] sm:%s1180]
          %1194 = vst [vmem:[%s1188 + $0x10] sm:%s1180] %v1193
          %v1195 = vld [vmem:[%s1187 + $0x18] sm:%s1180]
          %1196 = vst [vmem:[%s1188 + $0x18] sm:%s1180] %v1195
          %v1197 = vld [vmem:[%s1187 + $0x20] sm:%s1180]
          %1198 = vst [vmem:[%s1188 + $0x20] sm:%s1180] %v1197
          %v1199 = vld [vmem:[%s1187 + $0x28] sm:%s1180]
          %1200 = vst [vmem:[%s1188 + $0x28] sm:%s1180] %v1199
        $region491: #{lookup_news_encoder.1} parent=485 // loop_footer
          %s1186 = sadd.s32 1, %s1182
        $region492: #{lookup_news_encoder.1} parent=485 // loop_footer_branch
          %1181 = sbr.rel target = $region488
        $region493: #{lookup_news_encoder.1} parent=485 // loop_exit
          _
      $region486: #{lookup_news_encoder.1} parent=470 // pred_fallthru
        _
    $region471: #{lookup_news_encoder.1} parent=1 // pred_fallthru
      _
    // Predicated region
    $region472: #{lookup_news_encoder.1} parent=1 // pred_check
      %p1146 = pneg %p1142
    $region473: #{lookup_news_encoder.1} parent=1 // pred_check_branch
      %1148 = sbr.rel (%p1146) target = $region475
    $region474: #{lookup_news_encoder.1} parent=1 // pred_region
      %s1149 = sshllo.u32 0, 1
      loop: start=0, step=1, limit=1
      $region476: #{lookup_news_encoder.1} parent=474 // loop_pre_header
        _
      $region477: #{lookup_news_encoder.1} parent=474 // loop_header
        %s1151 = sphi 0, %s1155
        %p1152 = scmp.ge.s32.totalorder %s1151, 1
        %s1156 = sphi %s1139, %s1139
        %s1157 = sphi %s1140, %s1140
      $region478: #{lookup_news_encoder.1} parent=474 // loop_header_branch
        %1154 = sbr.rel (%p1152) target = $region482
      $region479: #{lookup_news_encoder.1} parent=474 // loop_body
        %v1158 = vld [vmem:[%s1156] sm:%s1149]
        %1159 = vst [vmem:[%s1157] sm:%s1149] %v1158
        %v1160 = vld [vmem:[%s1156 + $0x8] sm:%s1149]
        %1161 = vst [vmem:[%s1157 + $0x8] sm:%s1149] %v1160
        %v1162 = vld [vmem:[%s1156 + $0x10] sm:%s1149]
        %1163 = vst [vmem:[%s1157 + $0x10] sm:%s1149] %v1162
        %v1164 = vld [vmem:[%s1156 + $0x18] sm:%s1149]
        %1165 = vst [vmem:[%s1157 + $0x18] sm:%s1149] %v1164
        %v1166 = vld [vmem:[%s1156 + $0x20] sm:%s1149]
        %1167 = vst [vmem:[%s1157 + $0x20] sm:%s1149] %v1166
        %v1168 = vld [vmem:[%s1156 + $0x28] sm:%s1149]
        %1169 = vst [vmem:[%s1157 + $0x28] sm:%s1149] %v1168
      $region480: #{lookup_news_encoder.1} parent=474 // loop_footer
        %s1155 = sadd.s32 1, %s1151
      $region481: #{lookup_news_encoder.1} parent=474 // loop_footer_branch
        %1150 = sbr.rel target = $region477
      $region482: #{lookup_news_encoder.1} parent=474 // loop_exit
        _
    $region475: #{lookup_news_encoder.1} parent=1 // pred_fallthru
      _
    // Predicated region
    $region494: #{lookup_news_encoder.1} parent=1 // pred_check
      _
    $region495: #{lookup_news_encoder.1} parent=1 // pred_check_branch
      %1203 = sbr.rel (0) target = $region497
    $region496: #{lookup_news_encoder.1} parent=1 // pred_region
      %1204 = vsyncadd %s636, 96
    $region497: #{lookup_news_encoder.1} parent=1 // pred_fallthru
      _
    %s1205 = smul.u32 8, 1
    %s1206 = smul.u32 %s1205, 6
    %s1207 = sshll.u32 %s1206, 4
    %1208 = dma.done [#allocation3], %s1207
    %v1209 = vld [vmem:[#allocation2] sm:$0xff]
    %v1210 = vld [vmem:[#allocation2 + $0x8] sm:$0xff]
    %v1211 = vld [vmem:[#allocation2 + $0x10] sm:$0xff]
    %v1212 = vld [vmem:[#allocation2 + $0x18] sm:$0xff]
    %v1213 = vld [vmem:[#allocation2 + $0x20] sm:$0xff]
    %v1214 = vld [vmem:[#allocation2 + $0x28] sm:$0xff]
    %v1215 = vld [vmem:[#allocation6] sm:$0xff]
    %v1216 = vld [vmem:[#allocation6 + $0x8] sm:$0xff]
    %v1217 = vld [vmem:[#allocation6 + $0x10] sm:$0xff]
    %v1218 = vld [vmem:[#allocation6 + $0x18] sm:$0xff]
    %v1219 = vld [vmem:[#allocation6 + $0x20] sm:$0xff]
    %v1220 = vld [vmem:[#allocation6 + $0x28] sm:$0xff]
    %v1221 = vld [vmem:[#allocation6 + $0x30] sm:$0xff]
    %v1222 = vld [vmem:[#allocation6 + $0x38] sm:$0xff]
    %v1223 = vld [vmem:[#allocation6 + $0x40] sm:$0xff]
    %v1224 = vld [vmem:[#allocation6 + $0x48] sm:$0xff]
    %v1225 = vld [vmem:[#allocation6 + $0x50] sm:$0xff]
    %v1226 = vld [vmem:[#allocation6 + $0x58] sm:$0xff]
    %v1227 = vld [vmem:[#allocation6 + $0x60] sm:$0xff]
    %v1228 = vld [vmem:[#allocation6 + $0x68] sm:$0xff]
    %v1229 = vld [vmem:[#allocation6 + $0x70] sm:$0xff]
    %v1230 = vld [vmem:[#allocation6 + $0x78] sm:$0xff]
    %v1231 = vld [vmem:[#allocation6 + $0x80] sm:$0xff]
    %v1232 = vld [vmem:[#allocation6 + $0x88] sm:$0xff]
    %v1233 = vld [vmem:[#allocation6 + $0x90] sm:$0xff]
    %v1234 = vld [vmem:[#allocation6 + $0x98] sm:$0xff]
    %v1235 = vld [vmem:[#allocation6 + $0xa0] sm:$0xff]
    %v1236 = vld [vmem:[#allocation6 + $0xa8] sm:$0xff]
    %v1237 = vld [vmem:[#allocation6 + $0xb0] sm:$0xff]
    %v1238 = vld [vmem:[#allocation6 + $0xb8] sm:$0xff]
    %v1239 = vld [vmem:[#allocation6 + $0xc0] sm:$0xff]
    %v1240 = vld [vmem:[#allocation6 + $0xc8] sm:$0xff]
    %v1241 = vld [vmem:[#allocation6 + $0xd0] sm:$0xff]
    %v1242 = vld [vmem:[#allocation6 + $0xd8] sm:$0xff]
    %v1243 = vld [vmem:[#allocation6 + $0xe0] sm:$0xff]
    %v1244 = vld [vmem:[#allocation6 + $0xe8] sm:$0xff]
    %v1245 = vld [vmem:[#allocation6 + $0xf0] sm:$0xff]
    %v1246 = vld [vmem:[#allocation6 + $0xf8] sm:$0xff]
    %v1247 = vld [vmem:[#allocation6 + $0x100] sm:$0xff]
    %v1248 = vld [vmem:[#allocation6 + $0x108] sm:$0xff]
    %v1249 = vld [vmem:[#allocation6 + $0x110] sm:$0xff]
    %v1250 = vld [vmem:[#allocation6 + $0x118] sm:$0xff]
    %v1251 = vld [vmem:[#allocation6 + $0x120] sm:$0xff]
    %v1252 = vld [vmem:[#allocation6 + $0x128] sm:$0xff]
    %v1253 = vld [vmem:[#allocation6 + $0x130] sm:$0xff]
    %v1254 = vld [vmem:[#allocation6 + $0x138] sm:$0xff]
    %v1255 = vld [vmem:[#allocation6 + $0x140] sm:$0xff]
    %v1256 = vld [vmem:[#allocation6 + $0x148] sm:$0xff]
    %v1257 = vld [vmem:[#allocation6 + $0x150] sm:$0xff]
    %v1258 = vld [vmem:[#allocation6 + $0x158] sm:$0xff]
    %v1259 = vld [vmem:[#allocation6 + $0x160] sm:$0xff]
    %v1260 = vld [vmem:[#allocation6 + $0x168] sm:$0xff]
    %v1261 = vld [vmem:[#allocation6 + $0x170] sm:$0xff]
    %v1262 = vld [vmem:[#allocation6 + $0x178] sm:$0xff]
    %v1263 = vld [vmem:[#allocation6 + $0x180] sm:$0xff]
    %v1264 = vld [vmem:[#allocation6 + $0x188] sm:$0xff]
    %v1265 = vld [vmem:[#allocation6 + $0x190] sm:$0xff]
    %v1266 = vld [vmem:[#allocation6 + $0x198] sm:$0xff]
    %v1267 = vld [vmem:[#allocation6 + $0x1a0] sm:$0xff]
    %v1268 = vld [vmem:[#allocation6 + $0x1a8] sm:$0xff]
    %v1269 = vld [vmem:[#allocation6 + $0x1b0] sm:$0xff]
    %v1270 = vld [vmem:[#allocation6 + $0x1b8] sm:$0xff]
    %v1271 = vld [vmem:[#allocation6 + $0x1c0] sm:$0xff]
    %v1272 = vld [vmem:[#allocation6 + $0x1c8] sm:$0xff]
    %v1273 = vld [vmem:[#allocation6 + $0x1d0] sm:$0xff]
    %v1274 = vld [vmem:[#allocation6 + $0x1d8] sm:$0xff]
    %v1275 = vld [vmem:[#allocation6 + $0x1e0] sm:$0xff]
    %v1276 = vld [vmem:[#allocation6 + $0x1e8] sm:$0xff]
    %v1277 = vld [vmem:[#allocation6 + $0x1f0] sm:$0xff]
    %v1278 = vld [vmem:[#allocation6 + $0x1f8] sm:$0xff]
    %v1279 = vld [vmem:[#allocation6 + $0x200] sm:$0xff]
    %v1280 = vld [vmem:[#allocation6 + $0x208] sm:$0xff]
    %v1281 = vld [vmem:[#allocation6 + $0x210] sm:$0xff]
    %v1282 = vld [vmem:[#allocation6 + $0x218] sm:$0xff]
    %v1283 = vld [vmem:[#allocation6 + $0x220] sm:$0xff]
    %v1284 = vld [vmem:[#allocation6 + $0x228] sm:$0xff]
    %v1285 = vld [vmem:[#allocation6 + $0x230] sm:$0xff]
    %v1286 = vld [vmem:[#allocation6 + $0x238] sm:$0xff]
    %v1287 = vld [vmem:[#allocation6 + $0x240] sm:$0xff]
    %v1288 = vld [vmem:[#allocation6 + $0x248] sm:$0xff]
    %v1289 = vld [vmem:[#allocation6 + $0x250] sm:$0xff]
    %v1290 = vld [vmem:[#allocation6 + $0x258] sm:$0xff]
    %v1291 = vld [vmem:[#allocation6 + $0x260] sm:$0xff]
    %v1292 = vld [vmem:[#allocation6 + $0x268] sm:$0xff]
    %v1293 = vld [vmem:[#allocation6 + $0x270] sm:$0xff]
    %v1294 = vld [vmem:[#allocation6 + $0x278] sm:$0xff]
    %v1295 = vld [vmem:[#allocation6 + $0x280] sm:$0xff]
    %v1296 = vld [vmem:[#allocation6 + $0x288] sm:$0xff]
    %v1297 = vld [vmem:[#allocation6 + $0x290] sm:$0xff]
    %v1298 = vld [vmem:[#allocation6 + $0x298] sm:$0xff]
    %v1299 = vld [vmem:[#allocation6 + $0x2a0] sm:$0xff]
    %v1300 = vld [vmem:[#allocation6 + $0x2a8] sm:$0xff]
    %v1301 = vld [vmem:[#allocation6 + $0x2b0] sm:$0xff]
    %v1302 = vld [vmem:[#allocation6 + $0x2b8] sm:$0xff]
    %v1303 = vld [vmem:[#allocation6 + $0x2c0] sm:$0xff]
    %v1304 = vld [vmem:[#allocation6 + $0x2c8] sm:$0xff]
    %v1305 = vld [vmem:[#allocation6 + $0x2d0] sm:$0xff]
    %v1306 = vld [vmem:[#allocation6 + $0x2d8] sm:$0xff]
    %v1307 = vld [vmem:[#allocation6 + $0x2e0] sm:$0xff]
    %v1308 = vld [vmem:[#allocation6 + $0x2e8] sm:$0xff]
    %v1309 = vld [vmem:[#allocation6 + $0x2f0] sm:$0xff]
    %v1310 = vld [vmem:[#allocation6 + $0x2f8] sm:$0xff]
    %v1311 = vld [vmem:[%s3] sm:$0x1]
    %v1313 = vlaneseq
    %v1314 = vshrl.u32 %v1313, 7
    %v1315 = vsub.s32 0, %v1314
    %v1316 = vrot.slane %v1311, %v1315
    %1318 = vmatprep.subr.mxu0 0.0
    %1319 = vmatpush1.msra.mxu0 %v1215
    %1320 = vmatprep.subr.mxu0 0.0
    %1321 = vmatpush1.msra.mxu0 %v1216
    %1322 = vmatprep.subr.mxu0 0.0
    %1323 = vmatpush1.msra.mxu0 %v1217
    %1324 = vmatprep.subr.mxu0 0.0
    %1325 = vmatpush1.msra.mxu0 %v1218
    %1326 = vmatprep.subr.mxu0 0.0
    %1327 = vmatpush1.msra.mxu0 %v1219
    %1328 = vmatprep.subr.mxu0 0.0
    %1329 = vmatpush1.msra.mxu0 %v1220
    %1330 = vmatprep.subr.mxu0 0.0
    %1331 = vmatpush1.msra.mxu0 %v1221
    %1332 = vmatprep.subr.mxu0 0.0
    %1333 = vmatpush1.msra.mxu0 %v1222
    %1334 = vmatprep.subr.mxu0 0.0
    %1335 = vmatpush1.msra.mxu0 %v1223
    %1336 = vmatprep.subr.mxu0 0.0
    %1337 = vmatpush1.msra.mxu0 %v1224
    %1338 = vmatprep.subr.mxu0 0.0
    %1339 = vmatpush1.msra.mxu0 %v1225
    %1340 = vmatprep.subr.mxu0 0.0
    %1341 = vmatpush1.msra.mxu0 %v1226
    %1342 = vmatprep.subr.mxu0 0.0
    %1343 = vmatpush1.msra.mxu0 %v1227
    %1344 = vmatprep.subr.mxu0 0.0
    %1345 = vmatpush1.msra.mxu0 %v1228
    %1346 = vmatprep.subr.mxu0 0.0
    %1347 = vmatpush1.msra.mxu0 %v1229
    %1348 = vmatprep.subr.mxu0 0.0
    %1349 = vmatpush1.msra.mxu0 %v1230
    %1350 = vmatprep.subr.mxu0 0.0
    %1351 = vmatpush1.msra.mxu0 %v1231
    %1352 = vmatprep.subr.mxu0 0.0
    %1353 = vmatpush1.msra.mxu0 %v1232
    %1354 = vmatprep.subr.mxu0 0.0
    %1355 = vmatpush1.msra.mxu0 %v1233
    %1356 = vmatprep.subr.mxu0 0.0
    %1357 = vmatpush1.msra.mxu0 %v1234
    %1358 = vmatprep.subr.mxu0 0.0
    %1359 = vmatpush1.msra.mxu0 %v1235
    %1360 = vmatprep.subr.mxu0 0.0
    %1361 = vmatpush1.msra.mxu0 %v1236
    %1362 = vmatprep.subr.mxu0 0.0
    %1363 = vmatpush1.msra.mxu0 %v1237
    %1364 = vmatprep.subr.mxu0 0.0
    %1365 = vmatpush1.msra.mxu0 %v1238
    %1366 = vmatprep.subr.mxu0 0.0
    %1367 = vmatpush1.msra.mxu0 %v1239
    %1368 = vmatprep.subr.mxu0 0.0
    %1369 = vmatpush1.msra.mxu0 %v1240
    %1370 = vmatprep.subr.mxu0 0.0
    %1371 = vmatpush1.msra.mxu0 %v1241
    %1372 = vmatprep.subr.mxu0 0.0
    %1373 = vmatpush1.msra.mxu0 %v1242
    %1374 = vmatprep.subr.mxu0 0.0
    %1375 = vmatpush1.msra.mxu0 %v1243
    %1376 = vmatprep.subr.mxu0 0.0
    %1377 = vmatpush1.msra.mxu0 %v1244
    %1378 = vmatprep.subr.mxu0 0.0
    %1379 = vmatpush1.msra.mxu0 %v1245
    %1380 = vmatprep.subr.mxu0 0.0
    %1381 = vmatpush1.msra.mxu0 %v1246
    %1382 = vmatprep.mubr.f32.mxu0 %v1210
    %1383 = vmatmul.mubr.f32.gmra.mrb[0].mxu0 %v1209
    %v1384 = vpop.f32.mrb[0].mxu0
    %v1385 = vadd.f32 %v1316, %v1384
    %v1386 = vpop.f32.mrb[0].mxu0
    %1387 = vdwg.mxu0
    %1388 = vmatprep.subr.mxu0 0.0
    %1389 = vmatpush1.msra.mxu0 %v1247
    %1390 = vmatprep.subr.mxu0 0.0
    %1391 = vmatpush1.msra.mxu0 %v1248
    %1392 = vmatprep.subr.mxu0 0.0
    %1393 = vmatpush1.msra.mxu0 %v1249
    %1394 = vmatprep.subr.mxu0 0.0
    %1395 = vmatpush1.msra.mxu0 %v1250
    %1396 = vmatprep.subr.mxu0 0.0
    %1397 = vmatpush1.msra.mxu0 %v1251
    %1398 = vmatprep.subr.mxu0 0.0
    %1399 = vmatpush1.msra.mxu0 %v1252
    %1400 = vmatprep.subr.mxu0 0.0
    %1401 = vmatpush1.msra.mxu0 %v1253
    %1402 = vmatprep.subr.mxu0 0.0
    %1403 = vmatpush1.msra.mxu0 %v1254
    %1404 = vmatprep.subr.mxu0 0.0
    %1405 = vmatpush1.msra.mxu0 %v1255
    %1406 = vmatprep.subr.mxu0 0.0
    %1407 = vmatpush1.msra.mxu0 %v1256
    %1408 = vmatprep.subr.mxu0 0.0
    %1409 = vmatpush1.msra.mxu0 %v1257
    %1410 = vmatprep.subr.mxu0 0.0
    %1411 = vmatpush1.msra.mxu0 %v1258
    %1412 = vmatprep.subr.mxu0 0.0
    %1413 = vmatpush1.msra.mxu0 %v1259
    %1414 = vmatprep.subr.mxu0 0.0
    %1415 = vmatpush1.msra.mxu0 %v1260
    %1416 = vmatprep.subr.mxu0 0.0
    %1417 = vmatpush1.msra.mxu0 %v1261
    %1418 = vmatprep.subr.mxu0 0.0
    %1419 = vmatpush1.msra.mxu0 %v1262
    %1420 = vmatprep.subr.mxu0 0.0
    %1421 = vmatpush1.msra.mxu0 %v1263
    %1422 = vmatprep.subr.mxu0 0.0
    %1423 = vmatpush1.msra.mxu0 %v1264
    %1424 = vmatprep.subr.mxu0 0.0
    %1425 = vmatpush1.msra.mxu0 %v1265
    %1426 = vmatprep.subr.mxu0 0.0
    %1427 = vmatpush1.msra.mxu0 %v1266
    %1428 = vmatprep.subr.mxu0 0.0
    %1429 = vmatpush1.msra.mxu0 %v1267
    %1430 = vmatprep.subr.mxu0 0.0
    %1431 = vmatpush1.msra.mxu0 %v1268
    %1432 = vmatprep.subr.mxu0 0.0
    %1433 = vmatpush1.msra.mxu0 %v1269
    %1434 = vmatprep.subr.mxu0 0.0
    %1435 = vmatpush1.msra.mxu0 %v1270
    %1436 = vmatprep.subr.mxu0 0.0
    %1437 = vmatpush1.msra.mxu0 %v1271
    %1438 = vmatprep.subr.mxu0 0.0
    %1439 = vmatpush1.msra.mxu0 %v1272
    %1440 = vmatprep.subr.mxu0 0.0
    %1441 = vmatpush1.msra.mxu0 %v1273
    %1442 = vmatprep.subr.mxu0 0.0
    %1443 = vmatpush1.msra.mxu0 %v1274
    %1444 = vmatprep.subr.mxu0 0.0
    %1445 = vmatpush1.msra.mxu0 %v1275
    %1446 = vmatprep.subr.mxu0 0.0
    %1447 = vmatpush1.msra.mxu0 %v1276
    %1448 = vmatprep.subr.mxu0 0.0
    %1449 = vmatpush1.msra.mxu0 %v1277
    %1450 = vmatprep.subr.mxu0 0.0
    %1451 = vmatpush1.msra.mxu0 %v1278
    %1452 = vmatprep.mubr.f32.mxu0 %v1212
    %1453 = vmatmul.mubr.f32.gmra.mrb[0].mxu0 %v1211
    %v1454 = vpop.f32.mrb[0].mxu0
    %v1455 = vadd.f32 %v1385, %v1454
    %v1456 = vpop.f32.mrb[0].mxu0
    %1457 = vdwg.mxu0
    %1458 = vmatprep.subr.mxu0 0.0
    %1459 = vmatpush1.msra.mxu0 %v1279
    %1460 = vmatprep.subr.mxu0 0.0
    %1461 = vmatpush1.msra.mxu0 %v1280
    %1462 = vmatprep.subr.mxu0 0.0
    %1463 = vmatpush1.msra.mxu0 %v1281
    %1464 = vmatprep.subr.mxu0 0.0
    %1465 = vmatpush1.msra.mxu0 %v1282
    %1466 = vmatprep.subr.mxu0 0.0
    %1467 = vmatpush1.msra.mxu0 %v1283
    %1468 = vmatprep.subr.mxu0 0.0
    %1469 = vmatpush1.msra.mxu0 %v1284
    %1470 = vmatprep.subr.mxu0 0.0
    %1471 = vmatpush1.msra.mxu0 %v1285
    %1472 = vmatprep.subr.mxu0 0.0
    %1473 = vmatpush1.msra.mxu0 %v1286
    %1474 = vmatprep.subr.mxu0 0.0
    %1475 = vmatpush1.msra.mxu0 %v1287
    %1476 = vmatprep.subr.mxu0 0.0
    %1477 = vmatpush1.msra.mxu0 %v1288
    %1478 = vmatprep.subr.mxu0 0.0
    %1479 = vmatpush1.msra.mxu0 %v1289
    %1480 = vmatprep.subr.mxu0 0.0
    %1481 = vmatpush1.msra.mxu0 %v1290
    %1482 = vmatprep.subr.mxu0 0.0
    %1483 = vmatpush1.msra.mxu0 %v1291
    %1484 = vmatprep.subr.mxu0 0.0
    %1485 = vmatpush1.msra.mxu0 %v1292
    %1486 = vmatprep.subr.mxu0 0.0
    %1487 = vmatpush1.msra.mxu0 %v1293
    %1488 = vmatprep.subr.mxu0 0.0
    %1489 = vmatpush1.msra.mxu0 %v1294
    %1490 = vmatprep.subr.mxu0 0.0
    %1491 = vmatpush1.msra.mxu0 %v1295
    %1492 = vmatprep.subr.mxu0 0.0
    %1493 = vmatpush1.msra.mxu0 %v1296
    %1494 = vmatprep.subr.mxu0 0.0
    %1495 = vmatpush1.msra.mxu0 %v1297
    %1496 = vmatprep.subr.mxu0 0.0
    %1497 = vmatpush1.msra.mxu0 %v1298
    %1498 = vmatprep.subr.mxu0 0.0
    %1499 = vmatpush1.msra.mxu0 %v1299
    %1500 = vmatprep.subr.mxu0 0.0
    %1501 = vmatpush1.msra.mxu0 %v1300
    %1502 = vmatprep.subr.mxu0 0.0
    %1503 = vmatpush1.msra.mxu0 %v1301
    %1504 = vmatprep.subr.mxu0 0.0
    %1505 = vmatpush1.msra.mxu0 %v1302
    %1506 = vmatprep.subr.mxu0 0.0
    %1507 = vmatpush1.msra.mxu0 %v1303
    %1508 = vmatprep.subr.mxu0 0.0
    %1509 = vmatpush1.msra.mxu0 %v1304
    %1510 = vmatprep.subr.mxu0 0.0
    %1511 = vmatpush1.msra.mxu0 %v1305
    %1512 = vmatprep.subr.mxu0 0.0
    %1513 = vmatpush1.msra.mxu0 %v1306
    %1514 = vmatprep.subr.mxu0 0.0
    %1515 = vmatpush1.msra.mxu0 %v1307
    %1516 = vmatprep.subr.mxu0 0.0
    %1517 = vmatpush1.msra.mxu0 %v1308
    %1518 = vmatprep.subr.mxu0 0.0
    %1519 = vmatpush1.msra.mxu0 %v1309
    %1520 = vmatprep.subr.mxu0 0.0
    %1521 = vmatpush1.msra.mxu0 %v1310
    %1522 = vmatprep.mubr.f32.mxu0 %v1214
    %1523 = vmatmul.mubr.f32.gmra.mrb[0].mxu0 %v1213
    %v1524 = vpop.f32.mrb[0].mxu0
    %v1525 = vadd.f32 %v1455, %v1524
    %v1526 = vpop.f32.mrb[0].mxu0
    %1527 = vdwg.mxu0
    %1528 = vst [vmem:[%s44] sm:$0xff] %v1525
    %s1529 = sadd.s32 0, 1
    %p1530 = scmp.lt.s32.totalorder %s1529, 1
    // Predicated region
    $region498: #{lookup_news_encoder.1} parent=1 // pred_check
      %p1531 = pneg %p1530
    $region499: #{lookup_news_encoder.1} parent=1 // pred_check_branch
      %1533 = sbr.rel (%p1531) target = $region501
    $region500: #{lookup_news_encoder.1} parent=1 // pred_region
      %s1534 = sadd.s32 %s47, 1
      %s1535 = smul.u32 %s1534, 16
      %s1536 = sld [smem:[#allocation5 + %s1535]]
      %s1537 = sshrl.u32 %s1536, 3
      %s1538 = sand.u32 %s1536, 7
      %s1539 = smul.u32 %s1537, 48
      %s1540 = sadd.s32 %s1538, %s1539
      %s1541 = scalar_lea.vmem %s1, %s1540
      %p1543 = scmp.lt.u32.totalorder 1, 8
      %p1544 = pneg %p1543
      // Predicated region
      $region502: #{lookup_news_encoder.1} parent=500 // pred_check
        _
      $region503: #{lookup_news_encoder.1} parent=500 // pred_check_branch
        %1546 = sbr.rel (%p1543) target = $region505
      $region504: #{lookup_news_encoder.1} parent=500 // pred_region
        %s1571 = sand.u32 1, 7
        %p1572 = scmp.eq.s32.totalorder %s1571, 0
        %p1573 = pneg %p1572
        // Predicated region
        $region517: #{lookup_news_encoder.1} parent=504 // pred_check
          _
        $region518: #{lookup_news_encoder.1} parent=504 // pred_check_branch
          %1575 = sbr.rel (%p1572) target = $region520
        $region519: #{lookup_news_encoder.1} parent=504 // pred_region
          %s1576 = sand.u32 1, 7
          %s1577 = ssub.s32 1, %s1576
          %s1578 = scalar_lea.vmem %s1541, %s1577
          %s1579 = ssub.s32 1, %s1576
          %s1580 = scalar_lea.vmem [#allocation2], %s1579
          %s1581 = sshllo.u32 0, %s1576
          loop: start=0, step=1, limit=1
          $region521: #{lookup_news_encoder.1} parent=519 // loop_pre_header
            _
          $region522: #{lookup_news_encoder.1} parent=519 // loop_header
            %s1583 = sphi 0, %s1587
            %p1584 = scmp.ge.s32.totalorder %s1583, 1
            %s1588 = sphi %s1578, %s1578
            %s1589 = sphi %s1580, %s1580
          $region523: #{lookup_news_encoder.1} parent=519 // loop_header_branch
            %1586 = sbr.rel (%p1584) target = $region527
          $region524: #{lookup_news_encoder.1} parent=519 // loop_body
            %v1590 = vld [vmem:[%s1588] sm:%s1581]
            %1591 = vst [vmem:[%s1589] sm:%s1581] %v1590
            %v1592 = vld [vmem:[%s1588 + $0x8] sm:%s1581]
            %1593 = vst [vmem:[%s1589 + $0x8] sm:%s1581] %v1592
            %v1594 = vld [vmem:[%s1588 + $0x10] sm:%s1581]
            %1595 = vst [vmem:[%s1589 + $0x10] sm:%s1581] %v1594
            %v1596 = vld [vmem:[%s1588 + $0x18] sm:%s1581]
            %1597 = vst [vmem:[%s1589 + $0x18] sm:%s1581] %v1596
            %v1598 = vld [vmem:[%s1588 + $0x20] sm:%s1581]
            %1599 = vst [vmem:[%s1589 + $0x20] sm:%s1581] %v1598
            %v1600 = vld [vmem:[%s1588 + $0x28] sm:%s1581]
            %1601 = vst [vmem:[%s1589 + $0x28] sm:%s1581] %v1600
          $region525: #{lookup_news_encoder.1} parent=519 // loop_footer
            %s1587 = sadd.s32 1, %s1583
          $region526: #{lookup_news_encoder.1} parent=519 // loop_footer_branch
            %1582 = sbr.rel target = $region522
          $region527: #{lookup_news_encoder.1} parent=519 // loop_exit
            _
        $region520: #{lookup_news_encoder.1} parent=504 // pred_fallthru
          _
      $region505: #{lookup_news_encoder.1} parent=500 // pred_fallthru
        _
      // Predicated region
      $region506: #{lookup_news_encoder.1} parent=500 // pred_check
        %p1547 = pneg %p1543
      $region507: #{lookup_news_encoder.1} parent=500 // pred_check_branch
        %1549 = sbr.rel (%p1547) target = $region509
      $region508: #{lookup_news_encoder.1} parent=500 // pred_region
        %s1550 = sshllo.u32 0, 1
        loop: start=0, step=1, limit=1
        $region510: #{lookup_news_encoder.1} parent=508 // loop_pre_header
          _
        $region511: #{lookup_news_encoder.1} parent=508 // loop_header
          %s1552 = sphi 0, %s1556
          %p1553 = scmp.ge.s32.totalorder %s1552, 1
          %s1557 = sphi %s1541, %s1541
          %s1558 = sphi [#allocation2], [#allocation2]
        $region512: #{lookup_news_encoder.1} parent=508 // loop_header_branch
          %1555 = sbr.rel (%p1553) target = $region516
        $region513: #{lookup_news_encoder.1} parent=508 // loop_body
          %v1559 = vld [vmem:[%s1557] sm:%s1550]
          %1560 = vst [vmem:[%s1558] sm:%s1550] %v1559
          %v1561 = vld [vmem:[%s1557 + $0x8] sm:%s1550]
          %1562 = vst [vmem:[%s1558 + $0x8] sm:%s1550] %v1561
          %v1563 = vld [vmem:[%s1557 + $0x10] sm:%s1550]
          %1564 = vst [vmem:[%s1558 + $0x10] sm:%s1550] %v1563
          %v1565 = vld [vmem:[%s1557 + $0x18] sm:%s1550]
          %1566 = vst [vmem:[%s1558 + $0x18] sm:%s1550] %v1565
          %v1567 = vld [vmem:[%s1557 + $0x20] sm:%s1550]
          %1568 = vst [vmem:[%s1558 + $0x20] sm:%s1550] %v1567
          %v1569 = vld [vmem:[%s1557 + $0x28] sm:%s1550]
          %1570 = vst [vmem:[%s1558 + $0x28] sm:%s1550] %v1569
        $region514: #{lookup_news_encoder.1} parent=508 // loop_footer
          %s1556 = sadd.s32 1, %s1552
        $region515: #{lookup_news_encoder.1} parent=508 // loop_footer_branch
          %1551 = sbr.rel target = $region511
        $region516: #{lookup_news_encoder.1} parent=508 // loop_exit
          _
      $region509: #{lookup_news_encoder.1} parent=500 // pred_fallthru
        _
      // Predicated region
      $region528: #{lookup_news_encoder.1} parent=500 // pred_check
        _
      $region529: #{lookup_news_encoder.1} parent=500 // pred_check_branch
        %1604 = sbr.rel (0) target = $region531
      $region530: #{lookup_news_encoder.1} parent=500 // pred_region
        %1605 = vsyncadd [#allocation3], 96
      $region531: #{lookup_news_encoder.1} parent=500 // pred_fallthru
        _
      %s1606 = sadd.s32 %s1535, 1
      %s1607 = sld [smem:[#allocation5 + %s1606]]
      %s1608 = sshrl.u32 %s1607, 3
      %s1609 = sand.u32 %s1607, 7
      %s1610 = smul.u32 %s1608, 48
      %s1611 = sadd.s32 %s1609, %s1610
      %s1612 = scalar_lea.vmem %s1, %s1611
      %s1613 = scalar_lea.vmem [#allocation2], 1
      %p1615 = scmp.lt.u32.totalorder 1, 8
      %p1616 = pneg %p1615
      // Predicated region
      $region532: #{lookup_news_encoder.1} parent=500 // pred_check
        _
      $region533: #{lookup_news_encoder.1} parent=500 // pred_check_branch
        %1618 = sbr.rel (%p1615) target = $region535
      $region534: #{lookup_news_encoder.1} parent=500 // pred_region
        %s1643 = sand.u32 1, 7
        %p1644 = scmp.eq.s32.totalorder %s1643, 0
        %p1645 = pneg %p1644
        // Predicated region
        $region547: #{lookup_news_encoder.1} parent=534 // pred_check
          _
        $region548: #{lookup_news_encoder.1} parent=534 // pred_check_branch
          %1647 = sbr.rel (%p1644) target = $region550
        $region549: #{lookup_news_encoder.1} parent=534 // pred_region
          %s1648 = sand.u32 1, 7
          %s1649 = ssub.s32 1, %s1648
          %s1650 = scalar_lea.vmem %s1612, %s1649
          %s1651 = ssub.s32 1, %s1648
          %s1652 = scalar_lea.vmem %s1613, %s1651 [#allocation2]
          %s1653 = sshllo.u32 0, %s1648
          loop: start=0, step=1, limit=1
          $region551: #{lookup_news_encoder.1} parent=549 // loop_pre_header
            _
          $region552: #{lookup_news_encoder.1} parent=549 // loop_header
            %s1655 = sphi 0, %s1659
            %p1656 = scmp.ge.s32.totalorder %s1655, 1
            %s1660 = sphi %s1650, %s1650
            %s1661 = sphi %s1652, %s1652
          $region553: #{lookup_news_encoder.1} parent=549 // loop_header_branch
            %1658 = sbr.rel (%p1656) target = $region557
          $region554: #{lookup_news_encoder.1} parent=549 // loop_body
            %v1662 = vld [vmem:[%s1660] sm:%s1653]
            %1663 = vst [vmem:[%s1661] sm:%s1653] %v1662
            %v1664 = vld [vmem:[%s1660 + $0x8] sm:%s1653]
            %1665 = vst [vmem:[%s1661 + $0x8] sm:%s1653] %v1664
            %v1666 = vld [vmem:[%s1660 + $0x10] sm:%s1653]
            %1667 = vst [vmem:[%s1661 + $0x10] sm:%s1653] %v1666
            %v1668 = vld [vmem:[%s1660 + $0x18] sm:%s1653]
            %1669 = vst [vmem:[%s1661 + $0x18] sm:%s1653] %v1668
            %v1670 = vld [vmem:[%s1660 + $0x20] sm:%s1653]
            %1671 = vst [vmem:[%s1661 + $0x20] sm:%s1653] %v1670
            %v1672 = vld [vmem:[%s1660 + $0x28] sm:%s1653]
            %1673 = vst [vmem:[%s1661 + $0x28] sm:%s1653] %v1672
          $region555: #{lookup_news_encoder.1} parent=549 // loop_footer
            %s1659 = sadd.s32 1, %s1655
          $region556: #{lookup_news_encoder.1} parent=549 // loop_footer_branch
            %1654 = sbr.rel target = $region552
          $region557: #{lookup_news_encoder.1} parent=549 // loop_exit
            _
        $region550: #{lookup_news_encoder.1} parent=534 // pred_fallthru
          _
      $region535: #{lookup_news_encoder.1} parent=500 // pred_fallthru
        _
      // Predicated region
      $region536: #{lookup_news_encoder.1} parent=500 // pred_check
        %p1619 = pneg %p1615
      $region537: #{lookup_news_encoder.1} parent=500 // pred_check_branch
        %1621 = sbr.rel (%p1619) target = $region539
      $region538: #{lookup_news_encoder.1} parent=500 // pred_region
        %s1622 = sshllo.u32 0, 1
        loop: start=0, step=1, limit=1
        $region540: #{lookup_news_encoder.1} parent=538 // loop_pre_header
          _
        $region541: #{lookup_news_encoder.1} parent=538 // loop_header
          %s1624 = sphi 0, %s1628
          %p1625 = scmp.ge.s32.totalorder %s1624, 1
          %s1629 = sphi %s1612, %s1612
          %s1630 = sphi %s1613, %s1613
        $region542: #{lookup_news_encoder.1} parent=538 // loop_header_branch
          %1627 = sbr.rel (%p1625) target = $region546
        $region543: #{lookup_news_encoder.1} parent=538 // loop_body
          %v1631 = vld [vmem:[%s1629] sm:%s1622]
          %1632 = vst [vmem:[%s1630] sm:%s1622] %v1631
          %v1633 = vld [vmem:[%s1629 + $0x8] sm:%s1622]
          %1634 = vst [vmem:[%s1630 + $0x8] sm:%s1622] %v1633
          %v1635 = vld [vmem:[%s1629 + $0x10] sm:%s1622]
          %1636 = vst [vmem:[%s1630 + $0x10] sm:%s1622] %v1635
          %v1637 = vld [vmem:[%s1629 + $0x18] sm:%s1622]
          %1638 = vst [vmem:[%s1630 + $0x18] sm:%s1622] %v1637
          %v1639 = vld [vmem:[%s1629 + $0x20] sm:%s1622]
          %1640 = vst [vmem:[%s1630 + $0x20] sm:%s1622] %v1639
          %v1641 = vld [vmem:[%s1629 + $0x28] sm:%s1622]
          %1642 = vst [vmem:[%s1630 + $0x28] sm:%s1622] %v1641
        $region544: #{lookup_news_encoder.1} parent=538 // loop_footer
          %s1628 = sadd.s32 1, %s1624
        $region545: #{lookup_news_encoder.1} parent=538 // loop_footer_branch
          %1623 = sbr.rel target = $region541
        $region546: #{lookup_news_encoder.1} parent=538 // loop_exit
          _
      $region539: #{lookup_news_encoder.1} parent=500 // pred_fallthru
        _
      // Predicated region
      $region558: #{lookup_news_encoder.1} parent=500 // pred_check
        _
      $region559: #{lookup_news_encoder.1} parent=500 // pred_check_branch
        %1676 = sbr.rel (0) target = $region561
      $region560: #{lookup_news_encoder.1} parent=500 // pred_region
        %1677 = vsyncadd [#allocation3], 96
      $region561: #{lookup_news_encoder.1} parent=500 // pred_fallthru
        _
      %s1678 = sadd.s32 %s1535, 2
      %s1679 = sld [smem:[#allocation5 + %s1678]]
      %s1680 = sshrl.u32 %s1679, 3
      %s1681 = sand.u32 %s1679, 7
      %s1682 = smul.u32 %s1680, 48
      %s1683 = sadd.s32 %s1681, %s1682
      %s1684 = scalar_lea.vmem %s1, %s1683
      %s1685 = scalar_lea.vmem [#allocation2], 2
      %p1687 = scmp.lt.u32.totalorder 1, 8
      %p1688 = pneg %p1687
      // Predicated region
      $region562: #{lookup_news_encoder.1} parent=500 // pred_check
        _
      $region563: #{lookup_news_encoder.1} parent=500 // pred_check_branch
        %1690 = sbr.rel (%p1687) target = $region565
      $region564: #{lookup_news_encoder.1} parent=500 // pred_region
        %s1715 = sand.u32 1, 7
        %p1716 = scmp.eq.s32.totalorder %s1715, 0
        %p1717 = pneg %p1716
        // Predicated region
        $region577: #{lookup_news_encoder.1} parent=564 // pred_check
          _
        $region578: #{lookup_news_encoder.1} parent=564 // pred_check_branch
          %1719 = sbr.rel (%p1716) target = $region580
        $region579: #{lookup_news_encoder.1} parent=564 // pred_region
          %s1720 = sand.u32 1, 7
          %s1721 = ssub.s32 1, %s1720
          %s1722 = scalar_lea.vmem %s1684, %s1721
          %s1723 = ssub.s32 1, %s1720
          %s1724 = scalar_lea.vmem %s1685, %s1723 [#allocation2]
          %s1725 = sshllo.u32 0, %s1720
          loop: start=0, step=1, limit=1
          $region581: #{lookup_news_encoder.1} parent=579 // loop_pre_header
            _
          $region582: #{lookup_news_encoder.1} parent=579 // loop_header
            %s1727 = sphi 0, %s1731
            %p1728 = scmp.ge.s32.totalorder %s1727, 1
            %s1732 = sphi %s1722, %s1722
            %s1733 = sphi %s1724, %s1724
          $region583: #{lookup_news_encoder.1} parent=579 // loop_header_branch
            %1730 = sbr.rel (%p1728) target = $region587
          $region584: #{lookup_news_encoder.1} parent=579 // loop_body
            %v1734 = vld [vmem:[%s1732] sm:%s1725]
            %1735 = vst [vmem:[%s1733] sm:%s1725] %v1734
            %v1736 = vld [vmem:[%s1732 + $0x8] sm:%s1725]
            %1737 = vst [vmem:[%s1733 + $0x8] sm:%s1725] %v1736
            %v1738 = vld [vmem:[%s1732 + $0x10] sm:%s1725]
            %1739 = vst [vmem:[%s1733 + $0x10] sm:%s1725] %v1738
            %v1740 = vld [vmem:[%s1732 + $0x18] sm:%s1725]
            %1741 = vst [vmem:[%s1733 + $0x18] sm:%s1725] %v1740
            %v1742 = vld [vmem:[%s1732 + $0x20] sm:%s1725]
            %1743 = vst [vmem:[%s1733 + $0x20] sm:%s1725] %v1742
            %v1744 = vld [vmem:[%s1732 + $0x28] sm:%s1725]
            %1745 = vst [vmem:[%s1733 + $0x28] sm:%s1725] %v1744
          $region585: #{lookup_news_encoder.1} parent=579 // loop_footer
            %s1731 = sadd.s32 1, %s1727
          $region586: #{lookup_news_encoder.1} parent=579 // loop_footer_branch
            %1726 = sbr.rel target = $region582
          $region587: #{lookup_news_encoder.1} parent=579 // loop_exit
            _
        $region580: #{lookup_news_encoder.1} parent=564 // pred_fallthru
          _
      $region565: #{lookup_news_encoder.1} parent=500 // pred_fallthru
        _
      // Predicated region
      $region566: #{lookup_news_encoder.1} parent=500 // pred_check
        %p1691 = pneg %p1687
      $region567: #{lookup_news_encoder.1} parent=500 // pred_check_branch
        %1693 = sbr.rel (%p1691) target = $region569
      $region568: #{lookup_news_encoder.1} parent=500 // pred_region
        %s1694 = sshllo.u32 0, 1
        loop: start=0, step=1, limit=1
        $region570: #{lookup_news_encoder.1} parent=568 // loop_pre_header
          _
        $region571: #{lookup_news_encoder.1} parent=568 // loop_header
          %s1696 = sphi 0, %s1700
          %p1697 = scmp.ge.s32.totalorder %s1696, 1
          %s1701 = sphi %s1684, %s1684
          %s1702 = sphi %s1685, %s1685
        $region572: #{lookup_news_encoder.1} parent=568 // loop_header_branch
          %1699 = sbr.rel (%p1697) target = $region576
        $region573: #{lookup_news_encoder.1} parent=568 // loop_body
          %v1703 = vld [vmem:[%s1701] sm:%s1694]
          %1704 = vst [vmem:[%s1702] sm:%s1694] %v1703
          %v1705 = vld [vmem:[%s1701 + $0x8] sm:%s1694]
          %1706 = vst [vmem:[%s1702 + $0x8] sm:%s1694] %v1705
          %v1707 = vld [vmem:[%s1701 + $0x10] sm:%s1694]
          %1708 = vst [vmem:[%s1702 + $0x10] sm:%s1694] %v1707
          %v1709 = vld [vmem:[%s1701 + $0x18] sm:%s1694]
          %1710 = vst [vmem:[%s1702 + $0x18] sm:%s1694] %v1709
          %v1711 = vld [vmem:[%s1701 + $0x20] sm:%s1694]
          %1712 = vst [vmem:[%s1702 + $0x20] sm:%s1694] %v1711
          %v1713 = vld [vmem:[%s1701 + $0x28] sm:%s1694]
          %1714 = vst [vmem:[%s1702 + $0x28] sm:%s1694] %v1713
        $region574: #{lookup_news_encoder.1} parent=568 // loop_footer
          %s1700 = sadd.s32 1, %s1696
        $region575: #{lookup_news_encoder.1} parent=568 // loop_footer_branch
          %1695 = sbr.rel target = $region571
        $region576: #{lookup_news_encoder.1} parent=568 // loop_exit
          _
      $region569: #{lookup_news_encoder.1} parent=500 // pred_fallthru
        _
      // Predicated region
      $region588: #{lookup_news_encoder.1} parent=500 // pred_check
        _
      $region589: #{lookup_news_encoder.1} parent=500 // pred_check_branch
        %1748 = sbr.rel (0) target = $region591
      $region590: #{lookup_news_encoder.1} parent=500 // pred_region
        %1749 = vsyncadd [#allocation3], 96
      $region591: #{lookup_news_encoder.1} parent=500 // pred_fallthru
        _
      %s1750 = sadd.s32 %s1535, 3
      %s1751 = sld [smem:[#allocation5 + %s1750]]
      %s1752 = sshrl.u32 %s1751, 3
      %s1753 = sand.u32 %s1751, 7
      %s1754 = smul.u32 %s1752, 48
      %s1755 = sadd.s32 %s1753, %s1754
      %s1756 = scalar_lea.vmem %s1, %s1755
      %s1757 = scalar_lea.vmem [#allocation2], 3
      %p1759 = scmp.lt.u32.totalorder 1, 8
      %p1760 = pneg %p1759
      // Predicated region
      $region592: #{lookup_news_encoder.1} parent=500 // pred_check
        _
      $region593: #{lookup_news_encoder.1} parent=500 // pred_check_branch
        %1762 = sbr.rel (%p1759) target = $region595
      $region594: #{lookup_news_encoder.1} parent=500 // pred_region
        %s1787 = sand.u32 1, 7
        %p1788 = scmp.eq.s32.totalorder %s1787, 0
        %p1789 = pneg %p1788
        // Predicated region
        $region607: #{lookup_news_encoder.1} parent=594 // pred_check
          _
        $region608: #{lookup_news_encoder.1} parent=594 // pred_check_branch
          %1791 = sbr.rel (%p1788) target = $region610
        $region609: #{lookup_news_encoder.1} parent=594 // pred_region
          %s1792 = sand.u32 1, 7
          %s1793 = ssub.s32 1, %s1792
          %s1794 = scalar_lea.vmem %s1756, %s1793
          %s1795 = ssub.s32 1, %s1792
          %s1796 = scalar_lea.vmem %s1757, %s1795 [#allocation2]
          %s1797 = sshllo.u32 0, %s1792
          loop: start=0, step=1, limit=1
          $region611: #{lookup_news_encoder.1} parent=609 // loop_pre_header
            _
          $region612: #{lookup_news_encoder.1} parent=609 // loop_header
            %s1799 = sphi 0, %s1803
            %p1800 = scmp.ge.s32.totalorder %s1799, 1
            %s1804 = sphi %s1794, %s1794
            %s1805 = sphi %s1796, %s1796
          $region613: #{lookup_news_encoder.1} parent=609 // loop_header_branch
            %1802 = sbr.rel (%p1800) target = $region617
          $region614: #{lookup_news_encoder.1} parent=609 // loop_body
            %v1806 = vld [vmem:[%s1804] sm:%s1797]
            %1807 = vst [vmem:[%s1805] sm:%s1797] %v1806
            %v1808 = vld [vmem:[%s1804 + $0x8] sm:%s1797]
            %1809 = vst [vmem:[%s1805 + $0x8] sm:%s1797] %v1808
            %v1810 = vld [vmem:[%s1804 + $0x10] sm:%s1797]
            %1811 = vst [vmem:[%s1805 + $0x10] sm:%s1797] %v1810
            %v1812 = vld [vmem:[%s1804 + $0x18] sm:%s1797]
            %1813 = vst [vmem:[%s1805 + $0x18] sm:%s1797] %v1812
            %v1814 = vld [vmem:[%s1804 + $0x20] sm:%s1797]
            %1815 = vst [vmem:[%s1805 + $0x20] sm:%s1797] %v1814
            %v1816 = vld [vmem:[%s1804 + $0x28] sm:%s1797]
            %1817 = vst [vmem:[%s1805 + $0x28] sm:%s1797] %v1816
          $region615: #{lookup_news_encoder.1} parent=609 // loop_footer
            %s1803 = sadd.s32 1, %s1799
          $region616: #{lookup_news_encoder.1} parent=609 // loop_footer_branch
            %1798 = sbr.rel target = $region612
          $region617: #{lookup_news_encoder.1} parent=609 // loop_exit
            _
        $region610: #{lookup_news_encoder.1} parent=594 // pred_fallthru
          _
      $region595: #{lookup_news_encoder.1} parent=500 // pred_fallthru
        _
      // Predicated region
      $region596: #{lookup_news_encoder.1} parent=500 // pred_check
        %p1763 = pneg %p1759
      $region597: #{lookup_news_encoder.1} parent=500 // pred_check_branch
        %1765 = sbr.rel (%p1763) target = $region599
      $region598: #{lookup_news_encoder.1} parent=500 // pred_region
        %s1766 = sshllo.u32 0, 1
        loop: start=0, step=1, limit=1
        $region600: #{lookup_news_encoder.1} parent=598 // loop_pre_header
          _
        $region601: #{lookup_news_encoder.1} parent=598 // loop_header
          %s1768 = sphi 0, %s1772
          %p1769 = scmp.ge.s32.totalorder %s1768, 1
          %s1773 = sphi %s1756, %s1756
          %s1774 = sphi %s1757, %s1757
        $region602: #{lookup_news_encoder.1} parent=598 // loop_header_branch
          %1771 = sbr.rel (%p1769) target = $region606
        $region603: #{lookup_news_encoder.1} parent=598 // loop_body
          %v1775 = vld [vmem:[%s1773] sm:%s1766]
          %1776 = vst [vmem:[%s1774] sm:%s1766] %v1775
          %v1777 = vld [vmem:[%s1773 + $0x8] sm:%s1766]
          %1778 = vst [vmem:[%s1774 + $0x8] sm:%s1766] %v1777
          %v1779 = vld [vmem:[%s1773 + $0x10] sm:%s1766]
          %1780 = vst [vmem:[%s1774 + $0x10] sm:%s1766] %v1779
          %v1781 = vld [vmem:[%s1773 + $0x18] sm:%s1766]
          %1782 = vst [vmem:[%s1774 + $0x18] sm:%s1766] %v1781
          %v1783 = vld [vmem:[%s1773 + $0x20] sm:%s1766]
          %1784 = vst [vmem:[%s1774 + $0x20] sm:%s1766] %v1783
          %v1785 = vld [vmem:[%s1773 + $0x28] sm:%s1766]
          %1786 = vst [vmem:[%s1774 + $0x28] sm:%s1766] %v1785
        $region604: #{lookup_news_encoder.1} parent=598 // loop_footer
          %s1772 = sadd.s32 1, %s1768
        $region605: #{lookup_news_encoder.1} parent=598 // loop_footer_branch
          %1767 = sbr.rel target = $region601
        $region606: #{lookup_news_encoder.1} parent=598 // loop_exit
          _
      $region599: #{lookup_news_encoder.1} parent=500 // pred_fallthru
        _
      // Predicated region
      $region618: #{lookup_news_encoder.1} parent=500 // pred_check
        _
      $region619: #{lookup_news_encoder.1} parent=500 // pred_check_branch
        %1820 = sbr.rel (0) target = $region621
      $region620: #{lookup_news_encoder.1} parent=500 // pred_region
        %1821 = vsyncadd [#allocation3], 96
      $region621: #{lookup_news_encoder.1} parent=500 // pred_fallthru
        _
      %s1822 = sadd.s32 %s1535, 4
      %s1823 = sld [smem:[#allocation5 + %s1822]]
      %s1824 = sshrl.u32 %s1823, 3
      %s1825 = sand.u32 %s1823, 7
      %s1826 = smul.u32 %s1824, 48
      %s1827 = sadd.s32 %s1825, %s1826
      %s1828 = scalar_lea.vmem %s1, %s1827
      %s1829 = scalar_lea.vmem [#allocation2], 4
      %p1831 = scmp.lt.u32.totalorder 1, 8
      %p1832 = pneg %p1831
      // Predicated region
      $region622: #{lookup_news_encoder.1} parent=500 // pred_check
        _
      $region623: #{lookup_news_encoder.1} parent=500 // pred_check_branch
        %1834 = sbr.rel (%p1831) target = $region625
      $region624: #{lookup_news_encoder.1} parent=500 // pred_region
        %s1859 = sand.u32 1, 7
        %p1860 = scmp.eq.s32.totalorder %s1859, 0
        %p1861 = pneg %p1860
        // Predicated region
        $region637: #{lookup_news_encoder.1} parent=624 // pred_check
          _
        $region638: #{lookup_news_encoder.1} parent=624 // pred_check_branch
          %1863 = sbr.rel (%p1860) target = $region640
        $region639: #{lookup_news_encoder.1} parent=624 // pred_region
          %s1864 = sand.u32 1, 7
          %s1865 = ssub.s32 1, %s1864
          %s1866 = scalar_lea.vmem %s1828, %s1865
          %s1867 = ssub.s32 1, %s1864
          %s1868 = scalar_lea.vmem %s1829, %s1867 [#allocation2]
          %s1869 = sshllo.u32 0, %s1864
          loop: start=0, step=1, limit=1
          $region641: #{lookup_news_encoder.1} parent=639 // loop_pre_header
            _
          $region642: #{lookup_news_encoder.1} parent=639 // loop_header
            %s1871 = sphi 0, %s1875
            %p1872 = scmp.ge.s32.totalorder %s1871, 1
            %s1876 = sphi %s1866, %s1866
            %s1877 = sphi %s1868, %s1868
          $region643: #{lookup_news_encoder.1} parent=639 // loop_header_branch
            %1874 = sbr.rel (%p1872) target = $region647
          $region644: #{lookup_news_encoder.1} parent=639 // loop_body
            %v1878 = vld [vmem:[%s1876] sm:%s1869]
            %1879 = vst [vmem:[%s1877] sm:%s1869] %v1878
            %v1880 = vld [vmem:[%s1876 + $0x8] sm:%s1869]
            %1881 = vst [vmem:[%s1877 + $0x8] sm:%s1869] %v1880
            %v1882 = vld [vmem:[%s1876 + $0x10] sm:%s1869]
            %1883 = vst [vmem:[%s1877 + $0x10] sm:%s1869] %v1882
            %v1884 = vld [vmem:[%s1876 + $0x18] sm:%s1869]
            %1885 = vst [vmem:[%s1877 + $0x18] sm:%s1869] %v1884
            %v1886 = vld [vmem:[%s1876 + $0x20] sm:%s1869]
            %1887 = vst [vmem:[%s1877 + $0x20] sm:%s1869] %v1886
            %v1888 = vld [vmem:[%s1876 + $0x28] sm:%s1869]
            %1889 = vst [vmem:[%s1877 + $0x28] sm:%s1869] %v1888
          $region645: #{lookup_news_encoder.1} parent=639 // loop_footer
            %s1875 = sadd.s32 1, %s1871
          $region646: #{lookup_news_encoder.1} parent=639 // loop_footer_branch
            %1870 = sbr.rel target = $region642
          $region647: #{lookup_news_encoder.1} parent=639 // loop_exit
            _
        $region640: #{lookup_news_encoder.1} parent=624 // pred_fallthru
          _
      $region625: #{lookup_news_encoder.1} parent=500 // pred_fallthru
        _
      // Predicated region
      $region626: #{lookup_news_encoder.1} parent=500 // pred_check
        %p1835 = pneg %p1831
      $region627: #{lookup_news_encoder.1} parent=500 // pred_check_branch
        %1837 = sbr.rel (%p1835) target = $region629
      $region628: #{lookup_news_encoder.1} parent=500 // pred_region
        %s1838 = sshllo.u32 0, 1
        loop: start=0, step=1, limit=1
        $region630: #{lookup_news_encoder.1} parent=628 // loop_pre_header
          _
        $region631: #{lookup_news_encoder.1} parent=628 // loop_header
          %s1840 = sphi 0, %s1844
          %p1841 = scmp.ge.s32.totalorder %s1840, 1
          %s1845 = sphi %s1828, %s1828
          %s1846 = sphi %s1829, %s1829
        $region632: #{lookup_news_encoder.1} parent=628 // loop_header_branch
          %1843 = sbr.rel (%p1841) target = $region636
        $region633: #{lookup_news_encoder.1} parent=628 // loop_body
          %v1847 = vld [vmem:[%s1845] sm:%s1838]
          %1848 = vst [vmem:[%s1846] sm:%s1838] %v1847
          %v1849 = vld [vmem:[%s1845 + $0x8] sm:%s1838]
          %1850 = vst [vmem:[%s1846 + $0x8] sm:%s1838] %v1849
          %v1851 = vld [vmem:[%s1845 + $0x10] sm:%s1838]
          %1852 = vst [vmem:[%s1846 + $0x10] sm:%s1838] %v1851
          %v1853 = vld [vmem:[%s1845 + $0x18] sm:%s1838]
          %1854 = vst [vmem:[%s1846 + $0x18] sm:%s1838] %v1853
          %v1855 = vld [vmem:[%s1845 + $0x20] sm:%s1838]
          %1856 = vst [vmem:[%s1846 + $0x20] sm:%s1838] %v1855
          %v1857 = vld [vmem:[%s1845 + $0x28] sm:%s1838]
          %1858 = vst [vmem:[%s1846 + $0x28] sm:%s1838] %v1857
        $region634: #{lookup_news_encoder.1} parent=628 // loop_footer
          %s1844 = sadd.s32 1, %s1840
        $region635: #{lookup_news_encoder.1} parent=628 // loop_footer_branch
          %1839 = sbr.rel target = $region631
        $region636: #{lookup_news_encoder.1} parent=628 // loop_exit
          _
      $region629: #{lookup_news_encoder.1} parent=500 // pred_fallthru
        _
      // Predicated region
      $region648: #{lookup_news_encoder.1} parent=500 // pred_check
        _
      $region649: #{lookup_news_encoder.1} parent=500 // pred_check_branch
        %1892 = sbr.rel (0) target = $region651
      $region650: #{lookup_news_encoder.1} parent=500 // pred_region
        %1893 = vsyncadd [#allocation3], 96
      $region651: #{lookup_news_encoder.1} parent=500 // pred_fallthru
        _
      %s1894 = sadd.s32 %s1535, 5
      %s1895 = sld [smem:[#allocation5 + %s1894]]
      %s1896 = sshrl.u32 %s1895, 3
      %s1897 = sand.u32 %s1895, 7
      %s1898 = smul.u32 %s1896, 48
      %s1899 = sadd.s32 %s1897, %s1898
      %s1900 = scalar_lea.vmem %s1, %s1899
      %s1901 = scalar_lea.vmem [#allocation2], 5
      %p1903 = scmp.lt.u32.totalorder 1, 8
      %p1904 = pneg %p1903
      // Predicated region
      $region652: #{lookup_news_encoder.1} parent=500 // pred_check
        _
      $region653: #{lookup_news_encoder.1} parent=500 // pred_check_branch
        %1906 = sbr.rel (%p1903) target = $region655
      $region654: #{lookup_news_encoder.1} parent=500 // pred_region
        %s1931 = sand.u32 1, 7
        %p1932 = scmp.eq.s32.totalorder %s1931, 0
        %p1933 = pneg %p1932
        // Predicated region
        $region667: #{lookup_news_encoder.1} parent=654 // pred_check
          _
        $region668: #{lookup_news_encoder.1} parent=654 // pred_check_branch
          %1935 = sbr.rel (%p1932) target = $region670
        $region669: #{lookup_news_encoder.1} parent=654 // pred_region
          %s1936 = sand.u32 1, 7
          %s1937 = ssub.s32 1, %s1936
          %s1938 = scalar_lea.vmem %s1900, %s1937
          %s1939 = ssub.s32 1, %s1936
          %s1940 = scalar_lea.vmem %s1901, %s1939 [#allocation2]
          %s1941 = sshllo.u32 0, %s1936
          loop: start=0, step=1, limit=1
          $region671: #{lookup_news_encoder.1} parent=669 // loop_pre_header
            _
          $region672: #{lookup_news_encoder.1} parent=669 // loop_header
            %s1943 = sphi 0, %s1947
            %p1944 = scmp.ge.s32.totalorder %s1943, 1
            %s1948 = sphi %s1938, %s1938
            %s1949 = sphi %s1940, %s1940
          $region673: #{lookup_news_encoder.1} parent=669 // loop_header_branch
            %1946 = sbr.rel (%p1944) target = $region677
          $region674: #{lookup_news_encoder.1} parent=669 // loop_body
            %v1950 = vld [vmem:[%s1948] sm:%s1941]
            %1951 = vst [vmem:[%s1949] sm:%s1941] %v1950
            %v1952 = vld [vmem:[%s1948 + $0x8] sm:%s1941]
            %1953 = vst [vmem:[%s1949 + $0x8] sm:%s1941] %v1952
            %v1954 = vld [vmem:[%s1948 + $0x10] sm:%s1941]
            %1955 = vst [vmem:[%s1949 + $0x10] sm:%s1941] %v1954
            %v1956 = vld [vmem:[%s1948 + $0x18] sm:%s1941]
            %1957 = vst [vmem:[%s1949 + $0x18] sm:%s1941] %v1956
            %v1958 = vld [vmem:[%s1948 + $0x20] sm:%s1941]
            %1959 = vst [vmem:[%s1949 + $0x20] sm:%s1941] %v1958
            %v1960 = vld [vmem:[%s1948 + $0x28] sm:%s1941]
            %1961 = vst [vmem:[%s1949 + $0x28] sm:%s1941] %v1960
          $region675: #{lookup_news_encoder.1} parent=669 // loop_footer
            %s1947 = sadd.s32 1, %s1943
          $region676: #{lookup_news_encoder.1} parent=669 // loop_footer_branch
            %1942 = sbr.rel target = $region672
          $region677: #{lookup_news_encoder.1} parent=669 // loop_exit
            _
        $region670: #{lookup_news_encoder.1} parent=654 // pred_fallthru
          _
      $region655: #{lookup_news_encoder.1} parent=500 // pred_fallthru
        _
      // Predicated region
      $region656: #{lookup_news_encoder.1} parent=500 // pred_check
        %p1907 = pneg %p1903
      $region657: #{lookup_news_encoder.1} parent=500 // pred_check_branch
        %1909 = sbr.rel (%p1907) target = $region659
      $region658: #{lookup_news_encoder.1} parent=500 // pred_region
        %s1910 = sshllo.u32 0, 1
        loop: start=0, step=1, limit=1
        $region660: #{lookup_news_encoder.1} parent=658 // loop_pre_header
          _
        $region661: #{lookup_news_encoder.1} parent=658 // loop_header
          %s1912 = sphi 0, %s1916
          %p1913 = scmp.ge.s32.totalorder %s1912, 1
          %s1917 = sphi %s1900, %s1900
          %s1918 = sphi %s1901, %s1901
        $region662: #{lookup_news_encoder.1} parent=658 // loop_header_branch
          %1915 = sbr.rel (%p1913) target = $region666
        $region663: #{lookup_news_encoder.1} parent=658 // loop_body
          %v1919 = vld [vmem:[%s1917] sm:%s1910]
          %1920 = vst [vmem:[%s1918] sm:%s1910] %v1919
          %v1921 = vld [vmem:[%s1917 + $0x8] sm:%s1910]
          %1922 = vst [vmem:[%s1918 + $0x8] sm:%s1910] %v1921
          %v1923 = vld [vmem:[%s1917 + $0x10] sm:%s1910]
          %1924 = vst [vmem:[%s1918 + $0x10] sm:%s1910] %v1923
          %v1925 = vld [vmem:[%s1917 + $0x18] sm:%s1910]
          %1926 = vst [vmem:[%s1918 + $0x18] sm:%s1910] %v1925
          %v1927 = vld [vmem:[%s1917 + $0x20] sm:%s1910]
          %1928 = vst [vmem:[%s1918 + $0x20] sm:%s1910] %v1927
          %v1929 = vld [vmem:[%s1917 + $0x28] sm:%s1910]
          %1930 = vst [vmem:[%s1918 + $0x28] sm:%s1910] %v1929
        $region664: #{lookup_news_encoder.1} parent=658 // loop_footer
          %s1916 = sadd.s32 1, %s1912
        $region665: #{lookup_news_encoder.1} parent=658 // loop_footer_branch
          %1911 = sbr.rel target = $region661
        $region666: #{lookup_news_encoder.1} parent=658 // loop_exit
          _
      $region659: #{lookup_news_encoder.1} parent=500 // pred_fallthru
        _
      // Predicated region
      $region678: #{lookup_news_encoder.1} parent=500 // pred_check
        _
      $region679: #{lookup_news_encoder.1} parent=500 // pred_check_branch
        %1964 = sbr.rel (0) target = $region681
      $region680: #{lookup_news_encoder.1} parent=500 // pred_region
        %1965 = vsyncadd [#allocation3], 96
      $region681: #{lookup_news_encoder.1} parent=500 // pred_fallthru
        _
      %s1966 = sadd.s32 %s1535, 6
      %s1967 = sld [smem:[#allocation5 + %s1966]]
      %s1968 = sshrl.u32 %s1967, 3
      %s1969 = sand.u32 %s1967, 7
      %s1970 = smul.u32 %s1968, 48
      %s1971 = sadd.s32 %s1969, %s1970
      %s1972 = scalar_lea.vmem %s1, %s1971
      %s1973 = scalar_lea.vmem [#allocation2], 6
      %p1975 = scmp.lt.u32.totalorder 1, 8
      %p1976 = pneg %p1975
      // Predicated region
      $region682: #{lookup_news_encoder.1} parent=500 // pred_check
        _
      $region683: #{lookup_news_encoder.1} parent=500 // pred_check_branch
        %1978 = sbr.rel (%p1975) target = $region685
      $region684: #{lookup_news_encoder.1} parent=500 // pred_region
        %s2003 = sand.u32 1, 7
        %p2004 = scmp.eq.s32.totalorder %s2003, 0
        %p2005 = pneg %p2004
        // Predicated region
        $region697: #{lookup_news_encoder.1} parent=684 // pred_check
          _
        $region698: #{lookup_news_encoder.1} parent=684 // pred_check_branch
          %2007 = sbr.rel (%p2004) target = $region700
        $region699: #{lookup_news_encoder.1} parent=684 // pred_region
          %s2008 = sand.u32 1, 7
          %s2009 = ssub.s32 1, %s2008
          %s2010 = scalar_lea.vmem %s1972, %s2009
          %s2011 = ssub.s32 1, %s2008
          %s2012 = scalar_lea.vmem %s1973, %s2011 [#allocation2]
          %s2013 = sshllo.u32 0, %s2008
          loop: start=0, step=1, limit=1
          $region701: #{lookup_news_encoder.1} parent=699 // loop_pre_header
            _
          $region702: #{lookup_news_encoder.1} parent=699 // loop_header
            %s2015 = sphi 0, %s2019
            %p2016 = scmp.ge.s32.totalorder %s2015, 1
            %s2020 = sphi %s2010, %s2010
            %s2021 = sphi %s2012, %s2012
          $region703: #{lookup_news_encoder.1} parent=699 // loop_header_branch
            %2018 = sbr.rel (%p2016) target = $region707
          $region704: #{lookup_news_encoder.1} parent=699 // loop_body
            %v2022 = vld [vmem:[%s2020] sm:%s2013]
            %2023 = vst [vmem:[%s2021] sm:%s2013] %v2022
            %v2024 = vld [vmem:[%s2020 + $0x8] sm:%s2013]
            %2025 = vst [vmem:[%s2021 + $0x8] sm:%s2013] %v2024
            %v2026 = vld [vmem:[%s2020 + $0x10] sm:%s2013]
            %2027 = vst [vmem:[%s2021 + $0x10] sm:%s2013] %v2026
            %v2028 = vld [vmem:[%s2020 + $0x18] sm:%s2013]
            %2029 = vst [vmem:[%s2021 + $0x18] sm:%s2013] %v2028
            %v2030 = vld [vmem:[%s2020 + $0x20] sm:%s2013]
            %2031 = vst [vmem:[%s2021 + $0x20] sm:%s2013] %v2030
            %v2032 = vld [vmem:[%s2020 + $0x28] sm:%s2013]
            %2033 = vst [vmem:[%s2021 + $0x28] sm:%s2013] %v2032
          $region705: #{lookup_news_encoder.1} parent=699 // loop_footer
            %s2019 = sadd.s32 1, %s2015
          $region706: #{lookup_news_encoder.1} parent=699 // loop_footer_branch
            %2014 = sbr.rel target = $region702
          $region707: #{lookup_news_encoder.1} parent=699 // loop_exit
            _
        $region700: #{lookup_news_encoder.1} parent=684 // pred_fallthru
          _
      $region685: #{lookup_news_encoder.1} parent=500 // pred_fallthru
        _
      // Predicated region
      $region686: #{lookup_news_encoder.1} parent=500 // pred_check
        %p1979 = pneg %p1975
      $region687: #{lookup_news_encoder.1} parent=500 // pred_check_branch
        %1981 = sbr.rel (%p1979) target = $region689
      $region688: #{lookup_news_encoder.1} parent=500 // pred_region
        %s1982 = sshllo.u32 0, 1
        loop: start=0, step=1, limit=1
        $region690: #{lookup_news_encoder.1} parent=688 // loop_pre_header
          _
        $region691: #{lookup_news_encoder.1} parent=688 // loop_header
          %s1984 = sphi 0, %s1988
          %p1985 = scmp.ge.s32.totalorder %s1984, 1
          %s1989 = sphi %s1972, %s1972
          %s1990 = sphi %s1973, %s1973
        $region692: #{lookup_news_encoder.1} parent=688 // loop_header_branch
          %1987 = sbr.rel (%p1985) target = $region696
        $region693: #{lookup_news_encoder.1} parent=688 // loop_body
          %v1991 = vld [vmem:[%s1989] sm:%s1982]
          %1992 = vst [vmem:[%s1990] sm:%s1982] %v1991
          %v1993 = vld [vmem:[%s1989 + $0x8] sm:%s1982]
          %1994 = vst [vmem:[%s1990 + $0x8] sm:%s1982] %v1993
          %v1995 = vld [vmem:[%s1989 + $0x10] sm:%s1982]
          %1996 = vst [vmem:[%s1990 + $0x10] sm:%s1982] %v1995
          %v1997 = vld [vmem:[%s1989 + $0x18] sm:%s1982]
          %1998 = vst [vmem:[%s1990 + $0x18] sm:%s1982] %v1997
          %v1999 = vld [vmem:[%s1989 + $0x20] sm:%s1982]
          %2000 = vst [vmem:[%s1990 + $0x20] sm:%s1982] %v1999
          %v2001 = vld [vmem:[%s1989 + $0x28] sm:%s1982]
          %2002 = vst [vmem:[%s1990 + $0x28] sm:%s1982] %v2001
        $region694: #{lookup_news_encoder.1} parent=688 // loop_footer
          %s1988 = sadd.s32 1, %s1984
        $region695: #{lookup_news_encoder.1} parent=688 // loop_footer_branch
          %1983 = sbr.rel target = $region691
        $region696: #{lookup_news_encoder.1} parent=688 // loop_exit
          _
      $region689: #{lookup_news_encoder.1} parent=500 // pred_fallthru
        _
      // Predicated region
      $region708: #{lookup_news_encoder.1} parent=500 // pred_check
        _
      $region709: #{lookup_news_encoder.1} parent=500 // pred_check_branch
        %2036 = sbr.rel (0) target = $region711
      $region710: #{lookup_news_encoder.1} parent=500 // pred_region
        %2037 = vsyncadd [#allocation3], 96
      $region711: #{lookup_news_encoder.1} parent=500 // pred_fallthru
        _
      %s2038 = sadd.s32 %s1535, 7
      %s2039 = sld [smem:[#allocation5 + %s2038]]
      %s2040 = sshrl.u32 %s2039, 3
      %s2041 = sand.u32 %s2039, 7
      %s2042 = smul.u32 %s2040, 48
      %s2043 = sadd.s32 %s2041, %s2042
      %s2044 = scalar_lea.vmem %s1, %s2043
      %s2045 = scalar_lea.vmem [#allocation2], 7
      %p2047 = scmp.lt.u32.totalorder 1, 8
      %p2048 = pneg %p2047
      // Predicated region
      $region712: #{lookup_news_encoder.1} parent=500 // pred_check
        _
      $region713: #{lookup_news_encoder.1} parent=500 // pred_check_branch
        %2050 = sbr.rel (%p2047) target = $region715
      $region714: #{lookup_news_encoder.1} parent=500 // pred_region
        %s2075 = sand.u32 1, 7
        %p2076 = scmp.eq.s32.totalorder %s2075, 0
        %p2077 = pneg %p2076
        // Predicated region
        $region727: #{lookup_news_encoder.1} parent=714 // pred_check
          _
        $region728: #{lookup_news_encoder.1} parent=714 // pred_check_branch
          %2079 = sbr.rel (%p2076) target = $region730
        $region729: #{lookup_news_encoder.1} parent=714 // pred_region
          %s2080 = sand.u32 1, 7
          %s2081 = ssub.s32 1, %s2080
          %s2082 = scalar_lea.vmem %s2044, %s2081
          %s2083 = ssub.s32 1, %s2080
          %s2084 = scalar_lea.vmem %s2045, %s2083 [#allocation2]
          %s2085 = sshllo.u32 0, %s2080
          loop: start=0, step=1, limit=1
          $region731: #{lookup_news_encoder.1} parent=729 // loop_pre_header
            _
          $region732: #{lookup_news_encoder.1} parent=729 // loop_header
            %s2087 = sphi 0, %s2091
            %p2088 = scmp.ge.s32.totalorder %s2087, 1
            %s2092 = sphi %s2082, %s2082
            %s2093 = sphi %s2084, %s2084
          $region733: #{lookup_news_encoder.1} parent=729 // loop_header_branch
            %2090 = sbr.rel (%p2088) target = $region737
          $region734: #{lookup_news_encoder.1} parent=729 // loop_body
            %v2094 = vld [vmem:[%s2092] sm:%s2085]
            %2095 = vst [vmem:[%s2093] sm:%s2085] %v2094
            %v2096 = vld [vmem:[%s2092 + $0x8] sm:%s2085]
            %2097 = vst [vmem:[%s2093 + $0x8] sm:%s2085] %v2096
            %v2098 = vld [vmem:[%s2092 + $0x10] sm:%s2085]
            %2099 = vst [vmem:[%s2093 + $0x10] sm:%s2085] %v2098
            %v2100 = vld [vmem:[%s2092 + $0x18] sm:%s2085]
            %2101 = vst [vmem:[%s2093 + $0x18] sm:%s2085] %v2100
            %v2102 = vld [vmem:[%s2092 + $0x20] sm:%s2085]
            %2103 = vst [vmem:[%s2093 + $0x20] sm:%s2085] %v2102
            %v2104 = vld [vmem:[%s2092 + $0x28] sm:%s2085]
            %2105 = vst [vmem:[%s2093 + $0x28] sm:%s2085] %v2104
          $region735: #{lookup_news_encoder.1} parent=729 // loop_footer
            %s2091 = sadd.s32 1, %s2087
          $region736: #{lookup_news_encoder.1} parent=729 // loop_footer_branch
            %2086 = sbr.rel target = $region732
          $region737: #{lookup_news_encoder.1} parent=729 // loop_exit
            _
        $region730: #{lookup_news_encoder.1} parent=714 // pred_fallthru
          _
      $region715: #{lookup_news_encoder.1} parent=500 // pred_fallthru
        _
      // Predicated region
      $region716: #{lookup_news_encoder.1} parent=500 // pred_check
        %p2051 = pneg %p2047
      $region717: #{lookup_news_encoder.1} parent=500 // pred_check_branch
        %2053 = sbr.rel (%p2051) target = $region719
      $region718: #{lookup_news_encoder.1} parent=500 // pred_region
        %s2054 = sshllo.u32 0, 1
        loop: start=0, step=1, limit=1
        $region720: #{lookup_news_encoder.1} parent=718 // loop_pre_header
          _
        $region721: #{lookup_news_encoder.1} parent=718 // loop_header
          %s2056 = sphi 0, %s2060
          %p2057 = scmp.ge.s32.totalorder %s2056, 1
          %s2061 = sphi %s2044, %s2044
          %s2062 = sphi %s2045, %s2045
        $region722: #{lookup_news_encoder.1} parent=718 // loop_header_branch
          %2059 = sbr.rel (%p2057) target = $region726
        $region723: #{lookup_news_encoder.1} parent=718 // loop_body
          %v2063 = vld [vmem:[%s2061] sm:%s2054]
          %2064 = vst [vmem:[%s2062] sm:%s2054] %v2063
          %v2065 = vld [vmem:[%s2061 + $0x8] sm:%s2054]
          %2066 = vst [vmem:[%s2062 + $0x8] sm:%s2054] %v2065
          %v2067 = vld [vmem:[%s2061 + $0x10] sm:%s2054]
          %2068 = vst [vmem:[%s2062 + $0x10] sm:%s2054] %v2067
          %v2069 = vld [vmem:[%s2061 + $0x18] sm:%s2054]
          %2070 = vst [vmem:[%s2062 + $0x18] sm:%s2054] %v2069
          %v2071 = vld [vmem:[%s2061 + $0x20] sm:%s2054]
          %2072 = vst [vmem:[%s2062 + $0x20] sm:%s2054] %v2071
          %v2073 = vld [vmem:[%s2061 + $0x28] sm:%s2054]
          %2074 = vst [vmem:[%s2062 + $0x28] sm:%s2054] %v2073
        $region724: #{lookup_news_encoder.1} parent=718 // loop_footer
          %s2060 = sadd.s32 1, %s2056
        $region725: #{lookup_news_encoder.1} parent=718 // loop_footer_branch
          %2055 = sbr.rel target = $region721
        $region726: #{lookup_news_encoder.1} parent=718 // loop_exit
          _
      $region719: #{lookup_news_encoder.1} parent=500 // pred_fallthru
        _
      // Predicated region
      $region738: #{lookup_news_encoder.1} parent=500 // pred_check
        _
      $region739: #{lookup_news_encoder.1} parent=500 // pred_check_branch
        %2108 = sbr.rel (0) target = $region741
      $region740: #{lookup_news_encoder.1} parent=500 // pred_region
        %2109 = vsyncadd [#allocation3], 96
      $region741: #{lookup_news_encoder.1} parent=500 // pred_fallthru
        _
    $region501: #{lookup_news_encoder.1} parent=1 // pred_fallthru
      _
    %s2110 = scalar_lea.vmem [#allocation2], 48
    %s2111 = sshll.u32 %s1206, 4
    %2112 = dma.done %s636, %s2111
    %v2113 = vld [vmem:[%s2110] sm:$0xff]
    %v2114 = vld [vmem:[%s2110 + $0x8] sm:$0xff]
    %v2115 = vld [vmem:[%s2110 + $0x10] sm:$0xff]
    %v2116 = vld [vmem:[%s2110 + $0x18] sm:$0xff]
    %v2117 = vld [vmem:[%s2110 + $0x20] sm:$0xff]
    %v2118 = vld [vmem:[%s2110 + $0x28] sm:$0xff]
    %v2119 = vld [vmem:[#allocation6] sm:$0xff]
    %v2120 = vld [vmem:[#allocation6 + $0x8] sm:$0xff]
    %v2121 = vld [vmem:[#allocation6 + $0x10] sm:$0xff]
    %v2122 = vld [vmem:[#allocation6 + $0x18] sm:$0xff]
    %v2123 = vld [vmem:[#allocation6 + $0x20] sm:$0xff]
    %v2124 = vld [vmem:[#allocation6 + $0x28] sm:$0xff]
    %v2125 = vld [vmem:[#allocation6 + $0x30] sm:$0xff]
    %v2126 = vld [vmem:[#allocation6 + $0x38] sm:$0xff]
    %v2127 = vld [vmem:[#allocation6 + $0x40] sm:$0xff]
    %v2128 = vld [vmem:[#allocation6 + $0x48] sm:$0xff]
    %v2129 = vld [vmem:[#allocation6 + $0x50] sm:$0xff]
    %v2130 = vld [vmem:[#allocation6 + $0x58] sm:$0xff]
    %v2131 = vld [vmem:[#allocation6 + $0x60] sm:$0xff]
    %v2132 = vld [vmem:[#allocation6 + $0x68] sm:$0xff]
    %v2133 = vld [vmem:[#allocation6 + $0x70] sm:$0xff]
    %v2134 = vld [vmem:[#allocation6 + $0x78] sm:$0xff]
    %v2135 = vld [vmem:[#allocation6 + $0x80] sm:$0xff]
    %v2136 = vld [vmem:[#allocation6 + $0x88] sm:$0xff]
    %v2137 = vld [vmem:[#allocation6 + $0x90] sm:$0xff]
    %v2138 = vld [vmem:[#allocation6 + $0x98] sm:$0xff]
    %v2139 = vld [vmem:[#allocation6 + $0xa0] sm:$0xff]
    %v2140 = vld [vmem:[#allocation6 + $0xa8] sm:$0xff]
    %v2141 = vld [vmem:[#allocation6 + $0xb0] sm:$0xff]
    %v2142 = vld [vmem:[#allocation6 + $0xb8] sm:$0xff]
    %v2143 = vld [vmem:[#allocation6 + $0xc0] sm:$0xff]
    %v2144 = vld [vmem:[#allocation6 + $0xc8] sm:$0xff]
    %v2145 = vld [vmem:[#allocation6 + $0xd0] sm:$0xff]
    %v2146 = vld [vmem:[#allocation6 + $0xd8] sm:$0xff]
    %v2147 = vld [vmem:[#allocation6 + $0xe0] sm:$0xff]
    %v2148 = vld [vmem:[#allocation6 + $0xe8] sm:$0xff]
    %v2149 = vld [vmem:[#allocation6 + $0xf0] sm:$0xff]
    %v2150 = vld [vmem:[#allocation6 + $0xf8] sm:$0xff]
    %v2151 = vld [vmem:[#allocation6 + $0x100] sm:$0xff]
    %v2152 = vld [vmem:[#allocation6 + $0x108] sm:$0xff]
    %v2153 = vld [vmem:[#allocation6 + $0x110] sm:$0xff]
    %v2154 = vld [vmem:[#allocation6 + $0x118] sm:$0xff]
    %v2155 = vld [vmem:[#allocation6 + $0x120] sm:$0xff]
    %v2156 = vld [vmem:[#allocation6 + $0x128] sm:$0xff]
    %v2157 = vld [vmem:[#allocation6 + $0x130] sm:$0xff]
    %v2158 = vld [vmem:[#allocation6 + $0x138] sm:$0xff]
    %v2159 = vld [vmem:[#allocation6 + $0x140] sm:$0xff]
    %v2160 = vld [vmem:[#allocation6 + $0x148] sm:$0xff]
    %v2161 = vld [vmem:[#allocation6 + $0x150] sm:$0xff]
    %v2162 = vld [vmem:[#allocation6 + $0x158] sm:$0xff]
    %v2163 = vld [vmem:[#allocation6 + $0x160] sm:$0xff]
    %v2164 = vld [vmem:[#allocation6 + $0x168] sm:$0xff]
    %v2165 = vld [vmem:[#allocation6 + $0x170] sm:$0xff]
    %v2166 = vld [vmem:[#allocation6 + $0x178] sm:$0xff]
    %v2167 = vld [vmem:[#allocation6 + $0x180] sm:$0xff]
    %v2168 = vld [vmem:[#allocation6 + $0x188] sm:$0xff]
    %v2169 = vld [vmem:[#allocation6 + $0x190] sm:$0xff]
    %v2170 = vld [vmem:[#allocation6 + $0x198] sm:$0xff]
    %v2171 = vld [vmem:[#allocation6 + $0x1a0] sm:$0xff]
    %v2172 = vld [vmem:[#allocation6 + $0x1a8] sm:$0xff]
    %v2173 = vld [vmem:[#allocation6 + $0x1b0] sm:$0xff]
    %v2174 = vld [vmem:[#allocation6 + $0x1b8] sm:$0xff]
    %v2175 = vld [vmem:[#allocation6 + $0x1c0] sm:$0xff]
    %v2176 = vld [vmem:[#allocation6 + $0x1c8] sm:$0xff]
    %v2177 = vld [vmem:[#allocation6 + $0x1d0] sm:$0xff]
    %v2178 = vld [vmem:[#allocation6 + $0x1d8] sm:$0xff]
    %v2179 = vld [vmem:[#allocation6 + $0x1e0] sm:$0xff]
    %v2180 = vld [vmem:[#allocation6 + $0x1e8] sm:$0xff]
    %v2181 = vld [vmem:[#allocation6 + $0x1f0] sm:$0xff]
    %v2182 = vld [vmem:[#allocation6 + $0x1f8] sm:$0xff]
    %v2183 = vld [vmem:[#allocation6 + $0x200] sm:$0xff]
    %v2184 = vld [vmem:[#allocation6 + $0x208] sm:$0xff]
    %v2185 = vld [vmem:[#allocation6 + $0x210] sm:$0xff]
    %v2186 = vld [vmem:[#allocation6 + $0x218] sm:$0xff]
    %v2187 = vld [vmem:[#allocation6 + $0x220] sm:$0xff]
    %v2188 = vld [vmem:[#allocation6 + $0x228] sm:$0xff]
    %v2189 = vld [vmem:[#allocation6 + $0x230] sm:$0xff]
    %v2190 = vld [vmem:[#allocation6 + $0x238] sm:$0xff]
    %v2191 = vld [vmem:[#allocation6 + $0x240] sm:$0xff]
    %v2192 = vld [vmem:[#allocation6 + $0x248] sm:$0xff]
    %v2193 = vld [vmem:[#allocation6 + $0x250] sm:$0xff]
    %v2194 = vld [vmem:[#allocation6 + $0x258] sm:$0xff]
    %v2195 = vld [vmem:[#allocation6 + $0x260] sm:$0xff]
    %v2196 = vld [vmem:[#allocation6 + $0x268] sm:$0xff]
    %v2197 = vld [vmem:[#allocation6 + $0x270] sm:$0xff]
    %v2198 = vld [vmem:[#allocation6 + $0x278] sm:$0xff]
    %v2199 = vld [vmem:[#allocation6 + $0x280] sm:$0xff]
    %v2200 = vld [vmem:[#allocation6 + $0x288] sm:$0xff]
    %v2201 = vld [vmem:[#allocation6 + $0x290] sm:$0xff]
    %v2202 = vld [vmem:[#allocation6 + $0x298] sm:$0xff]
    %v2203 = vld [vmem:[#allocation6 + $0x2a0] sm:$0xff]
    %v2204 = vld [vmem:[#allocation6 + $0x2a8] sm:$0xff]
    %v2205 = vld [vmem:[#allocation6 + $0x2b0] sm:$0xff]
    %v2206 = vld [vmem:[#allocation6 + $0x2b8] sm:$0xff]
    %v2207 = vld [vmem:[#allocation6 + $0x2c0] sm:$0xff]
    %v2208 = vld [vmem:[#allocation6 + $0x2c8] sm:$0xff]
    %v2209 = vld [vmem:[#allocation6 + $0x2d0] sm:$0xff]
    %v2210 = vld [vmem:[#allocation6 + $0x2d8] sm:$0xff]
    %v2211 = vld [vmem:[#allocation6 + $0x2e0] sm:$0xff]
    %v2212 = vld [vmem:[#allocation6 + $0x2e8] sm:$0xff]
    %v2213 = vld [vmem:[#allocation6 + $0x2f0] sm:$0xff]
    %v2214 = vld [vmem:[#allocation6 + $0x2f8] sm:$0xff]
    %v2215 = vld [vmem:[%s3] sm:$0x1]
    %v2217 = vlaneseq
    %v2218 = vshrl.u32 %v2217, 7
    %v2219 = vsub.s32 0, %v2218
    %v2220 = vrot.slane %v2215, %v2219
    %2222 = vmatprep.subr.mxu0 0.0
    %2223 = vmatpush1.msra.mxu0 %v2119
    %2224 = vmatprep.subr.mxu0 0.0
    %2225 = vmatpush1.msra.mxu0 %v2120
    %2226 = vmatprep.subr.mxu0 0.0
    %2227 = vmatpush1.msra.mxu0 %v2121
    %2228 = vmatprep.subr.mxu0 0.0
    %2229 = vmatpush1.msra.mxu0 %v2122
    %2230 = vmatprep.subr.mxu0 0.0
    %2231 = vmatpush1.msra.mxu0 %v2123
    %2232 = vmatprep.subr.mxu0 0.0
    %2233 = vmatpush1.msra.mxu0 %v2124
    %2234 = vmatprep.subr.mxu0 0.0
    %2235 = vmatpush1.msra.mxu0 %v2125
    %2236 = vmatprep.subr.mxu0 0.0
    %2237 = vmatpush1.msra.mxu0 %v2126
    %2238 = vmatprep.subr.mxu0 0.0
    %2239 = vmatpush1.msra.mxu0 %v2127
    %2240 = vmatprep.subr.mxu0 0.0
    %2241 = vmatpush1.msra.mxu0 %v2128
    %2242 = vmatprep.subr.mxu0 0.0
    %2243 = vmatpush1.msra.mxu0 %v2129
    %2244 = vmatprep.subr.mxu0 0.0
    %2245 = vmatpush1.msra.mxu0 %v2130
    %2246 = vmatprep.subr.mxu0 0.0
    %2247 = vmatpush1.msra.mxu0 %v2131
    %2248 = vmatprep.subr.mxu0 0.0
    %2249 = vmatpush1.msra.mxu0 %v2132
    %2250 = vmatprep.subr.mxu0 0.0
    %2251 = vmatpush1.msra.mxu0 %v2133
    %2252 = vmatprep.subr.mxu0 0.0
    %2253 = vmatpush1.msra.mxu0 %v2134
    %2254 = vmatprep.subr.mxu0 0.0
    %2255 = vmatpush1.msra.mxu0 %v2135
    %2256 = vmatprep.subr.mxu0 0.0
    %2257 = vmatpush1.msra.mxu0 %v2136
    %2258 = vmatprep.subr.mxu0 0.0
    %2259 = vmatpush1.msra.mxu0 %v2137
    %2260 = vmatprep.subr.mxu0 0.0
    %2261 = vmatpush1.msra.mxu0 %v2138
    %2262 = vmatprep.subr.mxu0 0.0
    %2263 = vmatpush1.msra.mxu0 %v2139
    %2264 = vmatprep.subr.mxu0 0.0
    %2265 = vmatpush1.msra.mxu0 %v2140
    %2266 = vmatprep.subr.mxu0 0.0
    %2267 = vmatpush1.msra.mxu0 %v2141
    %2268 = vmatprep.subr.mxu0 0.0
    %2269 = vmatpush1.msra.mxu0 %v2142
    %2270 = vmatprep.subr.mxu0 0.0
    %2271 = vmatpush1.msra.mxu0 %v2143
    %2272 = vmatprep.subr.mxu0 0.0
    %2273 = vmatpush1.msra.mxu0 %v2144
    %2274 = vmatprep.subr.mxu0 0.0
    %2275 = vmatpush1.msra.mxu0 %v2145
    %2276 = vmatprep.subr.mxu0 0.0
    %2277 = vmatpush1.msra.mxu0 %v2146
    %2278 = vmatprep.subr.mxu0 0.0
    %2279 = vmatpush1.msra.mxu0 %v2147
    %2280 = vmatprep.subr.mxu0 0.0
    %2281 = vmatpush1.msra.mxu0 %v2148
    %2282 = vmatprep.subr.mxu0 0.0
    %2283 = vmatpush1.msra.mxu0 %v2149
    %2284 = vmatprep.subr.mxu0 0.0
    %2285 = vmatpush1.msra.mxu0 %v2150
    %2286 = vmatprep.mubr.f32.mxu0 %v2114
    %2287 = vmatmul.mubr.f32.gmra.mrb[0].mxu0 %v2113
    %v2288 = vpop.f32.mrb[0].mxu0
    %v2289 = vadd.f32 %v2220, %v2288
    %v2290 = vpop.f32.mrb[0].mxu0
    %2291 = vdwg.mxu0
    %2292 = vmatprep.subr.mxu0 0.0
    %2293 = vmatpush1.msra.mxu0 %v2151
    %2294 = vmatprep.subr.mxu0 0.0
    %2295 = vmatpush1.msra.mxu0 %v2152
    %2296 = vmatprep.subr.mxu0 0.0
    %2297 = vmatpush1.msra.mxu0 %v2153
    %2298 = vmatprep.subr.mxu0 0.0
    %2299 = vmatpush1.msra.mxu0 %v2154
    %2300 = vmatprep.subr.mxu0 0.0
    %2301 = vmatpush1.msra.mxu0 %v2155
    %2302 = vmatprep.subr.mxu0 0.0
    %2303 = vmatpush1.msra.mxu0 %v2156
    %2304 = vmatprep.subr.mxu0 0.0
    %2305 = vmatpush1.msra.mxu0 %v2157
    %2306 = vmatprep.subr.mxu0 0.0
    %2307 = vmatpush1.msra.mxu0 %v2158
    %2308 = vmatprep.subr.mxu0 0.0
    %2309 = vmatpush1.msra.mxu0 %v2159
    %2310 = vmatprep.subr.mxu0 0.0
    %2311 = vmatpush1.msra.mxu0 %v2160
    %2312 = vmatprep.subr.mxu0 0.0
    %2313 = vmatpush1.msra.mxu0 %v2161
    %2314 = vmatprep.subr.mxu0 0.0
    %2315 = vmatpush1.msra.mxu0 %v2162
    %2316 = vmatprep.subr.mxu0 0.0
    %2317 = vmatpush1.msra.mxu0 %v2163
    %2318 = vmatprep.subr.mxu0 0.0
    %2319 = vmatpush1.msra.mxu0 %v2164
    %2320 = vmatprep.subr.mxu0 0.0
    %2321 = vmatpush1.msra.mxu0 %v2165
    %2322 = vmatprep.subr.mxu0 0.0
    %2323 = vmatpush1.msra.mxu0 %v2166
    %2324 = vmatprep.subr.mxu0 0.0
    %2325 = vmatpush1.msra.mxu0 %v2167
    %2326 = vmatprep.subr.mxu0 0.0
    %2327 = vmatpush1.msra.mxu0 %v2168
    %2328 = vmatprep.subr.mxu0 0.0
    %2329 = vmatpush1.msra.mxu0 %v2169
    %2330 = vmatprep.subr.mxu0 0.0
    %2331 = vmatpush1.msra.mxu0 %v2170
    %2332 = vmatprep.subr.mxu0 0.0
    %2333 = vmatpush1.msra.mxu0 %v2171
    %2334 = vmatprep.subr.mxu0 0.0
    %2335 = vmatpush1.msra.mxu0 %v2172
    %2336 = vmatprep.subr.mxu0 0.0
    %2337 = vmatpush1.msra.mxu0 %v2173
    %2338 = vmatprep.subr.mxu0 0.0
    %2339 = vmatpush1.msra.mxu0 %v2174
    %2340 = vmatprep.subr.mxu0 0.0
    %2341 = vmatpush1.msra.mxu0 %v2175
    %2342 = vmatprep.subr.mxu0 0.0
    %2343 = vmatpush1.msra.mxu0 %v2176
    %2344 = vmatprep.subr.mxu0 0.0
    %2345 = vmatpush1.msra.mxu0 %v2177
    %2346 = vmatprep.subr.mxu0 0.0
    %2347 = vmatpush1.msra.mxu0 %v2178
    %2348 = vmatprep.subr.mxu0 0.0
    %2349 = vmatpush1.msra.mxu0 %v2179
    %2350 = vmatprep.subr.mxu0 0.0
    %2351 = vmatpush1.msra.mxu0 %v2180
    %2352 = vmatprep.subr.mxu0 0.0
    %2353 = vmatpush1.msra.mxu0 %v2181
    %2354 = vmatprep.subr.mxu0 0.0
    %2355 = vmatpush1.msra.mxu0 %v2182
    %2356 = vmatprep.mubr.f32.mxu0 %v2116
    %2357 = vmatmul.mubr.f32.gmra.mrb[0].mxu0 %v2115
    %v2358 = vpop.f32.mrb[0].mxu0
    %v2359 = vadd.f32 %v2289, %v2358
    %v2360 = vpop.f32.mrb[0].mxu0
    %2361 = vdwg.mxu0
    %2362 = vmatprep.subr.mxu0 0.0
    %2363 = vmatpush1.msra.mxu0 %v2183
    %2364 = vmatprep.subr.mxu0 0.0
    %2365 = vmatpush1.msra.mxu0 %v2184
    %2366 = vmatprep.subr.mxu0 0.0
    %2367 = vmatpush1.msra.mxu0 %v2185
    %2368 = vmatprep.subr.mxu0 0.0
    %2369 = vmatpush1.msra.mxu0 %v2186
    %2370 = vmatprep.subr.mxu0 0.0
    %2371 = vmatpush1.msra.mxu0 %v2187
    %2372 = vmatprep.subr.mxu0 0.0
    %2373 = vmatpush1.msra.mxu0 %v2188
    %2374 = vmatprep.subr.mxu0 0.0
    %2375 = vmatpush1.msra.mxu0 %v2189
    %2376 = vmatprep.subr.mxu0 0.0
    %2377 = vmatpush1.msra.mxu0 %v2190
    %2378 = vmatprep.subr.mxu0 0.0
    %2379 = vmatpush1.msra.mxu0 %v2191
    %2380 = vmatprep.subr.mxu0 0.0
    %2381 = vmatpush1.msra.mxu0 %v2192
    %2382 = vmatprep.subr.mxu0 0.0
    %2383 = vmatpush1.msra.mxu0 %v2193
    %2384 = vmatprep.subr.mxu0 0.0
    %2385 = vmatpush1.msra.mxu0 %v2194
    %2386 = vmatprep.subr.mxu0 0.0
    %2387 = vmatpush1.msra.mxu0 %v2195
    %2388 = vmatprep.subr.mxu0 0.0
    %2389 = vmatpush1.msra.mxu0 %v2196
    %2390 = vmatprep.subr.mxu0 0.0
    %2391 = vmatpush1.msra.mxu0 %v2197
    %2392 = vmatprep.subr.mxu0 0.0
    %2393 = vmatpush1.msra.mxu0 %v2198
    %2394 = vmatprep.subr.mxu0 0.0
    %2395 = vmatpush1.msra.mxu0 %v2199
    %2396 = vmatprep.subr.mxu0 0.0
    %2397 = vmatpush1.msra.mxu0 %v2200
    %2398 = vmatprep.subr.mxu0 0.0
    %2399 = vmatpush1.msra.mxu0 %v2201
    %2400 = vmatprep.subr.mxu0 0.0
    %2401 = vmatpush1.msra.mxu0 %v2202
    %2402 = vmatprep.subr.mxu0 0.0
    %2403 = vmatpush1.msra.mxu0 %v2203
    %2404 = vmatprep.subr.mxu0 0.0
    %2405 = vmatpush1.msra.mxu0 %v2204
    %2406 = vmatprep.subr.mxu0 0.0
    %2407 = vmatpush1.msra.mxu0 %v2205
    %2408 = vmatprep.subr.mxu0 0.0
    %2409 = vmatpush1.msra.mxu0 %v2206
    %2410 = vmatprep.subr.mxu0 0.0
    %2411 = vmatpush1.msra.mxu0 %v2207
    %2412 = vmatprep.subr.mxu0 0.0
    %2413 = vmatpush1.msra.mxu0 %v2208
    %2414 = vmatprep.subr.mxu0 0.0
    %2415 = vmatpush1.msra.mxu0 %v2209
    %2416 = vmatprep.subr.mxu0 0.0
    %2417 = vmatpush1.msra.mxu0 %v2210
    %2418 = vmatprep.subr.mxu0 0.0
    %2419 = vmatpush1.msra.mxu0 %v2211
    %2420 = vmatprep.subr.mxu0 0.0
    %2421 = vmatpush1.msra.mxu0 %v2212
    %2422 = vmatprep.subr.mxu0 0.0
    %2423 = vmatpush1.msra.mxu0 %v2213
    %2424 = vmatprep.subr.mxu0 0.0
    %2425 = vmatpush1.msra.mxu0 %v2214
    %2426 = vmatprep.mubr.f32.mxu0 %v2118
    %2427 = vmatmul.mubr.f32.gmra.mrb[0].mxu0 %v2117
    %v2428 = vpop.f32.mrb[0].mxu0
    %v2429 = vadd.f32 %v2359, %v2428
    %v2430 = vpop.f32.mrb[0].mxu0
    %2431 = vdwg.mxu0
    %2432 = vst [vmem:[%s44 + $0x8] sm:$0xff] %v2429
    %s2433 = sadd.s32 0, 0
    %s2434 = smul.u32 2, %s2433
    %p2435 = scmp.lt.s32.totalorder %s2434, 1
    %s2436 = scalar_select %p2435, %s2434, 1
    %s2437 = smul.addr %s2436, 8
    %s2438 = scalar_lea.vmem %s4, %s2437
    // Predicated region
    $region742: #{lookup_news_encoder.1} parent=1 // pred_check
      _
    $region743: #{lookup_news_encoder.1} parent=1 // pred_check_branch
      %2440 = sbr.rel (0) target = $region745
    $region744: #{lookup_news_encoder.1} parent=1 // pred_region
      %s2441 = sadd.s32 0, 0
      %s2442 = smul.u32 2, %s2441
    $region745: #{lookup_news_encoder.1} parent=1 // pred_fallthru
      _
    // Predicated region
    $region746: #{lookup_news_encoder.1} parent=1 // pred_check
      _
    $region747: #{lookup_news_encoder.1} parent=1 // pred_check_branch
      %2444 = sbr.rel (0) target = $region749
    $region748: #{lookup_news_encoder.1} parent=1 // pred_region
      %s2445 = sadd.s32 0, 0
      %s2446 = smul.u32 2, %s2445
      %p2447 = scmp.lt.s32.totalorder %s2446, 1
      %s2448 = scalar_select %p2447, %s2446, 1
      %s2449 = smul.addr %s2448, 8
      %s2450 = scalar_lea.vmem %s4, %s2449
    $region749: #{lookup_news_encoder.1} parent=1 // pred_fallthru
      _
    %2451 = vsyncpa [#allocation7], 1
  %2452 = vsyncmov [#allocation3]
  %s2453 = vpop.sfrf %2452
  %p2454 = scmp.eq.s32.totalorder %s2453, 0
  %p2455 = pneg %p2454
  %2457 = shalt.err (%p2455)
  %s2458 = scalar_lea.sflag [#allocation3], 1
  %2459 = vsyncmov %s2458
  %s2460 = vpop.sfrf %2459
  %p2461 = scmp.eq.s32.totalorder %s2460, 0
  %p2462 = pneg %p2461
  %2464 = shalt.err (%p2462)

</llo_original>
